<compile_context>
chip_gen: v7x
topology: tpu7x:2x2x1
jax: 0.10.0
libtpu: 0.0.40
codegen_flags: <defaults>
</compile_context>

<pallas_src>
import functools

import jax
import jax.numpy as jnp
import numpy as np
from jax import lax
from jax.experimental import pallas as pl
from jax.experimental.pallas import tpu as pltpu

GROUPS = 32
EPS = 1e-5


def _temporal_block_kernel(x_ref, A_ref, gamma_ref, beta_ref, w3_ref, b_ref,
                           out_ref, *, T, S):
    """One batch element.  x_ref: (1, T*S, C) bf16, rows = t*H*W + h*W + w."""
    TS = T * S
    Tp = T + 2

    x_bf = x_ref[0]                                  # (TS, C) bf16
    A = A_ref[...]                                   # (C, C) group-average (f32)

    # GroupNorm stats of the replicate-padded tensor == weighted sums over the
    # unpadded rows with the first / last frame counted twice.  The weighted
    # reduction is a (1, TS) @ (TS, C) dot so it rides the MXU, not the VPU.
    row = lax.broadcasted_iota(jnp.int32, (1, TS), 1)
    wrow = ((1.0 + (row < S).astype(jnp.float32)
             + (row >= TS - S).astype(jnp.float32))
            * (1.0 / float(Tp * S)))                 # (1, TS) f32, already /N

    # Stage-1 stats from the (bf16-rounded) input, in f32.
    cur_f32 = x_bf.astype(jnp.float32)
    s1 = jnp.dot(wrow, cur_f32, preferred_element_type=jnp.float32)        # (1, C)
    s2 = jnp.dot(wrow, cur_f32 * cur_f32, preferred_element_type=jnp.float32)
    cur_bf = x_bf                                    # carried activation (bf16)
    conv = None

    for stage in range(4):
        # ---- GroupNorm(32, C) over the (virtually) padded tensor ------------
        mean = jnp.dot(s1, A, preferred_element_type=jnp.float32)          # (1, C)
        mean_sq = jnp.dot(s2, A, preferred_element_type=jnp.float32)       # (1, C)
        var = jnp.maximum(mean_sq - mean * mean, 0.0)   # guard one-pass cancel
        inv = lax.rsqrt(var + EPS)
        scale = inv * gamma_ref[stage]               # (1, C)
        shift = beta_ref[stage] - mean * scale       # (1, C)

        # ---- SiLU (Dropout p=0.1 is identity at inference) ------------------
        hn = cur_bf.astype(jnp.float32) * scale + shift
        act = hn * (0.5 * (jnp.tanh(0.5 * hn) + 1.0))   # sigmoid via EUP tanh
        act_bf = act.astype(jnp.bfloat16)            # single bf16 cast per stage

        # ---- Conv3d kernel (3,1,1), replicate temporal padding --------------
        # out[t] = act[max(t-1,0)]@W0 + act[t]@W1 + act[min(t+1,T-1)]@W2 + b
        # Fused as one K=3C contraction: lane-concat of bf16 shifted slices
        # against the (3C, C) stacked weight.  Bias added once.
        if T == 1:
            prev_bf, nxt_bf = act_bf, act_bf
        else:
            prev_bf = jnp.concatenate([act_bf[:S], act_bf[:TS - S]], axis=0)
            nxt_bf = jnp.concatenate([act_bf[S:], act_bf[TS - S:]], axis=0)
        taps = jnp.concatenate([prev_bf, act_bf, nxt_bf], axis=-1)   # (TS, 3C)
        conv = (jnp.dot(taps, w3_ref[stage], preferred_element_type=jnp.float32)
                + b_ref[stage])                      # (TS, C) f32

        if stage < 3:
            # Next-stage stats from the f32 conv output, then carry bf16.
            s1 = jnp.dot(wrow, conv, preferred_element_type=jnp.float32)
            s2 = jnp.dot(wrow, conv * conv, preferred_element_type=jnp.float32)
            cur_bf = conv.astype(jnp.bfloat16)

    # Residual add in f32; output written in x.dtype (no bf16 output rounding).
    out_ref[0] = (x_bf.astype(jnp.float32) + conv).astype(out_ref.dtype)


def _const_block_spec(shape, index_map):
    """BlockSpec for grid-invariant operands: single-buffered when supported."""
    try:
        return pl.BlockSpec(shape, index_map, pipeline_mode=pl.Buffered(1))
    except Exception:  # older JAX without pipeline_mode / Buffered
        return pl.BlockSpec(shape, index_map)


def prepare_params(gammas, betas, ws, bs):
    """Hoist parameter layout work to load time (shape-independent).

    ws[i]: (C_out, C_in, 3) -> (3*C_in, C_out) bf16, taps stacked prev|cur|next.
    """
    C = int(gammas[0].shape[0])
    assert C % GROUPS == 0
    Cg = C // GROUPS
    gidx = np.arange(C) // Cg
    # (C, C) group-averaging matrix (1/Cg only; 1/(Tp*S) folded into wrow).
    A = jnp.asarray((gidx[:, None] == gidx[None, :]).astype(np.float32) / float(Cg))
    gamma_s = jnp.stack(gammas).reshape(4, 1, C).astype(jnp.float32)
    beta_s = jnp.stack(betas).reshape(4, 1, C).astype(jnp.float32)
    w3_s = jnp.stack([jnp.transpose(w, (2, 1, 0)).reshape(3 * C, C) for w in ws]
                     ).astype(jnp.bfloat16)          # (4, 3C, C)
    b_s = jnp.stack(bs).reshape(4, 1, C).astype(jnp.float32)
    return A, gamma_s, beta_s, w3_s, b_s


def temporal_conv_block_channels_last(x_cl, params):
    """x_cl: (B, T, H, W, C) channels-last.  Returns same shape, dtype x_cl.dtype."""
    B, T, H, W, C = x_cl.shape
    S = H * W
    TS = T * S
    A, gamma_s, beta_s, w3_s, b_s = params

    # bf16 activations at the kernel boundary (halves input HBM DMA / VMEM
    # block; accepted residual rounding — output itself stays in x.dtype).
    x_k = x_cl.reshape(B, TS, C).astype(jnp.bfloat16)
    out_itemsize = int(np.dtype(x_cl.dtype).itemsize)

    # VMEM budget: double-buffered I/O blocks, single-buffered constants,
    # in-kernel temporaries counted once (not double-buffered).
    in_bytes = 2 * TS * C * 2
    out_bytes = 2 * TS * C * out_itemsize
    const_bytes = C * C * 4 + 4 * 3 * C * C * 2 + 3 * 4 * C * 4
    temp_bytes = 10 * TS * C * 4            # f32 hn/act/conv + bf16 act/taps etc.
    need = int(1.2 * (in_bytes + out_bytes + const_bytes + temp_bytes))
    try:
        cap = int(pltpu.get_tpu_info().vmem_capacity_bytes)
    except Exception:
        cap = 64 * 1024 * 1024
    vmem_limit = int(min(int(0.85 * cap), max(32 * 1024 * 1024, need)))
    # TODO(synk): shapes whose (TS, C) activation slab does not fit in VMEM
    # (realistic video latents on v7x's 64 MiB) need the streamed two-pass
    # variant: pass 1 accumulates the weighted s1/s2 group sums per batch over
    # TS tiles, pass 2 normalizes + convs over TS tiles with a one-frame (S-row)
    # halo, with the TS-tile axis marked "parallel" for megacore.  Only the
    # fully-fused single-slab path is implemented here.

    kernel = functools.partial(_temporal_block_kernel, T=T, S=S)
    out_k = pl.pallas_call(
        kernel,
        out_shape=jax.ShapeDtypeStruct((B, TS, C), x_cl.dtype),
        grid_spec=pltpu.PrefetchScalarGridSpec(
            num_scalar_prefetch=0,
            grid=(B,),
            in_specs=[
                pl.BlockSpec((1, TS, C), lambda b: (b, 0, 0)),
                _const_block_spec((C, C), lambda b: (0, 0)),
                _const_block_spec((4, 1, C), lambda b: (0, 0, 0)),
                _const_block_spec((4, 1, C), lambda b: (0, 0, 0)),
                _const_block_spec((4, 3 * C, C), lambda b: (0, 0, 0)),
                _const_block_spec((4, 1, C), lambda b: (0, 0, 0)),
            ],
            out_specs=pl.BlockSpec((1, TS, C), lambda b: (b, 0, 0)),
        ),
        compiler_params=pltpu.CompilerParams(
            dimension_semantics=("parallel",),
            vmem_limit_bytes=vmem_limit),
    )(x_k, A, gamma_s, beta_s, w3_s, b_s)

    return out_k.reshape(B, T, H, W, C)


def temporal_conv_block(x, gammas, betas, ws, bs):
    """x: (B, C, T, H, W) NCDHW (as in PyTorch).  Returns same shape/dtype.

    # TODO(synk): in a full model keep activations channels-last across layers
    # (and call prepare_params once at load time) so the two bracketing HBM
    # round-trip transposes below disappear.
    """
    params = prepare_params(gammas, betas, ws, bs)
    x_cl = jnp.transpose(x, (0, 2, 3, 4, 1))            # (B, T, H, W, C)
    out_cl = temporal_conv_block_channels_last(x_cl, params)
    return jnp.transpose(out_cl, (0, 4, 1, 2, 3)).astype(x.dtype)


# ----------------------------- pure-JAX reference ---------------------------
def ref_temporal_conv_block(x, gammas, betas, ws, bs):
    def gn(h, gamma, beta):
        B, C, T, H, W = h.shape
        Cg = C // GROUPS
        hg = h.reshape(B, GROUPS, Cg, T, H, W)
        mean = hg.mean(axis=(2, 3, 4, 5), keepdims=True)
        var = ((hg - mean) ** 2).mean(axis=(2, 3, 4, 5), keepdims=True)
        hn = ((hg - mean) / jnp.sqrt(var + EPS)).reshape(B, C, T, H, W)
        return hn * gamma[None, :, None, None, None] + beta[None, :, None, None, None]

    def tconv(h, w, b):
        T = h.shape[2] - 2
        out = jnp.zeros((h.shape[0], w.shape[0], T) + h.shape[3:], jnp.float32)
        out = out + b[None, :, None, None, None]
        for k in range(3):
            out = out + jnp.einsum('oc,bcthw->bothw', w[:, :, k], h[:, :, k:k + T])
        return out

    identity = x
    h = x
    for i in range(4):
        h = jnp.concatenate([h[:, :, 0:1], h, h[:, :, -1:]], axis=2)
        h = gn(h, gammas[i], betas[i])
        h = h * jax.nn.sigmoid(h)
        h = tconv(h, ws[i], bs[i])
    return identity + h


# TODO(synk): up_sample / down_sample constructor variants are not implemented;
# this covers the default (no resample, spa_stride=1) forward path used by
# UNetMidBlock3DConv.

if __name__ == "__main__":
    key = jax.random.PRNGKey(0)
    # C must be divisible by 32 (GroupNorm); a multiple of 128 keeps the lane
    # dimension dense for stores and MXU contractions.
    B, C, T, H, W = 2, 128, 4, 8, 8
    keys = jax.random.split(key, 20)
    x = jax.random.normal(keys[0], (B, C, T, H, W), jnp.float32)

    gammas, betas, ws, bs = [], [], [], []
    for i in range(4):
        gammas.append(1.0 + 0.1 * jax.random.normal(keys[1 + i], (C,), jnp.float32))
        betas.append(0.1 * jax.random.normal(keys[5 + i], (C,), jnp.float32))
        if i == 3:
            # conv4 weight & bias are zero-initialized in the module
            ws.append(jnp.zeros((C, C, 3), jnp.float32))
            bs.append(jnp.zeros((C,), jnp.float32))
        else:
            ws.append(0.05 * jax.random.normal(keys[9 + i], (C, C, 3), jnp.float32))
            bs.append(0.05 * jax.random.normal(keys[13 + i], (C,), jnp.float32))

    # The kernel uses bf16 activations / bf16 MXU operands (f32 accumulation)
    # and carries inter-stage activations in bf16, so validate against the f32
    # reference evaluated on bf16-rounded x / weights with a bf16-sized budget.
    def _q(a):
        return a.astype(jnp.bfloat16).astype(jnp.float32)

    out = jax.block_until_ready(temporal_conv_block(x, gammas, betas, ws, bs))
    ref = ref_temporal_conv_block(_q(x), gammas, betas, [_q(w) for w in ws], bs)
    np.testing.assert_allclose(np.asarray(out), np.asarray(ref), atol=4e-2, rtol=4e-2)

    # extra validation with a non-zero conv4 so the whole pipeline is exercised
    ws2, bs2 = list(ws), list(bs)
    ws2[3] = 0.05 * jax.random.normal(keys[17], (C, C, 3), jnp.float32)
    bs2[3] = 0.05 * jax.random.normal(keys[18], (C,), jnp.float32)
    out2 = jax.block_until_ready(temporal_conv_block(x, gammas, betas, ws2, bs2))
    ref2 = ref_temporal_conv_block(_q(x), gammas, betas, [_q(w) for w in ws2], bs2)
    np.testing.assert_allclose(np.asarray(out2), np.asarray(ref2), atol=4e-2, rtol=4e-2)

    print("KERNEL_OK")
</pallas_src>

<mosaic_0001>
module attributes {stable_mosaic.version = 11 : i64} {
  func.func @_temporal_block_kernel(%arg0: i32, %arg1: memref<1x256x128xbf16, #tpu.memory_space<vmem>>, %arg2: memref<128x128xf32, #tpu.memory_space<vmem>>, %arg3: memref<4x1x128xf32, #tpu.memory_space<vmem>>, %arg4: memref<4x1x128xf32, #tpu.memory_space<vmem>>, %arg5: memref<4x384x128xbf16, #tpu.memory_space<vmem>>, %arg6: memref<4x1x128xf32, #tpu.memory_space<vmem>>, %arg7: memref<1x256x128xf32, #tpu.memory_space<vmem>>) attributes {dimension_semantics = [#tpu.dimension_semantics<parallel>], iteration_bounds = array<i64: 2>, scalar_prefetch = 0 : i64, scratch_operands = 0 : i64, tpu.core_type = #tpu.core_type<tc>, window_params = [{transform_indices = @transform_0, window_bounds = array<i64: 1, 256, 128>}, {pipeline_mode = #tpu.pipeline_mode<synchronous>, transform_indices = @transform_1, window_bounds = array<i64: 128, 128>}, {pipeline_mode = #tpu.pipeline_mode<synchronous>, transform_indices = @transform_2, window_bounds = array<i64: 4, 1, 128>}, {pipeline_mode = #tpu.pipeline_mode<synchronous>, transform_indices = @transform_3, window_bounds = array<i64: 4, 1, 128>}, {pipeline_mode = #tpu.pipeline_mode<synchronous>, transform_indices = @transform_4, window_bounds = array<i64: 4, 384, 128>}, {pipeline_mode = #tpu.pipeline_mode<synchronous>, transform_indices = @transform_5, window_bounds = array<i64: 4, 1, 128>}, {transform_indices = @transform_6, window_bounds = array<i64: 1, 256, 128>}]} {
    %c0 = arith.constant 0 : index
    %c0_0 = arith.constant 0 : index
    %c0_1 = arith.constant 0 : index
    %0 = vector.load %arg1[%c0, %c0_0, %c0_1] : memref<1x256x128xbf16, #tpu.memory_space<vmem>>, vector<1x256x128xbf16>
    %1 = vector.shape_cast %0 : vector<1x256x128xbf16> to vector<256x128xbf16>
    %c0_2 = arith.constant 0 : index
    %c0_3 = arith.constant 0 : index
    %2 = vector.load %arg2[%c0_2, %c0_3] : memref<128x128xf32, #tpu.memory_space<vmem>>, vector<128x128xf32>
    %3 = tpu.iota {dimensions = array<i32: 1>} : vector<1x256xi32>
    %c64_i32 = arith.constant 64 : i32
    %4 = vector.broadcast %c64_i32 : i32 to vector<1x256xi32>
    %5 = arith.cmpi slt, %3, %4 : vector<1x256xi32>
    %6 = arith.extui %5 : vector<1x256xi1> to vector<1x256xi32>
    %7 = arith.sitofp %6 : vector<1x256xi32> to vector<1x256xf32>
    %cst = arith.constant 1.000000e+00 : f32
    %8 = vector.broadcast %cst : f32 to vector<1x256xf32>
    %9 = arith.addf %8, %7 : vector<1x256xf32>
    %c192_i32 = arith.constant 192 : i32
    %10 = vector.broadcast %c192_i32 : i32 to vector<1x256xi32>
    %11 = arith.cmpi sge, %3, %10 : vector<1x256xi32>
    %12 = arith.extui %11 : vector<1x256xi1> to vector<1x256xi32>
    %13 = arith.sitofp %12 : vector<1x256xi32> to vector<1x256xf32>
    %14 = arith.addf %9, %13 : vector<1x256xf32>
    %cst_4 = arith.constant 0.00260416674 : f32
    %15 = vector.broadcast %cst_4 : f32 to vector<1x256xf32>
    %16 = arith.mulf %14, %15 : vector<1x256xf32>
    %17 = arith.extf %1 : vector<256x128xbf16> to vector<256x128xf32>
    %cst_5 = arith.constant dense<0.000000e+00> : vector<1x128xf32>
    %18 = tpu.matmul %16, %17, %cst_5 {dimension_numbers = #tpu.dot_dimension_numbers<[1], [0], [0], [1], [0, 0, 1, 1], [], []>} : vector<1x256xf32>, vector<256x128xf32>, vector<1x128xf32> -> vector<1x128xf32>
    %19 = arith.mulf %17, %17 : vector<256x128xf32>
    %cst_6 = arith.constant dense<0.000000e+00> : vector<1x128xf32>
    %20 = tpu.matmul %16, %19, %cst_6 {dimension_numbers = #tpu.dot_dimension_numbers<[1], [0], [0], [1], [0, 0, 1, 1], [], []>} : vector<1x256xf32>, vector<256x128xf32>, vector<1x128xf32> -> vector<1x128xf32>
    %cst_7 = arith.constant dense<0.000000e+00> : vector<1x128xf32>
    %21 = tpu.matmul %18, %2, %cst_7 {dimension_numbers = #tpu.dot_dimension_numbers<[1], [0], [0], [1], [0, 0, 1, 1], [], []>} : vector<1x128xf32>, vector<128x128xf32>, vector<1x128xf32> -> vector<1x128xf32>
    %cst_8 = arith.constant dense<0.000000e+00> : vector<1x128xf32>
    %22 = tpu.matmul %20, %2, %cst_8 {dimension_numbers = #tpu.dot_dimension_numbers<[1], [0], [0], [1], [0, 0, 1, 1], [], []>} : vector<1x128xf32>, vector<128x128xf32>, vector<1x128xf32> -> vector<1x128xf32>
    %23 = arith.mulf %21, %21 : vector<1x128xf32>
    %24 = arith.subf %22, %23 : vector<1x128xf32>
    %cst_9 = arith.constant 0.000000e+00 : f32
    %25 = vector.broadcast %cst_9 : f32 to vector<1x128xf32>
    %26 = arith.maximumf %24, %25 : vector<1x128xf32>
    %cst_10 = arith.constant 9.99999974E-6 : f32
    %27 = vector.broadcast %cst_10 : f32 to vector<1x128xf32>
    %28 = arith.addf %26, %27 : vector<1x128xf32>
    %29 = math.rsqrt %28 : vector<1x128xf32>
    %c0_11 = arith.constant 0 : index
    %c0_12 = arith.constant 0 : index
    %c0_13 = arith.constant 0 : index
    %30 = vector.load %arg3[%c0_11, %c0_12, %c0_13] : memref<4x1x128xf32, #tpu.memory_space<vmem>>, vector<1x1x128xf32>
    %31 = vector.shape_cast %30 : vector<1x1x128xf32> to vector<1x128xf32>
    %32 = arith.mulf %29, %31 : vector<1x128xf32>
    %c0_14 = arith.constant 0 : index
    %c0_15 = arith.constant 0 : index
    %c0_16 = arith.constant 0 : index
    %33 = vector.load %arg4[%c0_14, %c0_15, %c0_16] : memref<4x1x128xf32, #tpu.memory_space<vmem>>, vector<1x1x128xf32>
    %34 = vector.shape_cast %33 : vector<1x1x128xf32> to vector<1x128xf32>
    %35 = arith.mulf %21, %32 : vector<1x128xf32>
    %36 = arith.subf %34, %35 : vector<1x128xf32>
    %37 = arith.extf %1 : vector<256x128xbf16> to vector<256x128xf32>
    %38 = vector.broadcast %32 : vector<1x128xf32> to vector<256x128xf32>
    %39 = arith.mulf %37, %38 : vector<256x128xf32>
    %40 = vector.broadcast %36 : vector<1x128xf32> to vector<256x128xf32>
    %41 = arith.addf %39, %40 : vector<256x128xf32>
    %cst_17 = arith.constant 5.000000e-01 : f32
    %42 = vector.broadcast %cst_17 : f32 to vector<256x128xf32>
    %43 = arith.mulf %42, %41 : vector<256x128xf32>
    %44 = math.tanh %43 : vector<256x128xf32>
    %cst_18 = arith.constant 1.000000e+00 : f32
    %45 = vector.broadcast %cst_18 : f32 to vector<256x128xf32>
    %46 = arith.addf %44, %45 : vector<256x128xf32>
    %cst_19 = arith.constant 5.000000e-01 : f32
    %47 = vector.broadcast %cst_19 : f32 to vector<256x128xf32>
    %48 = arith.mulf %47, %46 : vector<256x128xf32>
    %49 = arith.mulf %41, %48 : vector<256x128xf32>
    %50 = arith.truncf %49 : vector<256x128xf32> to vector<256x128xbf16>
    %51 = vector.extract_strided_slice %50 {offsets = [0, 0], sizes = [64, 128], strides = [1, 1]} : vector<256x128xbf16> to vector<64x128xbf16>
    %52 = vector.extract_strided_slice %50 {offsets = [0, 0], sizes = [192, 128], strides = [1, 1]} : vector<256x128xbf16> to vector<192x128xbf16>
    %53 = tpu.concatenate %51, %52 in 0 : vector<64x128xbf16>, vector<192x128xbf16> -> vector<256x128xbf16>
    %54 = vector.extract_strided_slice %50 {offsets = [64, 0], sizes = [192, 128], strides = [1, 1]} : vector<256x128xbf16> to vector<192x128xbf16>
    %55 = vector.extract_strided_slice %50 {offsets = [192, 0], sizes = [64, 128], strides = [1, 1]} : vector<256x128xbf16> to vector<64x128xbf16>
    %56 = tpu.concatenate %54, %55 in 0 : vector<192x128xbf16>, vector<64x128xbf16> -> vector<256x128xbf16>
    %57 = tpu.concatenate %53, %50, %56 in 1 : vector<256x128xbf16>, vector<256x128xbf16>, vector<256x128xbf16> -> vector<256x384xbf16>
    %c0_20 = arith.constant 0 : index
    %c0_21 = arith.constant 0 : index
    %c0_22 = arith.constant 0 : index
    %58 = vector.load %arg5[%c0_20, %c0_21, %c0_22] : memref<4x384x128xbf16, #tpu.memory_space<vmem>>, vector<1x384x128xbf16>
    %59 = vector.shape_cast %58 : vector<1x384x128xbf16> to vector<384x128xbf16>
    %cst_23 = arith.constant dense<0.000000e+00> : vector<256x128xf32>
    %60 = tpu.matmul %57, %59, %cst_23 {dimension_numbers = #tpu.dot_dimension_numbers<[1], [0], [0], [1], [0, 0, 1, 1], [], []>} : vector<256x384xbf16>, vector<384x128xbf16>, vector<256x128xf32> -> vector<256x128xf32>
    %c0_24 = arith.constant 0 : index
    %c0_25 = arith.constant 0 : index
    %c0_26 = arith.constant 0 : index
    %61 = vector.load %arg6[%c0_24, %c0_25, %c0_26] : memref<4x1x128xf32, #tpu.memory_space<vmem>>, vector<1x1x128xf32>
    %62 = vector.shape_cast %61 : vector<1x1x128xf32> to vector<1x128xf32>
    %63 = vector.broadcast %62 : vector<1x128xf32> to vector<256x128xf32>
    %64 = arith.addf %60, %63 : vector<256x128xf32>
    %cst_27 = arith.constant dense<0.000000e+00> : vector<1x128xf32>
    %65 = tpu.matmul %16, %64, %cst_27 {dimension_numbers = #tpu.dot_dimension_numbers<[1], [0], [0], [1], [0, 0, 1, 1], [], []>} : vector<1x256xf32>, vector<256x128xf32>, vector<1x128xf32> -> vector<1x128xf32>
    %66 = arith.mulf %64, %64 : vector<256x128xf32>
    %cst_28 = arith.constant dense<0.000000e+00> : vector<1x128xf32>
    %67 = tpu.matmul %16, %66, %cst_28 {dimension_numbers = #tpu.dot_dimension_numbers<[1], [0], [0], [1], [0, 0, 1, 1], [], []>} : vector<1x256xf32>, vector<256x128xf32>, vector<1x128xf32> -> vector<1x128xf32>
    %68 = arith.truncf %64 : vector<256x128xf32> to vector<256x128xbf16>
    %cst_29 = arith.constant dense<0.000000e+00> : vector<1x128xf32>
    %69 = tpu.matmul %65, %2, %cst_29 {dimension_numbers = #tpu.dot_dimension_numbers<[1], [0], [0], [1], [0, 0, 1, 1], [], []>} : vector<1x128xf32>, vector<128x128xf32>, vector<1x128xf32> -> vector<1x128xf32>
    %cst_30 = arith.constant dense<0.000000e+00> : vector<1x128xf32>
    %70 = tpu.matmul %67, %2, %cst_30 {dimension_numbers = #tpu.dot_dimension_numbers<[1], [0], [0], [1], [0, 0, 1, 1], [], []>} : vector<1x128xf32>, vector<128x128xf32>, vector<1x128xf32> -> vector<1x128xf32>
    %71 = arith.mulf %69, %69 : vector<1x128xf32>
    %72 = arith.subf %70, %71 : vector<1x128xf32>
    %cst_31 = arith.constant 0.000000e+00 : f32
    %73 = vector.broadcast %cst_31 : f32 to vector<1x128xf32>
    %74 = arith.maximumf %72, %73 : vector<1x128xf32>
    %cst_32 = arith.constant 9.99999974E-6 : f32
    %75 = vector.broadcast %cst_32 : f32 to vector<1x128xf32>
    %76 = arith.addf %74, %75 : vector<1x128xf32>
    %77 = math.rsqrt %76 : vector<1x128xf32>
    %c1 = arith.constant 1 : index
    %c0_33 = arith.constant 0 : index
    %c0_34 = arith.constant 0 : index
    %78 = vector.load %arg3[%c1, %c0_33, %c0_34] : memref<4x1x128xf32, #tpu.memory_space<vmem>>, vector<1x1x128xf32>
    %79 = vector.shape_cast %78 : vector<1x1x128xf32> to vector<1x128xf32>
    %80 = arith.mulf %77, %79 : vector<1x128xf32>
    %c1_35 = arith.constant 1 : index
    %c0_36 = arith.constant 0 : index
    %c0_37 = arith.constant 0 : index
    %81 = vector.load %arg4[%c1_35, %c0_36, %c0_37] : memref<4x1x128xf32, #tpu.memory_space<vmem>>, vector<1x1x128xf32>
    %82 = vector.shape_cast %81 : vector<1x1x128xf32> to vector<1x128xf32>
    %83 = arith.mulf %69, %80 : vector<1x128xf32>
    %84 = arith.subf %82, %83 : vector<1x128xf32>
    %85 = arith.extf %68 : vector<256x128xbf16> to vector<256x128xf32>
    %86 = vector.broadcast %80 : vector<1x128xf32> to vector<256x128xf32>
    %87 = arith.mulf %85, %86 : vector<256x128xf32>
    %88 = vector.broadcast %84 : vector<1x128xf32> to vector<256x128xf32>
    %89 = arith.addf %87, %88 : vector<256x128xf32>
    %cst_38 = arith.constant 5.000000e-01 : f32
    %90 = vector.broadcast %cst_38 : f32 to vector<256x128xf32>
    %91 = arith.mulf %90, %89 : vector<256x128xf32>
    %92 = math.tanh %91 : vector<256x128xf32>
    %cst_39 = arith.constant 1.000000e+00 : f32
    %93 = vector.broadcast %cst_39 : f32 to vector<256x128xf32>
    %94 = arith.addf %92, %93 : vector<256x128xf32>
    %cst_40 = arith.constant 5.000000e-01 : f32
    %95 = vector.broadcast %cst_40 : f32 to vector<256x128xf32>
    %96 = arith.mulf %95, %94 : vector<256x128xf32>
    %97 = arith.mulf %89, %96 : vector<256x128xf32>
    %98 = arith.truncf %97 : vector<256x128xf32> to vector<256x128xbf16>
    %99 = vector.extract_strided_slice %98 {offsets = [0, 0], sizes = [64, 128], strides = [1, 1]} : vector<256x128xbf16> to vector<64x128xbf16>
    %100 = vector.extract_strided_slice %98 {offsets = [0, 0], sizes = [192, 128], strides = [1, 1]} : vector<256x128xbf16> to vector<192x128xbf16>
    %101 = tpu.concatenate %99, %100 in 0 : vector<64x128xbf16>, vector<192x128xbf16> -> vector<256x128xbf16>
    %102 = vector.extract_strided_slice %98 {offsets = [64, 0], sizes = [192, 128], strides = [1, 1]} : vector<256x128xbf16> to vector<192x128xbf16>
    %103 = vector.extract_strided_slice %98 {offsets = [192, 0], sizes = [64, 128], strides = [1, 1]} : vector<256x128xbf16> to vector<64x128xbf16>
    %104 = tpu.concatenate %102, %103 in 0 : vector<192x128xbf16>, vector<64x128xbf16> -> vector<256x128xbf16>
    %105 = tpu.concatenate %101, %98, %104 in 1 : vector<256x128xbf16>, vector<256x128xbf16>, vector<256x128xbf16> -> vector<256x384xbf16>
    %c1_41 = arith.constant 1 : index
    %c0_42 = arith.constant 0 : index
    %c0_43 = arith.constant 0 : index
    %106 = vector.load %arg5[%c1_41, %c0_42, %c0_43] : memref<4x384x128xbf16, #tpu.memory_space<vmem>>, vector<1x384x128xbf16>
    %107 = vector.shape_cast %106 : vector<1x384x128xbf16> to vector<384x128xbf16>
    %cst_44 = arith.constant dense<0.000000e+00> : vector<256x128xf32>
    %108 = tpu.matmul %105, %107, %cst_44 {dimension_numbers = #tpu.dot_dimension_numbers<[1], [0], [0], [1], [0, 0, 1, 1], [], []>} : vector<256x384xbf16>, vector<384x128xbf16>, vector<256x128xf32> -> vector<256x128xf32>
    %c1_45 = arith.constant 1 : index
    %c0_46 = arith.constant 0 : index
    %c0_47 = arith.constant 0 : index
    %109 = vector.load %arg6[%c1_45, %c0_46, %c0_47] : memref<4x1x128xf32, #tpu.memory_space<vmem>>, vector<1x1x128xf32>
    %110 = vector.shape_cast %109 : vector<1x1x128xf32> to vector<1x128xf32>
    %111 = vector.broadcast %110 : vector<1x128xf32> to vector<256x128xf32>
    %112 = arith.addf %108, %111 : vector<256x128xf32>
    %cst_48 = arith.constant dense<0.000000e+00> : vector<1x128xf32>
    %113 = tpu.matmul %16, %112, %cst_48 {dimension_numbers = #tpu.dot_dimension_numbers<[1], [0], [0], [1], [0, 0, 1, 1], [], []>} : vector<1x256xf32>, vector<256x128xf32>, vector<1x128xf32> -> vector<1x128xf32>
    %114 = arith.mulf %112, %112 : vector<256x128xf32>
    %cst_49 = arith.constant dense<0.000000e+00> : vector<1x128xf32>
    %115 = tpu.matmul %16, %114, %cst_49 {dimension_numbers = #tpu.dot_dimension_numbers<[1], [0], [0], [1], [0, 0, 1, 1], [], []>} : vector<1x256xf32>, vector<256x128xf32>, vector<1x128xf32> -> vector<1x128xf32>
    %116 = arith.truncf %112 : vector<256x128xf32> to vector<256x128xbf16>
    %cst_50 = arith.constant dense<0.000000e+00> : vector<1x128xf32>
    %117 = tpu.matmul %113, %2, %cst_50 {dimension_numbers = #tpu.dot_dimension_numbers<[1], [0], [0], [1], [0, 0, 1, 1], [], []>} : vector<1x128xf32>, vector<128x128xf32>, vector<1x128xf32> -> vector<1x128xf32>
    %cst_51 = arith.constant dense<0.000000e+00> : vector<1x128xf32>
    %118 = tpu.matmul %115, %2, %cst_51 {dimension_numbers = #tpu.dot_dimension_numbers<[1], [0], [0], [1], [0, 0, 1, 1], [], []>} : vector<1x128xf32>, vector<128x128xf32>, vector<1x128xf32> -> vector<1x128xf32>
    %119 = arith.mulf %117, %117 : vector<1x128xf32>
    %120 = arith.subf %118, %119 : vector<1x128xf32>
    %cst_52 = arith.constant 0.000000e+00 : f32
    %121 = vector.broadcast %cst_52 : f32 to vector<1x128xf32>
    %122 = arith.maximumf %120, %121 : vector<1x128xf32>
    %cst_53 = arith.constant 9.99999974E-6 : f32
    %123 = vector.broadcast %cst_53 : f32 to vector<1x128xf32>
    %124 = arith.addf %122, %123 : vector<1x128xf32>
    %125 = math.rsqrt %124 : vector<1x128xf32>
    %c2 = arith.constant 2 : index
    %c0_54 = arith.constant 0 : index
    %c0_55 = arith.constant 0 : index
    %126 = vector.load %arg3[%c2, %c0_54, %c0_55] : memref<4x1x128xf32, #tpu.memory_space<vmem>>, vector<1x1x128xf32>
    %127 = vector.shape_cast %126 : vector<1x1x128xf32> to vector<1x128xf32>
    %128 = arith.mulf %125, %127 : vector<1x128xf32>
    %c2_56 = arith.constant 2 : index
    %c0_57 = arith.constant 0 : index
    %c0_58 = arith.constant 0 : index
    %129 = vector.load %arg4[%c2_56, %c0_57, %c0_58] : memref<4x1x128xf32, #tpu.memory_space<vmem>>, vector<1x1x128xf32>
    %130 = vector.shape_cast %129 : vector<1x1x128xf32> to vector<1x128xf32>
    %131 = arith.mulf %117, %128 : vector<1x128xf32>
    %132 = arith.subf %130, %131 : vector<1x128xf32>
    %133 = arith.extf %116 : vector<256x128xbf16> to vector<256x128xf32>
    %134 = vector.broadcast %128 : vector<1x128xf32> to vector<256x128xf32>
    %135 = arith.mulf %133, %134 : vector<256x128xf32>
    %136 = vector.broadcast %132 : vector<1x128xf32> to vector<256x128xf32>
    %137 = arith.addf %135, %136 : vector<256x128xf32>
    %cst_59 = arith.constant 5.000000e-01 : f32
    %138 = vector.broadcast %cst_59 : f32 to vector<256x128xf32>
    %139 = arith.mulf %138, %137 : vector<256x128xf32>
    %140 = math.tanh %139 : vector<256x128xf32>
    %cst_60 = arith.constant 1.000000e+00 : f32
    %141 = vector.broadcast %cst_60 : f32 to vector<256x128xf32>
    %142 = arith.addf %140, %141 : vector<256x128xf32>
    %cst_61 = arith.constant 5.000000e-01 : f32
    %143 = vector.broadcast %cst_61 : f32 to vector<256x128xf32>
    %144 = arith.mulf %143, %142 : vector<256x128xf32>
    %145 = arith.mulf %137, %144 : vector<256x128xf32>
    %146 = arith.truncf %145 : vector<256x128xf32> to vector<256x128xbf16>
    %147 = vector.extract_strided_slice %146 {offsets = [0, 0], sizes = [64, 128], strides = [1, 1]} : vector<256x128xbf16> to vector<64x128xbf16>
    %148 = vector.extract_strided_slice %146 {offsets = [0, 0], sizes = [192, 128], strides = [1, 1]} : vector<256x128xbf16> to vector<192x128xbf16>
    %149 = tpu.concatenate %147, %148 in 0 : vector<64x128xbf16>, vector<192x128xbf16> -> vector<256x128xbf16>
    %150 = vector.extract_strided_slice %146 {offsets = [64, 0], sizes = [192, 128], strides = [1, 1]} : vector<256x128xbf16> to vector<192x128xbf16>
    %151 = vector.extract_strided_slice %146 {offsets = [192, 0], sizes = [64, 128], strides = [1, 1]} : vector<256x128xbf16> to vector<64x128xbf16>
    %152 = tpu.concatenate %150, %151 in 0 : vector<192x128xbf16>, vector<64x128xbf16> -> vector<256x128xbf16>
    %153 = tpu.concatenate %149, %146, %152 in 1 : vector<256x128xbf16>, vector<256x128xbf16>, vector<256x128xbf16> -> vector<256x384xbf16>
    %c2_62 = arith.constant 2 : index
    %c0_63 = arith.constant 0 : index
    %c0_64 = arith.constant 0 : index
    %154 = vector.load %arg5[%c2_62, %c0_63, %c0_64] : memref<4x384x128xbf16, #tpu.memory_space<vmem>>, vector<1x384x128xbf16>
    %155 = vector.shape_cast %154 : vector<1x384x128xbf16> to vector<384x128xbf16>
    %cst_65 = arith.constant dense<0.000000e+00> : vector<256x128xf32>
    %156 = tpu.matmul %153, %155, %cst_65 {dimension_numbers = #tpu.dot_dimension_numbers<[1], [0], [0], [1], [0, 0, 1, 1], [], []>} : vector<256x384xbf16>, vector<384x128xbf16>, vector<256x128xf32> -> vector<256x128xf32>
    %c2_66 = arith.constant 2 : index
    %c0_67 = arith.constant 0 : index
    %c0_68 = arith.constant 0 : index
    %157 = vector.load %arg6[%c2_66, %c0_67, %c0_68] : memref<4x1x128xf32, #tpu.memory_space<vmem>>, vector<1x1x128xf32>
    %158 = vector.shape_cast %157 : vector<1x1x128xf32> to vector<1x128xf32>
    %159 = vector.broadcast %158 : vector<1x128xf32> to vector<256x128xf32>
    %160 = arith.addf %156, %159 : vector<256x128xf32>
    %cst_69 = arith.constant dense<0.000000e+00> : vector<1x128xf32>
    %161 = tpu.matmul %16, %160, %cst_69 {dimension_numbers = #tpu.dot_dimension_numbers<[1], [0], [0], [1], [0, 0, 1, 1], [], []>} : vector<1x256xf32>, vector<256x128xf32>, vector<1x128xf32> -> vector<1x128xf32>
    %162 = arith.mulf %160, %160 : vector<256x128xf32>
    %cst_70 = arith.constant dense<0.000000e+00> : vector<1x128xf32>
    %163 = tpu.matmul %16, %162, %cst_70 {dimension_numbers = #tpu.dot_dimension_numbers<[1], [0], [0], [1], [0, 0, 1, 1], [], []>} : vector<1x256xf32>, vector<256x128xf32>, vector<1x128xf32> -> vector<1x128xf32>
    %164 = arith.truncf %160 : vector<256x128xf32> to vector<256x128xbf16>
    %cst_71 = arith.constant dense<0.000000e+00> : vector<1x128xf32>
    %165 = tpu.matmul %161, %2, %cst_71 {dimension_numbers = #tpu.dot_dimension_numbers<[1], [0], [0], [1], [0, 0, 1, 1], [], []>} : vector<1x128xf32>, vector<128x128xf32>, vector<1x128xf32> -> vector<1x128xf32>
    %cst_72 = arith.constant dense<0.000000e+00> : vector<1x128xf32>
    %166 = tpu.matmul %163, %2, %cst_72 {dimension_numbers = #tpu.dot_dimension_numbers<[1], [0], [0], [1], [0, 0, 1, 1], [], []>} : vector<1x128xf32>, vector<128x128xf32>, vector<1x128xf32> -> vector<1x128xf32>
    %167 = arith.mulf %165, %165 : vector<1x128xf32>
    %168 = arith.subf %166, %167 : vector<1x128xf32>
    %cst_73 = arith.constant 0.000000e+00 : f32
    %169 = vector.broadcast %cst_73 : f32 to vector<1x128xf32>
    %170 = arith.maximumf %168, %169 : vector<1x128xf32>
    %cst_74 = arith.constant 9.99999974E-6 : f32
    %171 = vector.broadcast %cst_74 : f32 to vector<1x128xf32>
    %172 = arith.addf %170, %171 : vector<1x128xf32>
    %173 = math.rsqrt %172 : vector<1x128xf32>
    %c3 = arith.constant 3 : index
    %c0_75 = arith.constant 0 : index
    %c0_76 = arith.constant 0 : index
    %174 = vector.load %arg3[%c3, %c0_75, %c0_76] : memref<4x1x128xf32, #tpu.memory_space<vmem>>, vector<1x1x128xf32>
    %175 = vector.shape_cast %174 : vector<1x1x128xf32> to vector<1x128xf32>
    %176 = arith.mulf %173, %175 : vector<1x128xf32>
    %c3_77 = arith.constant 3 : index
    %c0_78 = arith.constant 0 : index
    %c0_79 = arith.constant 0 : index
    %177 = vector.load %arg4[%c3_77, %c0_78, %c0_79] : memref<4x1x128xf32, #tpu.memory_space<vmem>>, vector<1x1x128xf32>
    %178 = vector.shape_cast %177 : vector<1x1x128xf32> to vector<1x128xf32>
    %179 = arith.mulf %165, %176 : vector<1x128xf32>
    %180 = arith.subf %178, %179 : vector<1x128xf32>
    %181 = arith.extf %164 : vector<256x128xbf16> to vector<256x128xf32>
    %182 = vector.broadcast %176 : vector<1x128xf32> to vector<256x128xf32>
    %183 = arith.mulf %181, %182 : vector<256x128xf32>
    %184 = vector.broadcast %180 : vector<1x128xf32> to vector<256x128xf32>
    %185 = arith.addf %183, %184 : vector<256x128xf32>
    %cst_80 = arith.constant 5.000000e-01 : f32
    %186 = vector.broadcast %cst_80 : f32 to vector<256x128xf32>
    %187 = arith.mulf %186, %185 : vector<256x128xf32>
    %188 = math.tanh %187 : vector<256x128xf32>
    %cst_81 = arith.constant 1.000000e+00 : f32
    %189 = vector.broadcast %cst_81 : f32 to vector<256x128xf32>
    %190 = arith.addf %188, %189 : vector<256x128xf32>
    %cst_82 = arith.constant 5.000000e-01 : f32
    %191 = vector.broadcast %cst_82 : f32 to vector<256x128xf32>
    %192 = arith.mulf %191, %190 : vector<256x128xf32>
    %193 = arith.mulf %185, %192 : vector<256x128xf32>
    %194 = arith.truncf %193 : vector<256x128xf32> to vector<256x128xbf16>
    %195 = vector.extract_strided_slice %194 {offsets = [0, 0], sizes = [64, 128], strides = [1, 1]} : vector<256x128xbf16> to vector<64x128xbf16>
    %196 = vector.extract_strided_slice %194 {offsets = [0, 0], sizes = [192, 128], strides = [1, 1]} : vector<256x128xbf16> to vector<192x128xbf16>
    %197 = tpu.concatenate %195, %196 in 0 : vector<64x128xbf16>, vector<192x128xbf16> -> vector<256x128xbf16>
    %198 = vector.extract_strided_slice %194 {offsets = [64, 0], sizes = [192, 128], strides = [1, 1]} : vector<256x128xbf16> to vector<192x128xbf16>
    %199 = vector.extract_strided_slice %194 {offsets = [192, 0], sizes = [64, 128], strides = [1, 1]} : vector<256x128xbf16> to vector<64x128xbf16>
    %200 = tpu.concatenate %198, %199 in 0 : vector<192x128xbf16>, vector<64x128xbf16> -> vector<256x128xbf16>
    %201 = tpu.concatenate %197, %194, %200 in 1 : vector<256x128xbf16>, vector<256x128xbf16>, vector<256x128xbf16> -> vector<256x384xbf16>
    %c3_83 = arith.constant 3 : index
    %c0_84 = arith.constant 0 : index
    %c0_85 = arith.constant 0 : index
    %202 = vector.load %arg5[%c3_83, %c0_84, %c0_85] : memref<4x384x128xbf16, #tpu.memory_space<vmem>>, vector<1x384x128xbf16>
    %203 = vector.shape_cast %202 : vector<1x384x128xbf16> to vector<384x128xbf16>
    %cst_86 = arith.constant dense<0.000000e+00> : vector<256x128xf32>
    %204 = tpu.matmul %201, %203, %cst_86 {dimension_numbers = #tpu.dot_dimension_numbers<[1], [0], [0], [1], [0, 0, 1, 1], [], []>} : vector<256x384xbf16>, vector<384x128xbf16>, vector<256x128xf32> -> vector<256x128xf32>
    %c3_87 = arith.constant 3 : index
    %c0_88 = arith.constant 0 : index
    %c0_89 = arith.constant 0 : index
    %205 = vector.load %arg6[%c3_87, %c0_88, %c0_89] : memref<4x1x128xf32, #tpu.memory_space<vmem>>, vector<1x1x128xf32>
    %206 = vector.shape_cast %205 : vector<1x1x128xf32> to vector<1x128xf32>
    %207 = vector.broadcast %206 : vector<1x128xf32> to vector<256x128xf32>
    %208 = arith.addf %204, %207 : vector<256x128xf32>
    %209 = arith.extf %1 : vector<256x128xbf16> to vector<256x128xf32>
    %210 = arith.addf %209, %208 : vector<256x128xf32>
    %c0_90 = arith.constant 0 : index
    %c0_91 = arith.constant 0 : index
    %c0_92 = arith.constant 0 : index
    %211 = vector.load %arg7[%c0_90, %c0_91, %c0_92] : memref<1x256x128xf32, #tpu.memory_space<vmem>>, vector<1x256x128xf32>
    %212 = vector.shape_cast %211 : vector<1x256x128xf32> to vector<256x128xf32>
    %213 = vector.shape_cast %210 : vector<256x128xf32> to vector<1x256x128xf32>
    tpu.vector_store %arg7[%c0_90, %c0_91, %c0_92], %213 {strides = array<i32>} : memref<1x256x128xf32, #tpu.memory_space<vmem>>, vector<1x256x128xf32>,
    return
  }
  func.func @transform_0(%arg0: i32) -> (i32, i32, i32) {
    %c0_i32 = arith.constant 0 : i32
    %c0_i32_0 = arith.constant 0 : i32
    %c0_i32_1 = arith.constant 0 : i32
    return %arg0, %c0_i32, %c0_i32_0 : i32, i32, i32
  }
  func.func @transform_1(%arg0: i32) -> (i32, i32) {
    %c0_i32 = arith.constant 0 : i32
    %c0_i32_0 = arith.constant 0 : i32
    %c0_i32_1 = arith.constant 0 : i32
    return %c0_i32, %c0_i32_0 : i32, i32
  }
  func.func @transform_2(%arg0: i32) -> (i32, i32, i32) {
    %c0_i32 = arith.constant 0 : i32
    %c0_i32_0 = arith.constant 0 : i32
    %c0_i32_1 = arith.constant 0 : i32
    %c0_i32_2 = arith.constant 0 : i32
    return %c0_i32, %c0_i32_0, %c0_i32_1 : i32, i32, i32
  }
  func.func @transform_3(%arg0: i32) -> (i32, i32, i32) {
    %c0_i32 = arith.constant 0 : i32
    %c0_i32_0 = arith.constant 0 : i32
    %c0_i32_1 = arith.constant 0 : i32
    %c0_i32_2 = arith.constant 0 : i32
    return %c0_i32, %c0_i32_0, %c0_i32_1 : i32, i32, i32
  }
  func.func @transform_4(%arg0: i32) -> (i32, i32, i32) {
    %c0_i32 = arith.constant 0 : i32
    %c0_i32_0 = arith.constant 0 : i32
    %c0_i32_1 = arith.constant 0 : i32
    %c0_i32_2 = arith.constant 0 : i32
    return %c0_i32, %c0_i32_0, %c0_i32_1 : i32, i32, i32
  }
  func.func @transform_5(%arg0: i32) -> (i32, i32, i32) {
    %c0_i32 = arith.constant 0 : i32
    %c0_i32_0 = arith.constant 0 : i32
    %c0_i32_1 = arith.constant 0 : i32
    %c0_i32_2 = arith.constant 0 : i32
    return %c0_i32, %c0_i32_0, %c0_i32_1 : i32, i32, i32
  }
  func.func @transform_6(%arg0: i32) -> (i32, i32, i32) {
    %c0_i32 = arith.constant 0 : i32
    %c0_i32_0 = arith.constant 0 : i32
    %c0_i32_1 = arith.constant 0 : i32
    return %arg0, %c0_i32, %c0_i32_0 : i32, i32, i32
  }
}

</mosaic_0001>

<llo_original>
// kernel: tpu_custom_call.1
$region0: #{tpu_custom_call.1}
  #allocation0 [shape = 'u32[]', space=smem, size = 0x4, offset = 0x4, fixed_abs, tag = 'smem constant byte address 0x4 - core index']
  #allocation1 [shape = 'u32[144,128]{1,0:T(1,128)}', space=vmem, size = 0x12000, scoped, tag = 'internal scratch']
  %s0 = inlined_call_operand.hbm [shape: bf16[2,256,128], index: 0, kind: input, shape index: {}]
  %s1 = inlined_call_operand.hbm [shape: f32[128,128], index: 1, kind: input, shape index: {}]
  %s2 = inlined_call_operand.vmem [shape: f32[4,1,128], index: 2, kind: input, shape index: {}]
  %s3 = inlined_call_operand.vmem [shape: f32[4,1,128], index: 3, kind: input, shape index: {}]
  %s4 = inlined_call_operand.hbm [shape: bf16[4,384,128], index: 4, kind: input, shape index: {}]
  %s5 = inlined_call_operand.vmem [shape: f32[4,1,128], index: 5, kind: input, shape index: {}]
  %s6 = inlined_call_operand.hbm [shape: f32[2,256,128], index: 6, kind: output, shape index: {}]
  %s7 = sld [smem:[#allocation0]]
  $region69: #{tpu_custom_call.1} parent=0
    _
  %s9 = ssub.s32 1, %s7
  %s10 = scalar_select 0, %s9, %s7
  $region1: #{tpu_custom_call.1} parent=0
    #allocation2 [shape = 'u8[131072]{0}', space=vmem, size = 0x20000, scoped, tag = 'input window, operand 0']
    #allocation3 [shape = 's32[2]{0}', space=sflag, size = 0x8, scoped, tag = 'scoped memory for tpu_custom_call.1']
    #allocation4 [shape = 's32[2]{0}', space=sflag, size = 0x8, scoped, tag = 'scoped memory for tpu_custom_call.1']
    #allocation5 [shape = 'u8[65536]{0}', space=vmem, size = 0x10000, scoped, tag = 'input window, operand 1, single buffered']
    #allocation6 [shape = 's32[1]{0}', space=sflag, size = 0x4, scoped, tag = 'scoped memory for tpu_custom_call.1']
    #allocation7 [shape = 'u8[393216]{0}', space=vmem, size = 0x60000, scoped, tag = 'input window, operand 4, single buffered']
    #allocation8 [shape = 'u8[262144]{0}', space=vmem, size = 0x40000, scoped, tag = 'output window, operand 0']
    %11 = vsyncpa [#allocation3], 0
    %s12 = scalar_lea.sflag [#allocation3], 1
    %13 = vsyncpa %s12, 0
    %14 = vsyncpa [#allocation6], 0
    %15 = vsyncpa [#allocation4], 0
    %s16 = scalar_lea.sflag [#allocation4], 1
    %17 = vsyncpa %s16, 0
    loop: start=0, step=1, limit=4
    $region2: #{tpu_custom_call.1} parent=1 // loop_pre_header
      _
    $region3: #{tpu_custom_call.1} parent=1 // loop_header
      %s19 = sphi 0, %s23
      %p20 = scmp.ge.s32.totalorder %s19, 4
      %s29 = sphi 0, %s31
      %s32 = sphi 0, %s29
      %s33 = sphi 0, %s32
      %s49 = sphi 0, %s33
      %s53 = sphi 0, %s53
      %s55 = sphi 0, %s53
      %s56 = sphi 0, %s55
      %s70 = sphi 0, %s56
      %s74 = sphi 0, %s74
      %s76 = sphi 0, %s74
      %s77 = sphi 0, %s76
      %s91 = sphi 0, %s77
      %s95 = sphi 0, %s95
      %s97 = sphi 0, %s95
      %s98 = sphi 0, %s97
      %s112 = sphi 0, %s98
      %s116 = sphi 0, %s116
      %s118 = sphi 0, %s116
      %s119 = sphi 0, %s118
      %s133 = sphi 0, %s119
      %s137 = sphi 0, %s137
      %s139 = sphi 0, %s137
      %s140 = sphi 0, %s139
      %s154 = sphi 0, %s140
      %s160 = sphi 0, %s162
      %s163 = sphi 0, %s160
      %s164 = sphi 0, %s163
      %s180 = sphi 0, %s164
    $region4: #{tpu_custom_call.1} parent=1 // loop_header_branch
      %22 = sbr.rel (%p20) target = $region8
    $region5: #{tpu_custom_call.1} parent=1 // loop_body
      %s24 = ssub.s32 %s19, 1
      %s25 = ssub.s32 %s19, 2
      %s26 = sadd.s32 %s19, 1
      %s27 = ssub.s32 %s19, %s26
      %p28 = scmp.eq.s32.totalorder %s27, 0
      %s30 = sadd.s32 %s29, 1
      %s31 = scalar_select %p28, %s29, %s30
      %p34 = pneg %p28
      %p35 = scmp.eq.s32.totalorder %s19, 1
      %p36 = por %p34, %p35
      %p37 = scmp.ne.s32.totalorder %s29, %s32
      %p38 = scmp.eq.s32.totalorder %s19, 0
      %p39 = por %p37, %p38
      %p40 = scmp.ne.s32.totalorder %s29, %s32
      %p41 = scmp.eq.s32.totalorder %s24, 1
      %p42 = por %p40, %p41
      %p43 = scmp.ne.s32.totalorder %s32, %s33
      %p44 = scmp.eq.s32.totalorder %s24, 0
      %p45 = por %p43, %p44
      %p46 = scmp.ne.s32.totalorder %s32, %s33
      %p47 = scmp.eq.s32.totalorder %s25, 1
      %p48 = por %p46, %p47
      %p50 = scmp.ne.s32.totalorder %s33, %s49
      %p51 = scmp.eq.s32.totalorder %s25, 0
      %p52 = por %p50, %p51
      %s54 = sadd.s32 %s53, 1
      %p57 = scmp.eq.s32.totalorder %s19, 1
      %p58 = scmp.ne.s32.totalorder %s53, %s55
      %p59 = scmp.eq.s32.totalorder %s19, 0
      %p60 = por %p58, %p59
      %p61 = scmp.ne.s32.totalorder %s53, %s55
      %p62 = scmp.eq.s32.totalorder %s24, 1
      %p63 = por %p61, %p62
      %p64 = scmp.ne.s32.totalorder %s55, %s56
      %p65 = scmp.eq.s32.totalorder %s24, 0
      %p66 = por %p64, %p65
      %p67 = scmp.ne.s32.totalorder %s55, %s56
      %p68 = scmp.eq.s32.totalorder %s25, 1
      %p69 = por %p67, %p68
      %p71 = scmp.ne.s32.totalorder %s56, %s70
      %p72 = scmp.eq.s32.totalorder %s25, 0
      %p73 = por %p71, %p72
      %s75 = sadd.s32 %s74, 1
      %p78 = scmp.eq.s32.totalorder %s19, 1
      %p79 = scmp.ne.s32.totalorder %s74, %s76
      %p80 = scmp.eq.s32.totalorder %s19, 0
      %p81 = por %p79, %p80
      %p82 = scmp.ne.s32.totalorder %s74, %s76
      %p83 = scmp.eq.s32.totalorder %s24, 1
      %p84 = por %p82, %p83
      %p85 = scmp.ne.s32.totalorder %s76, %s77
      %p86 = scmp.eq.s32.totalorder %s24, 0
      %p87 = por %p85, %p86
      %p88 = scmp.ne.s32.totalorder %s76, %s77
      %p89 = scmp.eq.s32.totalorder %s25, 1
      %p90 = por %p88, %p89
      %p92 = scmp.ne.s32.totalorder %s77, %s91
      %p93 = scmp.eq.s32.totalorder %s25, 0
      %p94 = por %p92, %p93
      %s96 = sadd.s32 %s95, 1
      %p99 = scmp.eq.s32.totalorder %s19, 1
      %p100 = scmp.ne.s32.totalorder %s95, %s97
      %p101 = scmp.eq.s32.totalorder %s19, 0
      %p102 = por %p100, %p101
      %p103 = scmp.ne.s32.totalorder %s95, %s97
      %p104 = scmp.eq.s32.totalorder %s24, 1
      %p105 = por %p103, %p104
      %p106 = scmp.ne.s32.totalorder %s97, %s98
      %p107 = scmp.eq.s32.totalorder %s24, 0
      %p108 = por %p106, %p107
      %p109 = scmp.ne.s32.totalorder %s97, %s98
      %p110 = scmp.eq.s32.totalorder %s25, 1
      %p111 = por %p109, %p110
      %p113 = scmp.ne.s32.totalorder %s98, %s112
      %p114 = scmp.eq.s32.totalorder %s25, 0
      %p115 = por %p113, %p114
      %s117 = sadd.s32 %s116, 1
      %p120 = scmp.eq.s32.totalorder %s19, 1
      %p121 = scmp.ne.s32.totalorder %s116, %s118
      %p122 = scmp.eq.s32.totalorder %s19, 0
      %p123 = por %p121, %p122
      %p124 = scmp.ne.s32.totalorder %s116, %s118
      %p125 = scmp.eq.s32.totalorder %s24, 1
      %p126 = por %p124, %p125
      %p127 = scmp.ne.s32.totalorder %s118, %s119
      %p128 = scmp.eq.s32.totalorder %s24, 0
      %p129 = por %p127, %p128
      %p130 = scmp.ne.s32.totalorder %s118, %s119
      %p131 = scmp.eq.s32.totalorder %s25, 1
      %p132 = por %p130, %p131
      %p134 = scmp.ne.s32.totalorder %s119, %s133
      %p135 = scmp.eq.s32.totalorder %s25, 0
      %p136 = por %p134, %p135
      %s138 = sadd.s32 %s137, 1
      %p141 = scmp.eq.s32.totalorder %s19, 1
      %p142 = scmp.ne.s32.totalorder %s137, %s139
      %p143 = scmp.eq.s32.totalorder %s19, 0
      %p144 = por %p142, %p143
      %p145 = scmp.ne.s32.totalorder %s137, %s139
      %p146 = scmp.eq.s32.totalorder %s24, 1
      %p147 = por %p145, %p146
      %p148 = scmp.ne.s32.totalorder %s139, %s140
      %p149 = scmp.eq.s32.totalorder %s24, 0
      %p150 = por %p148, %p149
      %p151 = scmp.ne.s32.totalorder %s139, %s140
      %p152 = scmp.eq.s32.totalorder %s25, 1
      %p153 = por %p151, %p152
      %p155 = scmp.ne.s32.totalorder %s140, %s154
      %p156 = scmp.eq.s32.totalorder %s25, 0
      %p157 = por %p155, %p156
      %s158 = ssub.s32 %s19, %s26
      %p159 = scmp.eq.s32.totalorder %s158, 0
      %s161 = sadd.s32 %s160, 1
      %s162 = scalar_select %p159, %s160, %s161
      %p165 = pneg %p159
      %p166 = scmp.eq.s32.totalorder %s19, 1
      %p167 = por %p165, %p166
      %p168 = scmp.ne.s32.totalorder %s160, %s163
      %p169 = scmp.eq.s32.totalorder %s19, 0
      %p170 = por %p168, %p169
      %p171 = scmp.ne.s32.totalorder %s160, %s163
      %p172 = scmp.eq.s32.totalorder %s24, 1
      %p173 = por %p171, %p172
      %p174 = scmp.ne.s32.totalorder %s163, %s164
      %p175 = scmp.eq.s32.totalorder %s24, 0
      %p176 = por %p174, %p175
      %p177 = scmp.ne.s32.totalorder %s163, %s164
      %p178 = scmp.eq.s32.totalorder %s25, 1
      %p179 = por %p177, %p178
      %p181 = scmp.ne.s32.totalorder %s164, %s180
      %p182 = scmp.eq.s32.totalorder %s25, 0
      %p183 = por %p181, %p182
      %p184 = scmp.le.s32.totalorder 1, %s19
      %p185 = scmp.lt.s32.totalorder %s19, 3
      %p186 = pnand %p184, %p185
      %p187 = pneg %p186
      // Predicated region
      $region9: #{tpu_custom_call.1} parent=5 // pred_check
        _
      $region10: #{tpu_custom_call.1} parent=5 // pred_check_branch
        %189 = sbr.rel (%p186) target = $region12
      $region11: #{tpu_custom_call.1} parent=5 // pred_region
        %s190 = ssub.s32 %s19, 1
        // Predicated region
        $region13: #{tpu_custom_call.1} parent=11 // pred_check
          %p191 = pneg %p66
        $region14: #{tpu_custom_call.1} parent=11 // pred_check_branch
          %193 = sbr.rel (%p191) target = $region16
        $region15: #{tpu_custom_call.1} parent=11 // pred_region
          %s195 = ssub.s32 2048, 2048
          %196 = vsyncadd [#allocation6], %s195
          %s197 = sshll.u32 [#allocation5], 4
          %s198 = int_to_ptr.vmem [resolvable:$true] %s197
          %203 = dma.hbm_to_vmem [thread:$0]  %s1, 2048, %s198, [#allocation6], 128, 128, 8
        $region16: #{tpu_custom_call.1} parent=11 // pred_fallthru
          _
        // Predicated region
        $region17: #{tpu_custom_call.1} parent=11 // pred_check
          %p204 = pneg %p87
        $region18: #{tpu_custom_call.1} parent=11 // pred_check_branch
          %206 = sbr.rel (%p204) target = $region20
        $region19: #{tpu_custom_call.1} parent=11 // pred_region
          _
        $region20: #{tpu_custom_call.1} parent=11 // pred_fallthru
          _
        // Predicated region
        $region21: #{tpu_custom_call.1} parent=11 // pred_check
          %p207 = pneg %p108
        $region22: #{tpu_custom_call.1} parent=11 // pred_check_branch
          %209 = sbr.rel (%p207) target = $region24
        $region23: #{tpu_custom_call.1} parent=11 // pred_region
          _
        $region24: #{tpu_custom_call.1} parent=11 // pred_fallthru
          _
        // Predicated region
        $region25: #{tpu_custom_call.1} parent=11 // pred_check
          %p210 = pneg %p129
        $region26: #{tpu_custom_call.1} parent=11 // pred_check_branch
          %212 = sbr.rel (%p210) target = $region28
        $region27: #{tpu_custom_call.1} parent=11 // pred_region
          %s214 = ssub.s32 12288, 12288
          %215 = vsyncadd [#allocation6], %s214
          %s216 = sshll.u32 [#allocation7], 4
          %s217 = int_to_ptr.vmem [resolvable:$true] %s216
          %222 = dma.hbm_to_vmem [thread:$0]  %s4, 12288, %s217, [#allocation6], 64, 64, 4
        $region28: #{tpu_custom_call.1} parent=11 // pred_fallthru
          _
        // Predicated region
        $region29: #{tpu_custom_call.1} parent=11 // pred_check
          %p223 = pneg %p150
        $region30: #{tpu_custom_call.1} parent=11 // pred_check_branch
          %225 = sbr.rel (%p223) target = $region32
        $region31: #{tpu_custom_call.1} parent=11 // pred_region
          _
        $region32: #{tpu_custom_call.1} parent=11 // pred_fallthru
          _
      $region12: #{tpu_custom_call.1} parent=5 // pred_fallthru
        _
      %p226 = scmp.lt.s32.totalorder %s19, 2
      // Predicated region
      $region33: #{tpu_custom_call.1} parent=5 // pred_check
        %p227 = pneg %p226
      $region34: #{tpu_custom_call.1} parent=5 // pred_check_branch
        %229 = sbr.rel (%p227) target = $region36
      $region35: #{tpu_custom_call.1} parent=5 // pred_region
        // Predicated region
        $region37: #{tpu_custom_call.1} parent=35 // pred_check
          %p230 = pneg %p39
        $region38: #{tpu_custom_call.1} parent=35 // pred_check_branch
          %232 = sbr.rel (%p230) target = $region40
        $region39: #{tpu_custom_call.1} parent=35 // pred_region
          %s233 = sand.u32 %s29, 1
          %s234 = scalar_lea.sflag [#allocation3], %s233
          %s235 = sand.u32 %s29, 1
          %s236 = smul.addr %s235, 128
          %s237 = scalar_lea.vmem [#allocation2], %s236
          %s239 = ssub.s32 2048, 2048
          %240 = vsyncadd %s234, %s239
          %s241 = smul.addr %s19, 32
          %s242 = smul.addr %s241, 64
          %s243 = scalar_lea.hbm %s0, %s242
          %s244 = sshll.u32 %s237, 4
          %s245 = int_to_ptr.vmem [resolvable:$true] %s244
          %250 = dma.hbm_to_vmem [thread:$0]  %s243, 2048, %s245, %s234, 64, 64, 4
        $region40: #{tpu_custom_call.1} parent=35 // pred_fallthru
          _
      $region36: #{tpu_custom_call.1} parent=5 // pred_fallthru
        _
      %p251 = scmp.le.s32.totalorder 1, %s19
      %p252 = scmp.lt.s32.totalorder %s19, 3
      %p253 = pnand %p251, %p252
      %p254 = pneg %p253
      // Predicated region
      $region41: #{tpu_custom_call.1} parent=5 // pred_check
        _
      $region42: #{tpu_custom_call.1} parent=5 // pred_check_branch
        %256 = sbr.rel (%p253) target = $region44
      $region43: #{tpu_custom_call.1} parent=5 // pred_region
        %s257 = ssub.s32 %s19, 1
        %s258 = sand.u32 %s32, 1
        %s259 = scalar_lea.sflag [#allocation3], %s258
        %s260 = sand.u32 %s32, 1
        %s261 = smul.addr %s260, 128
        %s262 = scalar_lea.vmem [#allocation2], %s261
        // Predicated region
        $region45: #{tpu_custom_call.1} parent=43 // pred_check
          %p263 = pneg %p45
        $region46: #{tpu_custom_call.1} parent=43 // pred_check_branch
          %265 = sbr.rel (%p263) target = $region48
        $region47: #{tpu_custom_call.1} parent=43 // pred_region
          %266 = dma.done %s259, 2048
        $region48: #{tpu_custom_call.1} parent=43 // pred_fallthru
          _
        // Predicated region
        $region49: #{tpu_custom_call.1} parent=43 // pred_check
          %p267 = pneg %p66
        $region50: #{tpu_custom_call.1} parent=43 // pred_check_branch
          %269 = sbr.rel (%p267) target = $region52
        $region51: #{tpu_custom_call.1} parent=43 // pred_region
          %270 = dma.done [#allocation6], 2048
        $region52: #{tpu_custom_call.1} parent=43 // pred_fallthru
          _
        // Predicated region
        $region53: #{tpu_custom_call.1} parent=43 // pred_check
          %p271 = pneg %p129
        $region54: #{tpu_custom_call.1} parent=43 // pred_check_branch
          %273 = sbr.rel (%p271) target = $region56
        $region55: #{tpu_custom_call.1} parent=43 // pred_region
          %274 = dma.done [#allocation6], 12288
        $region56: #{tpu_custom_call.1} parent=43 // pred_fallthru
          _
        %s275 = sand.u32 %s32, 1
        %s276 = scalar_lea.sflag [#allocation3], %s275
        %s277 = sand.u32 %s32, 1
        %s278 = smul.addr %s277, 128
        %s279 = scalar_lea.vmem [#allocation2], %s278
        %p280 = pneg %p45
        %p281 = pneg %p42
        %p282 = pneg %p66
        %p283 = pneg %p63
        %p284 = pneg %p87
        %p285 = pneg %p84
        %p286 = pneg %p108
        %p287 = pneg %p105
        %p288 = pneg %p129
        %p289 = pneg %p126
        %p290 = pneg %p150
        %p291 = pneg %p147
        %p292 = pneg %p176
        %p293 = pneg %p173
        %s294 = sand.u32 %s163, 1
        %s295 = scalar_lea.sflag [#allocation4], %s294
        %s296 = sand.u32 %s163, 1
        %s297 = smul.addr %s296, 256
        %s298 = scalar_lea.vmem [#allocation8], %s297
        %v300 = vld [vmem:[%s262] sm:$0xf]
        %v301 = vld [vmem:[%s262 + $0x4] sm:$0xf]
        %v302 = vld [vmem:[%s262 + $0x8] sm:$0xf]
        %v303 = vld [vmem:[%s262 + $0xc] sm:$0xf]
        %v304 = vld [vmem:[%s262 + $0x10] sm:$0xf]
        %v305 = vld [vmem:[%s262 + $0x14] sm:$0xf]
        %v306 = vld [vmem:[%s262 + $0x18] sm:$0xf]
        %v307 = vld [vmem:[%s262 + $0x1c] sm:$0xf]
        %v308 = vld [vmem:[%s262 + $0x20] sm:$0xf]
        %v309 = vld [vmem:[%s262 + $0x24] sm:$0xf]
        %v310 = vld [vmem:[%s262 + $0x28] sm:$0xf]
        %v311 = vld [vmem:[%s262 + $0x2c] sm:$0xf]
        %v312 = vld [vmem:[%s262 + $0x30] sm:$0xf]
        %v313 = vld [vmem:[%s262 + $0x34] sm:$0xf]
        %v314 = vld [vmem:[%s262 + $0x38] sm:$0xf]
        %v315 = vld [vmem:[%s262 + $0x3c] sm:$0xf]
        %v316 = vld [vmem:[%s262 + $0x40] sm:$0xf]
        %v317 = vld [vmem:[%s262 + $0x44] sm:$0xf]
        %v318 = vld [vmem:[%s262 + $0x48] sm:$0xf]
        %v319 = vld [vmem:[%s262 + $0x4c] sm:$0xf]
        %v320 = vld [vmem:[%s262 + $0x50] sm:$0xf]
        %v321 = vld [vmem:[%s262 + $0x54] sm:$0xf]
        %v322 = vld [vmem:[%s262 + $0x58] sm:$0xf]
        %v323 = vld [vmem:[%s262 + $0x5c] sm:$0xf]
        %v324 = vld [vmem:[%s262 + $0x60] sm:$0xf]
        %v325 = vld [vmem:[%s262 + $0x64] sm:$0xf]
        %v326 = vld [vmem:[%s262 + $0x68] sm:$0xf]
        %v327 = vld [vmem:[%s262 + $0x6c] sm:$0xf]
        %v328 = vld [vmem:[%s262 + $0x70] sm:$0xf]
        %v329 = vld [vmem:[%s262 + $0x74] sm:$0xf]
        %v330 = vld [vmem:[%s262 + $0x78] sm:$0xf]
        %v331 = vld [vmem:[%s262 + $0x7c] sm:$0xf]
        %v332 = vld [vmem:[#allocation5] sm:$0xff]
        %v333 = vld [vmem:[#allocation5 + $0x8] sm:$0xff]
        %v334 = vld [vmem:[#allocation5 + $0x10] sm:$0xff]
        %v335 = vld [vmem:[#allocation5 + $0x18] sm:$0xff]
        %v336 = vld [vmem:[#allocation5 + $0x20] sm:$0xff]
        %v337 = vld [vmem:[#allocation5 + $0x28] sm:$0xff]
        %v338 = vld [vmem:[#allocation5 + $0x30] sm:$0xff]
        %v339 = vld [vmem:[#allocation5 + $0x38] sm:$0xff]
        %v340 = vld [vmem:[#allocation5 + $0x40] sm:$0xff]
        %v341 = vld [vmem:[#allocation5 + $0x48] sm:$0xff]
        %v342 = vld [vmem:[#allocation5 + $0x50] sm:$0xff]
        %v343 = vld [vmem:[#allocation5 + $0x58] sm:$0xff]
        %v344 = vld [vmem:[#allocation5 + $0x60] sm:$0xff]
        %v345 = vld [vmem:[#allocation5 + $0x68] sm:$0xff]
        %v346 = vld [vmem:[#allocation5 + $0x70] sm:$0xff]
        %v347 = vld [vmem:[#allocation5 + $0x78] sm:$0xff]
        %v348 = vlaneseq
        %v349 = vand.u32 %v348, 127
        %v350 = vadd.s32 %v349, 128
        %vm351 = vcmp.lt.s32.totalorder %v349, 64
        %vm352 = vcmp.lt.s32.totalorder %v350, 64
        %v353 = vsel %vm351, 1, 0
        %v354 = vsel %vm352, 1, 0
        %v355 = vcvt.s32.f32 %v353
        %v356 = vcvt.s32.f32 %v354
        %v357 = vadd.f32 %v355, 1.0
        %v358 = vadd.f32 %v356, 1.0
        %vm359 = vcmp.ge.s32.totalorder %v349, 192
        %vm360 = vcmp.ge.s32.totalorder %v350, 192
        %v361 = vsel %vm359, 1, 0
        %v362 = vsel %vm360, 1, 0
        %v363 = vcvt.s32.f32 %v361
        %v364 = vcvt.s32.f32 %v362
        %v365 = vadd.f32 %v357, %v363
        %v366 = vadd.f32 %v358, %v364
        %v367 = vmul.f32 %v365, 0.0026041667
        %v368 = vmul.f32 %v366, 0.0026041667
        %v369 = vunpack.c.l.bf16 %v300
        %v370 = vunpack.c.l.bf16 %v301
        %v371 = vunpack.c.l.bf16 %v302
        %v372 = vunpack.c.l.bf16 %v303
        %v373 = vunpack.c.l.bf16 %v304
        %v374 = vunpack.c.l.bf16 %v305
        %v375 = vunpack.c.l.bf16 %v306
        %v376 = vunpack.c.l.bf16 %v307
        %v377 = vunpack.c.l.bf16 %v308
        %v378 = vunpack.c.l.bf16 %v309
        %v379 = vunpack.c.l.bf16 %v310
        %v380 = vunpack.c.l.bf16 %v311
        %v381 = vunpack.c.l.bf16 %v312
        %v382 = vunpack.c.l.bf16 %v313
        %v383 = vunpack.c.l.bf16 %v314
        %v384 = vunpack.c.l.bf16 %v315
        %v385 = vunpack.c.l.bf16 %v316
        %v386 = vunpack.c.l.bf16 %v317
        %v387 = vunpack.c.l.bf16 %v318
        %v388 = vunpack.c.l.bf16 %v319
        %v389 = vunpack.c.l.bf16 %v320
        %v390 = vunpack.c.l.bf16 %v321
        %v391 = vunpack.c.l.bf16 %v322
        %v392 = vunpack.c.l.bf16 %v323
        %v393 = vunpack.c.l.bf16 %v324
        %v394 = vunpack.c.l.bf16 %v325
        %v395 = vunpack.c.l.bf16 %v326
        %v396 = vunpack.c.l.bf16 %v327
        %v397 = vunpack.c.l.bf16 %v328
        %v398 = vunpack.c.l.bf16 %v329
        %v399 = vunpack.c.l.bf16 %v330
        %v400 = vunpack.c.l.bf16 %v331
        %401 = vmatprep.subr.mxu0 0.0
        %402 = vmatpush1.msra.mxu0 %v369
        %403 = vmatprep.subr.mxu0 0.0
        %404 = vmatpush1.msra.mxu0 %v370
        %405 = vmatprep.subr.mxu0 0.0
        %406 = vmatpush1.msra.mxu0 %v371
        %407 = vmatprep.subr.mxu0 0.0
        %408 = vmatpush1.msra.mxu0 %v372
        %409 = vmatprep.subr.mxu0 0.0
        %410 = vmatpush1.msra.mxu0 %v373
        %411 = vmatprep.subr.mxu0 0.0
        %412 = vmatpush1.msra.mxu0 %v374
        %413 = vmatprep.subr.mxu0 0.0
        %414 = vmatpush1.msra.mxu0 %v375
        %415 = vmatprep.subr.mxu0 0.0
        %416 = vmatpush1.msra.mxu0 %v376
        %417 = vmatprep.subr.mxu0 0.0
        %418 = vmatpush1.msra.mxu0 %v377
        %419 = vmatprep.subr.mxu0 0.0
        %420 = vmatpush1.msra.mxu0 %v378
        %421 = vmatprep.subr.mxu0 0.0
        %422 = vmatpush1.msra.mxu0 %v379
        %423 = vmatprep.subr.mxu0 0.0
        %424 = vmatpush1.msra.mxu0 %v380
        %425 = vmatprep.subr.mxu0 0.0
        %426 = vmatpush1.msra.mxu0 %v381
        %427 = vmatprep.subr.mxu0 0.0
        %428 = vmatpush1.msra.mxu0 %v382
        %429 = vmatprep.subr.mxu0 0.0
        %430 = vmatpush1.msra.mxu0 %v383
        %431 = vmatprep.subr.mxu0 0.0
        %432 = vmatpush1.msra.mxu0 %v384
        %433 = vmatprep.subr.mxu0 0.0
        %434 = vmatpush1.msra.mxu0 %v385
        %435 = vmatprep.subr.mxu0 0.0
        %436 = vmatpush1.msra.mxu0 %v386
        %437 = vmatprep.subr.mxu0 0.0
        %438 = vmatpush1.msra.mxu0 %v387
        %439 = vmatprep.subr.mxu0 0.0
        %440 = vmatpush1.msra.mxu0 %v388
        %441 = vmatprep.subr.mxu0 0.0
        %442 = vmatpush1.msra.mxu0 %v389
        %443 = vmatprep.subr.mxu0 0.0
        %444 = vmatpush1.msra.mxu0 %v390
        %445 = vmatprep.subr.mxu0 0.0
        %446 = vmatpush1.msra.mxu0 %v391
        %447 = vmatprep.subr.mxu0 0.0
        %448 = vmatpush1.msra.mxu0 %v392
        %449 = vmatprep.subr.mxu0 0.0
        %450 = vmatpush1.msra.mxu0 %v393
        %451 = vmatprep.subr.mxu0 0.0
        %452 = vmatpush1.msra.mxu0 %v394
        %453 = vmatprep.subr.mxu0 0.0
        %454 = vmatpush1.msra.mxu0 %v395
        %455 = vmatprep.subr.mxu0 0.0
        %456 = vmatpush1.msra.mxu0 %v396
        %457 = vmatprep.subr.mxu0 0.0
        %458 = vmatpush1.msra.mxu0 %v397
        %459 = vmatprep.subr.mxu0 0.0
        %460 = vmatpush1.msra.mxu0 %v398
        %461 = vmatprep.subr.mxu0 0.0
        %462 = vmatpush1.msra.mxu0 %v399
        %463 = vmatprep.subr.mxu0 0.0
        %464 = vmatpush1.msra.mxu0 %v400
        %465 = vmatprep.mubr.f32.mxu0 %v368
        %466 = vmatmul.mubr.f32.gmra.mrb[0].mxu0 %v367
        %v467 = vpop.f32.mrb[0].mxu0
        %v468 = vadd.f32 0.0, %v467
        %v469 = vpop.f32.mrb[0].mxu0
        %470 = vdwg.mxu0
        %v471 = vmul.f32 %v369, %v369
        %v472 = vmul.f32 %v370, %v370
        %v473 = vmul.f32 %v371, %v371
        %v474 = vmul.f32 %v372, %v372
        %v475 = vmul.f32 %v373, %v373
        %v476 = vmul.f32 %v374, %v374
        %v477 = vmul.f32 %v375, %v375
        %v478 = vmul.f32 %v376, %v376
        %v479 = vmul.f32 %v377, %v377
        %v480 = vmul.f32 %v378, %v378
        %v481 = vmul.f32 %v379, %v379
        %v482 = vmul.f32 %v380, %v380
        %v483 = vmul.f32 %v381, %v381
        %v484 = vmul.f32 %v382, %v382
        %v485 = vmul.f32 %v383, %v383
        %v486 = vmul.f32 %v384, %v384
        %v487 = vmul.f32 %v385, %v385
        %v488 = vmul.f32 %v386, %v386
        %v489 = vmul.f32 %v387, %v387
        %v490 = vmul.f32 %v388, %v388
        %v491 = vmul.f32 %v389, %v389
        %v492 = vmul.f32 %v390, %v390
        %v493 = vmul.f32 %v391, %v391
        %v494 = vmul.f32 %v392, %v392
        %v495 = vmul.f32 %v393, %v393
        %v496 = vmul.f32 %v394, %v394
        %v497 = vmul.f32 %v395, %v395
        %v498 = vmul.f32 %v396, %v396
        %v499 = vmul.f32 %v397, %v397
        %v500 = vmul.f32 %v398, %v398
        %v501 = vmul.f32 %v399, %v399
        %v502 = vmul.f32 %v400, %v400
        %503 = vmatprep.subr.mxu0 0.0
        %504 = vmatpush1.msra.mxu0 %v471
        %505 = vmatprep.subr.mxu0 0.0
        %506 = vmatpush1.msra.mxu0 %v472
        %507 = vmatprep.subr.mxu0 0.0
        %508 = vmatpush1.msra.mxu0 %v473
        %509 = vmatprep.subr.mxu0 0.0
        %510 = vmatpush1.msra.mxu0 %v474
        %511 = vmatprep.subr.mxu0 0.0
        %512 = vmatpush1.msra.mxu0 %v475
        %513 = vmatprep.subr.mxu0 0.0
        %514 = vmatpush1.msra.mxu0 %v476
        %515 = vmatprep.subr.mxu0 0.0
        %516 = vmatpush1.msra.mxu0 %v477
        %517 = vmatprep.subr.mxu0 0.0
        %518 = vmatpush1.msra.mxu0 %v478
        %519 = vmatprep.subr.mxu0 0.0
        %520 = vmatpush1.msra.mxu0 %v479
        %521 = vmatprep.subr.mxu0 0.0
        %522 = vmatpush1.msra.mxu0 %v480
        %523 = vmatprep.subr.mxu0 0.0
        %524 = vmatpush1.msra.mxu0 %v481
        %525 = vmatprep.subr.mxu0 0.0
        %526 = vmatpush1.msra.mxu0 %v482
        %527 = vmatprep.subr.mxu0 0.0
        %528 = vmatpush1.msra.mxu0 %v483
        %529 = vmatprep.subr.mxu0 0.0
        %530 = vmatpush1.msra.mxu0 %v484
        %531 = vmatprep.subr.mxu0 0.0
        %532 = vmatpush1.msra.mxu0 %v485
        %533 = vmatprep.subr.mxu0 0.0
        %534 = vmatpush1.msra.mxu0 %v486
        %535 = vmatprep.subr.mxu0 0.0
        %536 = vmatpush1.msra.mxu0 %v487
        %537 = vmatprep.subr.mxu0 0.0
        %538 = vmatpush1.msra.mxu0 %v488
        %539 = vmatprep.subr.mxu0 0.0
        %540 = vmatpush1.msra.mxu0 %v489
        %541 = vmatprep.subr.mxu0 0.0
        %542 = vmatpush1.msra.mxu0 %v490
        %543 = vmatprep.subr.mxu0 0.0
        %544 = vmatpush1.msra.mxu0 %v491
        %545 = vmatprep.subr.mxu0 0.0
        %546 = vmatpush1.msra.mxu0 %v492
        %547 = vmatprep.subr.mxu0 0.0
        %548 = vmatpush1.msra.mxu0 %v493
        %549 = vmatprep.subr.mxu0 0.0
        %550 = vmatpush1.msra.mxu0 %v494
        %551 = vmatprep.subr.mxu0 0.0
        %552 = vmatpush1.msra.mxu0 %v495
        %553 = vmatprep.subr.mxu0 0.0
        %554 = vmatpush1.msra.mxu0 %v496
        %555 = vmatprep.subr.mxu0 0.0
        %556 = vmatpush1.msra.mxu0 %v497
        %557 = vmatprep.subr.mxu0 0.0
        %558 = vmatpush1.msra.mxu0 %v498
        %559 = vmatprep.subr.mxu0 0.0
        %560 = vmatpush1.msra.mxu0 %v499
        %561 = vmatprep.subr.mxu0 0.0
        %562 = vmatpush1.msra.mxu0 %v500
        %563 = vmatprep.subr.mxu0 0.0
        %564 = vmatpush1.msra.mxu0 %v501
        %565 = vmatprep.subr.mxu0 0.0
        %566 = vmatpush1.msra.mxu0 %v502
        %567 = vmatprep.mubr.f32.mxu0 %v368
        %568 = vmatmul.mubr.f32.gmra.mrb[0].mxu0 %v367
        %v569 = vpop.f32.mrb[0].mxu0
        %v570 = vadd.f32 0.0, %v569
        %v571 = vpop.f32.mrb[0].mxu0
        %572 = vdwg.mxu0
        %573 = vmatprep.subr.mxu0 0.0
        %574 = vmatpush1.msra.mxu0 %v332
        %575 = vmatprep.subr.mxu0 0.0
        %576 = vmatpush1.msra.mxu0 %v333
        %577 = vmatprep.subr.mxu0 0.0
        %578 = vmatpush1.msra.mxu0 %v334
        %579 = vmatprep.subr.mxu0 0.0
        %580 = vmatpush1.msra.mxu0 %v335
        %581 = vmatprep.subr.mxu0 0.0
        %582 = vmatpush1.msra.mxu0 %v336
        %583 = vmatprep.subr.mxu0 0.0
        %584 = vmatpush1.msra.mxu0 %v337
        %585 = vmatprep.subr.mxu0 0.0
        %586 = vmatpush1.msra.mxu0 %v338
        %587 = vmatprep.subr.mxu0 0.0
        %588 = vmatpush1.msra.mxu0 %v339
        %589 = vmatprep.subr.mxu0 0.0
        %590 = vmatpush1.msra.mxu0 %v340
        %591 = vmatprep.subr.mxu0 0.0
        %592 = vmatpush1.msra.mxu0 %v341
        %593 = vmatprep.subr.mxu0 0.0
        %594 = vmatpush1.msra.mxu0 %v342
        %595 = vmatprep.subr.mxu0 0.0
        %596 = vmatpush1.msra.mxu0 %v343
        %597 = vmatprep.subr.mxu0 0.0
        %598 = vmatpush1.msra.mxu0 %v344
        %599 = vmatprep.subr.mxu0 0.0
        %600 = vmatpush1.msra.mxu0 %v345
        %601 = vmatprep.subr.mxu0 0.0
        %602 = vmatpush1.msra.mxu0 %v346
        %603 = vmatprep.subr.mxu0 0.0
        %604 = vmatpush1.msra.mxu0 %v347
        %605 = vmatprep.subr.mxu0 0.0
        %606 = vmatpush1.msra.mxu0 0.0
        %607 = vmatprep.subr.mxu0 0.0
        %608 = vmatpush1.msra.mxu0 0.0
        %609 = vmatprep.subr.mxu0 0.0
        %610 = vmatpush1.msra.mxu0 0.0
        %611 = vmatprep.subr.mxu0 0.0
        %612 = vmatpush1.msra.mxu0 0.0
        %613 = vmatprep.subr.mxu0 0.0
        %614 = vmatpush1.msra.mxu0 0.0
        %615 = vmatprep.subr.mxu0 0.0
        %616 = vmatpush1.msra.mxu0 0.0
        %617 = vmatprep.subr.mxu0 0.0
        %618 = vmatpush1.msra.mxu0 0.0
        %619 = vmatprep.subr.mxu0 0.0
        %620 = vmatpush1.msra.mxu0 0.0
        %621 = vmatprep.subr.mxu0 0.0
        %622 = vmatpush1.msra.mxu0 0.0
        %623 = vmatprep.subr.mxu0 0.0
        %624 = vmatpush1.msra.mxu0 0.0
        %625 = vmatprep.subr.mxu0 0.0
        %626 = vmatpush1.msra.mxu0 0.0
        %627 = vmatprep.subr.mxu0 0.0
        %628 = vmatpush1.msra.mxu0 0.0
        %629 = vmatprep.subr.mxu0 0.0
        %630 = vmatpush1.msra.mxu0 0.0
        %631 = vmatprep.subr.mxu0 0.0
        %632 = vmatpush1.msra.mxu0 0.0
        %633 = vmatprep.subr.mxu0 0.0
        %634 = vmatpush1.msra.mxu0 0.0
        %635 = vmatprep.subr.mxu0 0.0
        %636 = vmatpush1.msra.mxu0 0.0
        %637 = vmatprep.mubr.f32.mxu0 0.0
        %638 = vmatmul.mubr.f32.gmra.mrb[0].mxu0 %v468
        %v639 = vpop.f32.mrb[0].mxu0
        %v640 = vadd.f32 0.0, %v639
        %v641 = vpop.f32.mrb[0].mxu0
        %642 = vdwg.mxu0
        %643 = vmatprep.subr.mxu0 0.0
        %644 = vmatpush1.msra.mxu0 %v332
        %645 = vmatprep.subr.mxu0 0.0
        %646 = vmatpush1.msra.mxu0 %v333
        %647 = vmatprep.subr.mxu0 0.0
        %648 = vmatpush1.msra.mxu0 %v334
        %649 = vmatprep.subr.mxu0 0.0
        %650 = vmatpush1.msra.mxu0 %v335
        %651 = vmatprep.subr.mxu0 0.0
        %652 = vmatpush1.msra.mxu0 %v336
        %653 = vmatprep.subr.mxu0 0.0
        %654 = vmatpush1.msra.mxu0 %v337
        %655 = vmatprep.subr.mxu0 0.0
        %656 = vmatpush1.msra.mxu0 %v338
        %657 = vmatprep.subr.mxu0 0.0
        %658 = vmatpush1.msra.mxu0 %v339
        %659 = vmatprep.subr.mxu0 0.0
        %660 = vmatpush1.msra.mxu0 %v340
        %661 = vmatprep.subr.mxu0 0.0
        %662 = vmatpush1.msra.mxu0 %v341
        %663 = vmatprep.subr.mxu0 0.0
        %664 = vmatpush1.msra.mxu0 %v342
        %665 = vmatprep.subr.mxu0 0.0
        %666 = vmatpush1.msra.mxu0 %v343
        %667 = vmatprep.subr.mxu0 0.0
        %668 = vmatpush1.msra.mxu0 %v344
        %669 = vmatprep.subr.mxu0 0.0
        %670 = vmatpush1.msra.mxu0 %v345
        %671 = vmatprep.subr.mxu0 0.0
        %672 = vmatpush1.msra.mxu0 %v346
        %673 = vmatprep.subr.mxu0 0.0
        %674 = vmatpush1.msra.mxu0 %v347
        %675 = vmatprep.subr.mxu0 0.0
        %676 = vmatpush1.msra.mxu0 0.0
        %677 = vmatprep.subr.mxu0 0.0
        %678 = vmatpush1.msra.mxu0 0.0
        %679 = vmatprep.subr.mxu0 0.0
        %680 = vmatpush1.msra.mxu0 0.0
        %681 = vmatprep.subr.mxu0 0.0
        %682 = vmatpush1.msra.mxu0 0.0
        %683 = vmatprep.subr.mxu0 0.0
        %684 = vmatpush1.msra.mxu0 0.0
        %685 = vmatprep.subr.mxu0 0.0
        %686 = vmatpush1.msra.mxu0 0.0
        %687 = vmatprep.subr.mxu0 0.0
        %688 = vmatpush1.msra.mxu0 0.0
        %689 = vmatprep.subr.mxu0 0.0
        %690 = vmatpush1.msra.mxu0 0.0
        %691 = vmatprep.subr.mxu0 0.0
        %692 = vmatpush1.msra.mxu0 0.0
        %693 = vmatprep.subr.mxu0 0.0
        %694 = vmatpush1.msra.mxu0 0.0
        %695 = vmatprep.subr.mxu0 0.0
        %696 = vmatpush1.msra.mxu0 0.0
        %697 = vmatprep.subr.mxu0 0.0
        %698 = vmatpush1.msra.mxu0 0.0
        %699 = vmatprep.subr.mxu0 0.0
        %700 = vmatpush1.msra.mxu0 0.0
        %701 = vmatprep.subr.mxu0 0.0
        %702 = vmatpush1.msra.mxu0 0.0
        %703 = vmatprep.subr.mxu0 0.0
        %704 = vmatpush1.msra.mxu0 0.0
        %705 = vmatprep.subr.mxu0 0.0
        %706 = vmatpush1.msra.mxu0 0.0
        %707 = vmatprep.mubr.f32.mxu0 0.0
        %708 = vmatmul.mubr.f32.gmra.mrb[0].mxu0 %v570
        %v709 = vpop.f32.mrb[0].mxu0
        %v710 = vadd.f32 0.0, %v709
        %v711 = vpop.f32.mrb[0].mxu0
        %712 = vdwg.mxu0
        %v713 = vmul.f32 %v640, %v640
        %v714 = vsub.f32 %v710, %v713
        %v715 = vmax.f32 %v714, 0.0
        %v716 = vadd.f32 %v715, 1e-05
        %v717 = vrsqrt.pop %v716
        %v718 = vld [vmem:[%s2] sm:$0x1]
        %v719 = vmul.f32 %v717, %v718
        %v720 = vld [vmem:[%s3] sm:$0x1]
        %v721 = vmul.f32 %v640, %v719
        %v722 = vsub.f32 %v720, %v721
        %v723 = vlaneseq
        %v724 = vshrl.u32 %v723, 7
        %v725 = vsub.s32 0, %v724
        %v726 = vrot.slane %v719, %v725
        %v727 = vmul.f32 %v369, %v726
        %v728 = vmul.f32 %v370, %v726
        %v729 = vmul.f32 %v371, %v726
        %v730 = vmul.f32 %v372, %v726
        %v731 = vmul.f32 %v373, %v726
        %v732 = vmul.f32 %v374, %v726
        %v733 = vmul.f32 %v375, %v726
        %v734 = vmul.f32 %v376, %v726
        %v735 = vmul.f32 %v377, %v726
        %v736 = vmul.f32 %v378, %v726
        %v737 = vmul.f32 %v379, %v726
        %v738 = vmul.f32 %v380, %v726
        %v739 = vmul.f32 %v381, %v726
        %v740 = vmul.f32 %v382, %v726
        %v741 = vmul.f32 %v383, %v726
        %v742 = vmul.f32 %v384, %v726
        %v743 = vmul.f32 %v385, %v726
        %v744 = vmul.f32 %v386, %v726
        %v745 = vmul.f32 %v387, %v726
        %v746 = vmul.f32 %v388, %v726
        %v747 = vmul.f32 %v389, %v726
        %v748 = vmul.f32 %v390, %v726
        %v749 = vmul.f32 %v391, %v726
        %v750 = vmul.f32 %v392, %v726
        %v751 = vmul.f32 %v393, %v726
        %v752 = vmul.f32 %v394, %v726
        %v753 = vmul.f32 %v395, %v726
        %v754 = vmul.f32 %v396, %v726
        %v755 = vmul.f32 %v397, %v726
        %v756 = vmul.f32 %v398, %v726
        %v757 = vmul.f32 %v399, %v726
        %v758 = vmul.f32 %v400, %v726
        %v760 = vlaneseq
        %v761 = vshrl.u32 %v760, 7
        %v762 = vsub.s32 0, %v761
        %v763 = vrot.slane %v722, %v762
        %v765 = vadd.f32 %v727, %v763
        %v766 = vadd.f32 %v728, %v763
        %v767 = vadd.f32 %v729, %v763
        %v768 = vadd.f32 %v730, %v763
        %v769 = vadd.f32 %v731, %v763
        %v770 = vadd.f32 %v732, %v763
        %v771 = vadd.f32 %v733, %v763
        %v772 = vadd.f32 %v734, %v763
        %v773 = vadd.f32 %v735, %v763
        %v774 = vadd.f32 %v736, %v763
        %v775 = vadd.f32 %v737, %v763
        %v776 = vadd.f32 %v738, %v763
        %v777 = vadd.f32 %v739, %v763
        %v778 = vadd.f32 %v740, %v763
        %v779 = vadd.f32 %v741, %v763
        %v780 = vadd.f32 %v742, %v763
        %v781 = vadd.f32 %v743, %v763
        %v782 = vadd.f32 %v744, %v763
        %v783 = vadd.f32 %v745, %v763
        %v784 = vadd.f32 %v746, %v763
        %v785 = vadd.f32 %v747, %v763
        %v786 = vadd.f32 %v748, %v763
        %v787 = vadd.f32 %v749, %v763
        %v788 = vadd.f32 %v750, %v763
        %v789 = vadd.f32 %v751, %v763
        %v790 = vadd.f32 %v752, %v763
        %v791 = vadd.f32 %v753, %v763
        %v792 = vadd.f32 %v754, %v763
        %v793 = vadd.f32 %v755, %v763
        %v794 = vadd.f32 %v756, %v763
        %v795 = vadd.f32 %v757, %v763
        %v796 = vadd.f32 %v758, %v763
        %v797 = vmul.f32 %v765, 0.5
        %v798 = vmul.f32 %v766, 0.5
        %v799 = vmul.f32 %v767, 0.5
        %v800 = vmul.f32 %v768, 0.5
        %v801 = vmul.f32 %v769, 0.5
        %v802 = vmul.f32 %v770, 0.5
        %v803 = vmul.f32 %v771, 0.5
        %v804 = vmul.f32 %v772, 0.5
        %v805 = vmul.f32 %v773, 0.5
        %v806 = vmul.f32 %v774, 0.5
        %v807 = vmul.f32 %v775, 0.5
        %v808 = vmul.f32 %v776, 0.5
        %v809 = vmul.f32 %v777, 0.5
        %v810 = vmul.f32 %v778, 0.5
        %v811 = vmul.f32 %v779, 0.5
        %v812 = vmul.f32 %v780, 0.5
        %v813 = vmul.f32 %v781, 0.5
        %v814 = vmul.f32 %v782, 0.5
        %v815 = vmul.f32 %v783, 0.5
        %v816 = vmul.f32 %v784, 0.5
        %v817 = vmul.f32 %v785, 0.5
        %v818 = vmul.f32 %v786, 0.5
        %v819 = vmul.f32 %v787, 0.5
        %v820 = vmul.f32 %v788, 0.5
        %v821 = vmul.f32 %v789, 0.5
        %v822 = vmul.f32 %v790, 0.5
        %v823 = vmul.f32 %v791, 0.5
        %v824 = vmul.f32 %v792, 0.5
        %v825 = vmul.f32 %v793, 0.5
        %v826 = vmul.f32 %v794, 0.5
        %v827 = vmul.f32 %v795, 0.5
        %v828 = vmul.f32 %v796, 0.5
        %v829 = vtanh.pop %v797
        %v830 = vtanh.pop %v798
        %v831 = vtanh.pop %v799
        %v832 = vtanh.pop %v800
        %v833 = vtanh.pop %v801
        %v834 = vtanh.pop %v802
        %v835 = vtanh.pop %v803
        %v836 = vtanh.pop %v804
        %v837 = vtanh.pop %v805
        %v838 = vtanh.pop %v806
        %v839 = vtanh.pop %v807
        %v840 = vtanh.pop %v808
        %v841 = vtanh.pop %v809
        %v842 = vtanh.pop %v810
        %v843 = vtanh.pop %v811
        %v844 = vtanh.pop %v812
        %v845 = vtanh.pop %v813
        %v846 = vtanh.pop %v814
        %v847 = vtanh.pop %v815
        %v848 = vtanh.pop %v816
        %v849 = vtanh.pop %v817
        %v850 = vtanh.pop %v818
        %v851 = vtanh.pop %v819
        %v852 = vtanh.pop %v820
        %v853 = vtanh.pop %v821
        %v854 = vtanh.pop %v822
        %v855 = vtanh.pop %v823
        %v856 = vtanh.pop %v824
        %v857 = vtanh.pop %v825
        %v858 = vtanh.pop %v826
        %v859 = vtanh.pop %v827
        %v860 = vtanh.pop %v828
        %v861 = vadd.f32 %v829, 1.0
        %v862 = vadd.f32 %v830, 1.0
        %v863 = vadd.f32 %v831, 1.0
        %v864 = vadd.f32 %v832, 1.0
        %v865 = vadd.f32 %v833, 1.0
        %v866 = vadd.f32 %v834, 1.0
        %v867 = vadd.f32 %v835, 1.0
        %v868 = vadd.f32 %v836, 1.0
        %v869 = vadd.f32 %v837, 1.0
        %v870 = vadd.f32 %v838, 1.0
        %v871 = vadd.f32 %v839, 1.0
        %v872 = vadd.f32 %v840, 1.0
        %v873 = vadd.f32 %v841, 1.0
        %v874 = vadd.f32 %v842, 1.0
        %v875 = vadd.f32 %v843, 1.0
        %v876 = vadd.f32 %v844, 1.0
        %v877 = vadd.f32 %v845, 1.0
        %v878 = vadd.f32 %v846, 1.0
        %v879 = vadd.f32 %v847, 1.0
        %v880 = vadd.f32 %v848, 1.0
        %v881 = vadd.f32 %v849, 1.0
        %v882 = vadd.f32 %v850, 1.0
        %v883 = vadd.f32 %v851, 1.0
        %v884 = vadd.f32 %v852, 1.0
        %v885 = vadd.f32 %v853, 1.0
        %v886 = vadd.f32 %v854, 1.0
        %v887 = vadd.f32 %v855, 1.0
        %v888 = vadd.f32 %v856, 1.0
        %v889 = vadd.f32 %v857, 1.0
        %v890 = vadd.f32 %v858, 1.0
        %v891 = vadd.f32 %v859, 1.0
        %v892 = vadd.f32 %v860, 1.0
        %v893 = vmul.f32 %v861, 0.5
        %v894 = vmul.f32 %v862, 0.5
        %v895 = vmul.f32 %v863, 0.5
        %v896 = vmul.f32 %v864, 0.5
        %v897 = vmul.f32 %v865, 0.5
        %v898 = vmul.f32 %v866, 0.5
        %v899 = vmul.f32 %v867, 0.5
        %v900 = vmul.f32 %v868, 0.5
        %v901 = vmul.f32 %v869, 0.5
        %v902 = vmul.f32 %v870, 0.5
        %v903 = vmul.f32 %v871, 0.5
        %v904 = vmul.f32 %v872, 0.5
        %v905 = vmul.f32 %v873, 0.5
        %v906 = vmul.f32 %v874, 0.5
        %v907 = vmul.f32 %v875, 0.5
        %v908 = vmul.f32 %v876, 0.5
        %v909 = vmul.f32 %v877, 0.5
        %v910 = vmul.f32 %v878, 0.5
        %v911 = vmul.f32 %v879, 0.5
        %v912 = vmul.f32 %v880, 0.5
        %v913 = vmul.f32 %v881, 0.5
        %v914 = vmul.f32 %v882, 0.5
        %v915 = vmul.f32 %v883, 0.5
        %v916 = vmul.f32 %v884, 0.5
        %v917 = vmul.f32 %v885, 0.5
        %v918 = vmul.f32 %v886, 0.5
        %v919 = vmul.f32 %v887, 0.5
        %v920 = vmul.f32 %v888, 0.5
        %v921 = vmul.f32 %v889, 0.5
        %v922 = vmul.f32 %v890, 0.5
        %v923 = vmul.f32 %v891, 0.5
        %v924 = vmul.f32 %v892, 0.5
        %v925 = vmul.f32 %v765, %v893
        %v926 = vmul.f32 %v766, %v894
        %v927 = vmul.f32 %v767, %v895
        %v928 = vmul.f32 %v768, %v896
        %v929 = vmul.f32 %v769, %v897
        %v930 = vmul.f32 %v770, %v898
        %v931 = vmul.f32 %v771, %v899
        %v932 = vmul.f32 %v772, %v900
        %v933 = vmul.f32 %v773, %v901
        %v934 = vmul.f32 %v774, %v902
        %v935 = vmul.f32 %v775, %v903
        %v936 = vmul.f32 %v776, %v904
        %v937 = vmul.f32 %v777, %v905
        %v938 = vmul.f32 %v778, %v906
        %v939 = vmul.f32 %v779, %v907
        %v940 = vmul.f32 %v780, %v908
        %v941 = vmul.f32 %v781, %v909
        %v942 = vmul.f32 %v782, %v910
        %v943 = vmul.f32 %v783, %v911
        %v944 = vmul.f32 %v784, %v912
        %v945 = vmul.f32 %v785, %v913
        %v946 = vmul.f32 %v786, %v914
        %v947 = vmul.f32 %v787, %v915
        %v948 = vmul.f32 %v788, %v916
        %v949 = vmul.f32 %v789, %v917
        %v950 = vmul.f32 %v790, %v918
        %v951 = vmul.f32 %v791, %v919
        %v952 = vmul.f32 %v792, %v920
        %v953 = vmul.f32 %v793, %v921
        %v954 = vmul.f32 %v794, %v922
        %v955 = vmul.f32 %v795, %v923
        %v956 = vmul.f32 %v796, %v924
        %v957 = vpack.c.bf16 %v926, %v925
        %v958 = vpack.c.bf16 %v928, %v927
        %v959 = vpack.c.bf16 %v930, %v929
        %v960 = vpack.c.bf16 %v932, %v931
        %v961 = vpack.c.bf16 %v934, %v933
        %v962 = vpack.c.bf16 %v936, %v935
        %v963 = vpack.c.bf16 %v938, %v937
        %v964 = vpack.c.bf16 %v940, %v939
        %v965 = vpack.c.bf16 %v942, %v941
        %v966 = vpack.c.bf16 %v944, %v943
        %v967 = vpack.c.bf16 %v946, %v945
        %v968 = vpack.c.bf16 %v948, %v947
        %v969 = vpack.c.bf16 %v950, %v949
        %v970 = vpack.c.bf16 %v952, %v951
        %v971 = vpack.c.bf16 %v954, %v953
        %v972 = vpack.c.bf16 %v956, %v955
        %v973 = vld [vmem:[#allocation7] sm:$0xf]
        %v974 = vld [vmem:[#allocation7 + $0x4] sm:$0xf]
        %v975 = vld [vmem:[#allocation7 + $0x8] sm:$0xf]
        %v976 = vld [vmem:[#allocation7 + $0xc] sm:$0xf]
        %v977 = vld [vmem:[#allocation7 + $0x10] sm:$0xf]
        %v978 = vld [vmem:[#allocation7 + $0x14] sm:$0xf]
        %v979 = vld [vmem:[#allocation7 + $0x18] sm:$0xf]
        %v980 = vld [vmem:[#allocation7 + $0x1c] sm:$0xf]
        %v981 = vld [vmem:[#allocation7 + $0x20] sm:$0xf]
        %v982 = vld [vmem:[#allocation7 + $0x24] sm:$0xf]
        %v983 = vld [vmem:[#allocation7 + $0x28] sm:$0xf]
        %v984 = vld [vmem:[#allocation7 + $0x2c] sm:$0xf]
        %v985 = vld [vmem:[#allocation7 + $0x30] sm:$0xf]
        %v986 = vld [vmem:[#allocation7 + $0x34] sm:$0xf]
        %v987 = vld [vmem:[#allocation7 + $0x38] sm:$0xf]
        %v988 = vld [vmem:[#allocation7 + $0x3c] sm:$0xf]
        %v989 = vld [vmem:[#allocation7 + $0x40] sm:$0xf]
        %v990 = vld [vmem:[#allocation7 + $0x44] sm:$0xf]
        %v991 = vld [vmem:[#allocation7 + $0x48] sm:$0xf]
        %v992 = vld [vmem:[#allocation7 + $0x4c] sm:$0xf]
        %v993 = vld [vmem:[#allocation7 + $0x50] sm:$0xf]
        %v994 = vld [vmem:[#allocation7 + $0x54] sm:$0xf]
        %v995 = vld [vmem:[#allocation7 + $0x58] sm:$0xf]
        %v996 = vld [vmem:[#allocation7 + $0x5c] sm:$0xf]
        %v997 = vld [vmem:[#allocation7 + $0x60] sm:$0xf]
        %v998 = vld [vmem:[#allocation7 + $0x64] sm:$0xf]
        %v999 = vld [vmem:[#allocation7 + $0x68] sm:$0xf]
        %v1000 = vld [vmem:[#allocation7 + $0x6c] sm:$0xf]
        %v1001 = vld [vmem:[#allocation7 + $0x70] sm:$0xf]
        %v1002 = vld [vmem:[#allocation7 + $0x74] sm:$0xf]
        %v1003 = vld [vmem:[#allocation7 + $0x78] sm:$0xf]
        %v1004 = vld [vmem:[#allocation7 + $0x7c] sm:$0xf]
        %v1005 = vld [vmem:[#allocation7 + $0x80] sm:$0xf]
        %v1006 = vld [vmem:[#allocation7 + $0x84] sm:$0xf]
        %v1007 = vld [vmem:[#allocation7 + $0x88] sm:$0xf]
        %v1008 = vld [vmem:[#allocation7 + $0x8c] sm:$0xf]
        %v1009 = vld [vmem:[#allocation7 + $0x90] sm:$0xf]
        %v1010 = vld [vmem:[#allocation7 + $0x94] sm:$0xf]
        %v1011 = vld [vmem:[#allocation7 + $0x98] sm:$0xf]
        %v1012 = vld [vmem:[#allocation7 + $0x9c] sm:$0xf]
        %v1013 = vld [vmem:[#allocation7 + $0xa0] sm:$0xf]
        %v1014 = vld [vmem:[#allocation7 + $0xa4] sm:$0xf]
        %v1015 = vld [vmem:[#allocation7 + $0xa8] sm:$0xf]
        %v1016 = vld [vmem:[#allocation7 + $0xac] sm:$0xf]
        %v1017 = vld [vmem:[#allocation7 + $0xb0] sm:$0xf]
        %v1018 = vld [vmem:[#allocation7 + $0xb4] sm:$0xf]
        %v1019 = vld [vmem:[#allocation7 + $0xb8] sm:$0xf]
        %v1020 = vld [vmem:[#allocation7 + $0xbc] sm:$0xf]
        %v1021 = vld [vmem:[%s5] sm:$0x1]
        %v1023 = vlaneseq
        %v1024 = vshrl.u32 %v1023, 7
        %v1025 = vsub.s32 0, %v1024
        %v1026 = vrot.slane %v1021, %v1025
        %v1076 = vunpack.c.l.b16 %v973
        %v1077 = vunpack.c.l.b16 %v974
        %v1078 = vunpack.c.l.b16 %v975
        %v1079 = vunpack.c.l.b16 %v976
        %v1080 = vunpack.c.l.b16 %v977
        %v1081 = vunpack.c.l.b16 %v978
        %v1082 = vunpack.c.l.b16 %v979
        %v1083 = vunpack.c.l.b16 %v980
        %v1084 = vunpack.c.l.b16 %v981
        %v1085 = vunpack.c.l.b16 %v982
        %v1086 = vunpack.c.l.b16 %v983
        %v1087 = vunpack.c.l.b16 %v984
        %v1088 = vunpack.c.l.b16 %v985
        %v1089 = vunpack.c.l.b16 %v986
        %v1090 = vunpack.c.l.b16 %v987
        %v1091 = vunpack.c.l.b16 %v988
        %v1092 = vunpack.c.l.b16 %v989
        %v1093 = vunpack.c.l.b16 %v990
        %v1094 = vunpack.c.l.b16 %v991
        %v1095 = vunpack.c.l.b16 %v992
        %v1096 = vunpack.c.l.b16 %v993
        %v1097 = vunpack.c.l.b16 %v994
        %v1098 = vunpack.c.l.b16 %v995
        %v1099 = vunpack.c.l.b16 %v996
        %v1100 = vunpack.c.l.b16 %v997
        %v1101 = vunpack.c.l.b16 %v998
        %v1102 = vunpack.c.l.b16 %v999
        %v1103 = vunpack.c.l.b16 %v1000
        %v1104 = vunpack.c.l.b16 %v1001
        %v1105 = vunpack.c.l.b16 %v1002
        %v1106 = vunpack.c.l.b16 %v1003
        %v1107 = vunpack.c.l.b16 %v1004
        %v1108 = vunpack.c.l.b16 %v1005
        %v1109 = vunpack.c.l.b16 %v1006
        %v1110 = vunpack.c.l.b16 %v1007
        %v1111 = vunpack.c.l.b16 %v1008
        %v1112 = vunpack.c.l.b16 %v1009
        %v1113 = vunpack.c.l.b16 %v1010
        %v1114 = vunpack.c.l.b16 %v1011
        %v1115 = vunpack.c.l.b16 %v1012
        %v1116 = vunpack.c.l.b16 %v1013
        %v1117 = vunpack.c.l.b16 %v1014
        %v1118 = vunpack.c.l.b16 %v1015
        %v1119 = vunpack.c.l.b16 %v1016
        %v1120 = vunpack.c.l.b16 %v1017
        %v1121 = vunpack.c.l.b16 %v1018
        %v1122 = vunpack.c.l.b16 %v1019
        %v1123 = vunpack.c.l.b16 %v1020
        %v1124 = vpack.c.b16 %v1077, %v1076
        %v1125 = vpack.c.b16 %v1079, %v1078
        %v1126 = vpack.c.b16 %v1081, %v1080
        %v1127 = vpack.c.b16 %v1083, %v1082
        %v1128 = vpack.c.b16 %v1085, %v1084
        %v1129 = vpack.c.b16 %v1087, %v1086
        %v1130 = vpack.c.b16 %v1089, %v1088
        %v1131 = vpack.c.b16 %v1091, %v1090
        %v1132 = vpack.c.b16 %v1093, %v1092
        %v1133 = vpack.c.b16 %v1095, %v1094
        %v1134 = vpack.c.b16 %v1097, %v1096
        %v1135 = vpack.c.b16 %v1099, %v1098
        %v1136 = vpack.c.b16 %v1101, %v1100
        %v1137 = vpack.c.b16 %v1103, %v1102
        %v1138 = vpack.c.b16 %v1105, %v1104
        %v1139 = vpack.c.b16 %v1107, %v1106
        %v1140 = vpack.c.b16 %v1109, %v1108
        %v1141 = vpack.c.b16 %v1111, %v1110
        %v1142 = vpack.c.b16 %v1113, %v1112
        %v1143 = vpack.c.b16 %v1115, %v1114
        %v1144 = vpack.c.b16 %v1117, %v1116
        %v1145 = vpack.c.b16 %v1119, %v1118
        %v1146 = vpack.c.b16 %v1121, %v1120
        %v1147 = vpack.c.b16 %v1123, %v1122
        %1172 = vmatprep.subr.bf16.mxu0 0
        %1173 = vmatpush1.bf16.msra.mxu0 %v1124
        %1174 = vmatprep.subr.bf16.mxu0 0
        %1175 = vmatpush1.bf16.msra.mxu0 %v1125
        %1176 = vmatprep.subr.bf16.mxu0 0
        %1177 = vmatpush1.bf16.msra.mxu0 %v1126
        %1178 = vmatprep.subr.bf16.mxu0 0
        %1179 = vmatpush1.bf16.msra.mxu0 %v1127
        %1180 = vmatprep.subr.bf16.mxu0 0
        %1181 = vmatpush1.bf16.msra.mxu0 %v1128
        %1182 = vmatprep.subr.bf16.mxu0 0
        %1183 = vmatpush1.bf16.msra.mxu0 %v1129
        %1184 = vmatprep.subr.bf16.mxu0 0
        %1185 = vmatpush1.bf16.msra.mxu0 %v1130
        %1186 = vmatprep.subr.bf16.mxu0 0
        %1187 = vmatpush1.bf16.msra.mxu0 %v1131
        %1188 = vmatprep.subr.bf16.mxu0 0
        %1189 = vmatpush1.bf16.msra.mxu0 %v1132
        %1190 = vmatprep.subr.bf16.mxu0 0
        %1191 = vmatpush1.bf16.msra.mxu0 %v1133
        %1192 = vmatprep.subr.bf16.mxu0 0
        %1193 = vmatpush1.bf16.msra.mxu0 %v1134
        %1194 = vmatprep.subr.bf16.mxu0 0
        %1195 = vmatpush1.bf16.msra.mxu0 %v1135
        %1196 = vmatprep.subr.bf16.mxu0 0
        %1197 = vmatpush1.bf16.msra.mxu0 %v1136
        %1198 = vmatprep.subr.bf16.mxu0 0
        %1199 = vmatpush1.bf16.msra.mxu0 %v1137
        %1200 = vmatprep.subr.bf16.mxu0 0
        %1201 = vmatpush1.bf16.msra.mxu0 %v1138
        %1202 = vmatprep.subr.bf16.mxu0 0
        %1203 = vmatpush1.bf16.msra.mxu0 %v1139
        %1204 = vmatprep.mubr.bf16.mxu0 %v957
        %1205 = vmatmul.mubr.bf16.gmra.mrb[0].mxu0 %v957
        %v1206 = vpop.f32.mrb[0].mxu0
        %v1207 = vadd.f32 %v1026, %v1206
        %v1208 = vpop.f32.mrb[0].mxu0
        %v1209 = vpop.f32.mrb[0].mxu0
        %v1210 = vadd.f32 %v1026, %v1209
        %v1211 = vpop.f32.mrb[0].mxu0
        %1212 = vmatprep.mubr.bf16.mxu0 %v958
        %1213 = vmatmul.mubr.bf16.gmra.mrb[0].mxu0 %v958
        %v1214 = vpop.f32.mrb[0].mxu0
        %v1215 = vadd.f32 %v1026, %v1214
        %v1216 = vpop.f32.mrb[0].mxu0
        %v1217 = vpop.f32.mrb[0].mxu0
        %v1218 = vadd.f32 %v1026, %v1217
        %v1219 = vpop.f32.mrb[0].mxu0
        %1220 = vmatprep.mubr.bf16.mxu0 %v959
        %1221 = vmatmul.mubr.bf16.gmra.mrb[0].mxu0 %v959
        %v1222 = vpop.f32.mrb[0].mxu0
        %v1223 = vadd.f32 %v1026, %v1222
        %v1224 = vpop.f32.mrb[0].mxu0
        %v1225 = vpop.f32.mrb[0].mxu0
        %v1226 = vadd.f32 %v1026, %v1225
        %v1227 = vpop.f32.mrb[0].mxu0
        %1228 = vmatprep.mubr.bf16.mxu0 %v960
        %1229 = vmatmul.mubr.bf16.gmra.mrb[0].mxu0 %v960
        %v1230 = vpop.f32.mrb[0].mxu0
        %v1231 = vadd.f32 %v1026, %v1230
        %v1232 = vpop.f32.mrb[0].mxu0
        %v1233 = vpop.f32.mrb[0].mxu0
        %v1234 = vadd.f32 %v1026, %v1233
        %v1235 = vpop.f32.mrb[0].mxu0
        %1236 = vmatprep.mubr.bf16.mxu0 %v961
        %1237 = vmatmul.mubr.bf16.gmra.mrb[0].mxu0 %v957
        %v1238 = vpop.f32.mrb[0].mxu0
        %v1239 = vadd.f32 %v1026, %v1238
        %v1240 = vpop.f32.mrb[0].mxu0
        %v1241 = vpop.f32.mrb[0].mxu0
        %v1242 = vadd.f32 %v1026, %v1241
        %v1243 = vpop.f32.mrb[0].mxu0
        %1244 = vmatprep.mubr.bf16.mxu0 %v962
        %1245 = vmatmul.mubr.bf16.gmra.mrb[0].mxu0 %v958
        %v1246 = vpop.f32.mrb[0].mxu0
        %v1247 = vadd.f32 %v1026, %v1246
        %v1248 = vpop.f32.mrb[0].mxu0
        %v1249 = vpop.f32.mrb[0].mxu0
        %v1250 = vadd.f32 %v1026, %v1249
        %v1251 = vpop.f32.mrb[0].mxu0
        %1252 = vmatprep.mubr.bf16.mxu0 %v963
        %1253 = vmatmul.mubr.bf16.gmra.mrb[0].mxu0 %v959
        %v1254 = vpop.f32.mrb[0].mxu0
        %v1255 = vadd.f32 %v1026, %v1254
        %v1256 = vpop.f32.mrb[0].mxu0
        %v1257 = vpop.f32.mrb[0].mxu0
        %v1258 = vadd.f32 %v1026, %v1257
        %v1259 = vpop.f32.mrb[0].mxu0
        %1260 = vmatprep.mubr.bf16.mxu0 %v964
        %1261 = vmatmul.mubr.bf16.gmra.mrb[0].mxu0 %v960
        %v1262 = vpop.f32.mrb[0].mxu0
        %v1263 = vadd.f32 %v1026, %v1262
        %v1264 = vpop.f32.mrb[0].mxu0
        %v1265 = vpop.f32.mrb[0].mxu0
        %v1266 = vadd.f32 %v1026, %v1265
        %v1267 = vpop.f32.mrb[0].mxu0
        %1268 = vmatprep.mubr.bf16.mxu0 %v965
        %1269 = vmatmul.mubr.bf16.gmra.mrb[0].mxu0 %v961
        %v1270 = vpop.f32.mrb[0].mxu0
        %v1271 = vadd.f32 %v1026, %v1270
        %v1272 = vpop.f32.mrb[0].mxu0
        %v1273 = vpop.f32.mrb[0].mxu0
        %v1274 = vadd.f32 %v1026, %v1273
        %v1275 = vpop.f32.mrb[0].mxu0
        %1276 = vmatprep.mubr.bf16.mxu0 %v966
        %1277 = vmatmul.mubr.bf16.gmra.mrb[0].mxu0 %v962
        %v1278 = vpop.f32.mrb[0].mxu0
        %v1279 = vadd.f32 %v1026, %v1278
        %v1280 = vpop.f32.mrb[0].mxu0
        %v1281 = vpop.f32.mrb[0].mxu0
        %v1282 = vadd.f32 %v1026, %v1281
        %v1283 = vpop.f32.mrb[0].mxu0
        %1284 = vmatprep.mubr.bf16.mxu0 %v967
        %1285 = vmatmul.mubr.bf16.gmra.mrb[0].mxu0 %v963
        %v1286 = vpop.f32.mrb[0].mxu0
        %v1287 = vadd.f32 %v1026, %v1286
        %v1288 = vpop.f32.mrb[0].mxu0
        %v1289 = vpop.f32.mrb[0].mxu0
        %v1290 = vadd.f32 %v1026, %v1289
        %v1291 = vpop.f32.mrb[0].mxu0
        %1292 = vmatprep.mubr.bf16.mxu0 %v968
        %1293 = vmatmul.mubr.bf16.gmra.mrb[0].mxu0 %v964
        %v1294 = vpop.f32.mrb[0].mxu0
        %v1295 = vadd.f32 %v1026, %v1294
        %v1296 = vpop.f32.mrb[0].mxu0
        %v1297 = vpop.f32.mrb[0].mxu0
        %v1298 = vadd.f32 %v1026, %v1297
        %v1299 = vpop.f32.mrb[0].mxu0
        %1300 = vmatprep.mubr.bf16.mxu0 %v969
        %1301 = vmatmul.mubr.bf16.gmra.mrb[0].mxu0 %v965
        %v1302 = vpop.f32.mrb[0].mxu0
        %v1303 = vadd.f32 %v1026, %v1302
        %v1304 = vpop.f32.mrb[0].mxu0
        %v1305 = vpop.f32.mrb[0].mxu0
        %v1306 = vadd.f32 %v1026, %v1305
        %v1307 = vpop.f32.mrb[0].mxu0
        %1308 = vmatprep.mubr.bf16.mxu0 %v970
        %1309 = vmatmul.mubr.bf16.gmra.mrb[0].mxu0 %v966
        %v1310 = vpop.f32.mrb[0].mxu0
        %v1311 = vadd.f32 %v1026, %v1310
        %v1312 = vpop.f32.mrb[0].mxu0
        %v1313 = vpop.f32.mrb[0].mxu0
        %v1314 = vadd.f32 %v1026, %v1313
        %v1315 = vpop.f32.mrb[0].mxu0
        %1316 = vmatprep.mubr.bf16.mxu0 %v971
        %1317 = vmatmul.mubr.bf16.gmra.mrb[0].mxu0 %v967
        %v1318 = vpop.f32.mrb[0].mxu0
        %v1319 = vadd.f32 %v1026, %v1318
        %v1320 = vpop.f32.mrb[0].mxu0
        %v1321 = vpop.f32.mrb[0].mxu0
        %v1322 = vadd.f32 %v1026, %v1321
        %v1323 = vpop.f32.mrb[0].mxu0
        %1324 = vmatprep.mubr.bf16.mxu0 %v972
        %1325 = vmatmul.mubr.bf16.gmra.mrb[0].mxu0 %v968
        %v1326 = vpop.f32.mrb[0].mxu0
        %v1327 = vadd.f32 %v1026, %v1326
        %v1328 = vpop.f32.mrb[0].mxu0
        %v1329 = vpop.f32.mrb[0].mxu0
        %v1330 = vadd.f32 %v1026, %v1329
        %v1331 = vpop.f32.mrb[0].mxu0
        %1332 = vdwg.mxu0
        %1333 = vmatprep.subr.bf16.mxu0 0
        %1334 = vmatpush1.bf16.msra.mxu0 %v1140
        %1335 = vmatprep.subr.bf16.mxu0 0
        %1336 = vmatpush1.bf16.msra.mxu0 %v1141
        %1337 = vmatprep.subr.bf16.mxu0 0
        %1338 = vmatpush1.bf16.msra.mxu0 %v1142
        %1339 = vmatprep.subr.bf16.mxu0 0
        %1340 = vmatpush1.bf16.msra.mxu0 %v1143
        %1341 = vmatprep.subr.bf16.mxu0 0
        %1342 = vmatpush1.bf16.msra.mxu0 %v1144
        %1343 = vmatprep.subr.bf16.mxu0 0
        %1344 = vmatpush1.bf16.msra.mxu0 %v1145
        %1345 = vmatprep.subr.bf16.mxu0 0
        %1346 = vmatpush1.bf16.msra.mxu0 %v1146
        %1347 = vmatprep.subr.bf16.mxu0 0
        %1348 = vmatpush1.bf16.msra.mxu0 %v1147
        %1349 = vmatprep.subr.bf16.mxu0 0
        %1350 = vmatpush1.bf16.msra.mxu0 0
        %1351 = vmatprep.subr.bf16.mxu0 0
        %1352 = vmatpush1.bf16.msra.mxu0 0
        %1353 = vmatprep.subr.bf16.mxu0 0
        %1354 = vmatpush1.bf16.msra.mxu0 0
        %1355 = vmatprep.subr.bf16.mxu0 0
        %1356 = vmatpush1.bf16.msra.mxu0 0
        %1357 = vmatprep.subr.bf16.mxu0 0
        %1358 = vmatpush1.bf16.msra.mxu0 0
        %1359 = vmatprep.subr.bf16.mxu0 0
        %1360 = vmatpush1.bf16.msra.mxu0 0
        %1361 = vmatprep.subr.bf16.mxu0 0
        %1362 = vmatpush1.bf16.msra.mxu0 0
        %1363 = vmatprep.subr.bf16.mxu0 0
        %1364 = vmatpush1.bf16.msra.mxu0 0
        %1365 = vmatprep.mubr.bf16.mxu0 0
        %1366 = vmatmul.mubr.bf16.gmra.mrb[0].mxu0 %v961
        %v1367 = vpop.f32.mrb[0].mxu0
        %v1368 = vadd.f32 %v1207, %v1367
        %v1369 = vpop.f32.mrb[0].mxu0
        %v1370 = vpop.f32.mrb[0].mxu0
        %v1371 = vadd.f32 %v1210, %v1370
        %v1372 = vpop.f32.mrb[0].mxu0
        %1373 = vmatprep.mubr.bf16.mxu0 0
        %1374 = vmatmul.mubr.bf16.gmra.mrb[0].mxu0 %v962
        %v1375 = vpop.f32.mrb[0].mxu0
        %v1376 = vadd.f32 %v1215, %v1375
        %v1377 = vpop.f32.mrb[0].mxu0
        %v1378 = vpop.f32.mrb[0].mxu0
        %v1379 = vadd.f32 %v1218, %v1378
        %v1380 = vpop.f32.mrb[0].mxu0
        %1381 = vmatprep.mubr.bf16.mxu0 0
        %1382 = vmatmul.mubr.bf16.gmra.mrb[0].mxu0 %v963
        %v1383 = vpop.f32.mrb[0].mxu0
        %v1384 = vadd.f32 %v1223, %v1383
        %v1385 = vpop.f32.mrb[0].mxu0
        %v1386 = vpop.f32.mrb[0].mxu0
        %v1387 = vadd.f32 %v1226, %v1386
        %v1388 = vpop.f32.mrb[0].mxu0
        %1389 = vmatprep.mubr.bf16.mxu0 0
        %1390 = vmatmul.mubr.bf16.gmra.mrb[0].mxu0 %v964
        %v1391 = vpop.f32.mrb[0].mxu0
        %v1392 = vadd.f32 %v1231, %v1391
        %v1393 = vpop.f32.mrb[0].mxu0
        %v1394 = vpop.f32.mrb[0].mxu0
        %v1395 = vadd.f32 %v1234, %v1394
        %v1396 = vpop.f32.mrb[0].mxu0
        %1397 = vmatprep.mubr.bf16.mxu0 0
        %1398 = vmatmul.mubr.bf16.gmra.mrb[0].mxu0 %v965
        %v1399 = vpop.f32.mrb[0].mxu0
        %v1400 = vadd.f32 %v1239, %v1399
        %v1401 = vpop.f32.mrb[0].mxu0
        %v1402 = vpop.f32.mrb[0].mxu0
        %v1403 = vadd.f32 %v1242, %v1402
        %v1404 = vpop.f32.mrb[0].mxu0
        %1405 = vmatprep.mubr.bf16.mxu0 0
        %1406 = vmatmul.mubr.bf16.gmra.mrb[0].mxu0 %v966
        %v1407 = vpop.f32.mrb[0].mxu0
        %v1408 = vadd.f32 %v1247, %v1407
        %v1409 = vpop.f32.mrb[0].mxu0
        %v1410 = vpop.f32.mrb[0].mxu0
        %v1411 = vadd.f32 %v1250, %v1410
        %v1412 = vpop.f32.mrb[0].mxu0
        %1413 = vmatprep.mubr.bf16.mxu0 0
        %1414 = vmatmul.mubr.bf16.gmra.mrb[0].mxu0 %v967
        %v1415 = vpop.f32.mrb[0].mxu0
        %v1416 = vadd.f32 %v1255, %v1415
        %v1417 = vpop.f32.mrb[0].mxu0
        %v1418 = vpop.f32.mrb[0].mxu0
        %v1419 = vadd.f32 %v1258, %v1418
        %v1420 = vpop.f32.mrb[0].mxu0
        %1421 = vmatprep.mubr.bf16.mxu0 0
        %1422 = vmatmul.mubr.bf16.gmra.mrb[0].mxu0 %v968
        %v1423 = vpop.f32.mrb[0].mxu0
        %v1424 = vadd.f32 %v1263, %v1423
        %v1425 = vpop.f32.mrb[0].mxu0
        %v1426 = vpop.f32.mrb[0].mxu0
        %v1427 = vadd.f32 %v1266, %v1426
        %v1428 = vpop.f32.mrb[0].mxu0
        %1429 = vmatprep.mubr.bf16.mxu0 0
        %1430 = vmatmul.mubr.bf16.gmra.mrb[0].mxu0 %v969
        %v1431 = vpop.f32.mrb[0].mxu0
        %v1432 = vadd.f32 %v1271, %v1431
        %v1433 = vpop.f32.mrb[0].mxu0
        %v1434 = vpop.f32.mrb[0].mxu0
        %v1435 = vadd.f32 %v1274, %v1434
        %v1436 = vpop.f32.mrb[0].mxu0
        %1437 = vmatprep.mubr.bf16.mxu0 0
        %1438 = vmatmul.mubr.bf16.gmra.mrb[0].mxu0 %v970
        %v1439 = vpop.f32.mrb[0].mxu0
        %v1440 = vadd.f32 %v1279, %v1439
        %v1441 = vpop.f32.mrb[0].mxu0
        %v1442 = vpop.f32.mrb[0].mxu0
        %v1443 = vadd.f32 %v1282, %v1442
        %v1444 = vpop.f32.mrb[0].mxu0
        %1445 = vmatprep.mubr.bf16.mxu0 0
        %1446 = vmatmul.mubr.bf16.gmra.mrb[0].mxu0 %v971
        %v1447 = vpop.f32.mrb[0].mxu0
        %v1448 = vadd.f32 %v1287, %v1447
        %v1449 = vpop.f32.mrb[0].mxu0
        %v1450 = vpop.f32.mrb[0].mxu0
        %v1451 = vadd.f32 %v1290, %v1450
        %v1452 = vpop.f32.mrb[0].mxu0
        %1453 = vmatprep.mubr.bf16.mxu0 0
        %1454 = vmatmul.mubr.bf16.gmra.mrb[0].mxu0 %v972
        %v1455 = vpop.f32.mrb[0].mxu0
        %v1456 = vadd.f32 %v1295, %v1455
        %v1457 = vpop.f32.mrb[0].mxu0
        %v1458 = vpop.f32.mrb[0].mxu0
        %v1459 = vadd.f32 %v1298, %v1458
        %v1460 = vpop.f32.mrb[0].mxu0
        %1461 = vmatprep.mubr.bf16.mxu0 0
        %1462 = vmatmul.mubr.bf16.gmra.mrb[0].mxu0 %v969
        %v1463 = vpop.f32.mrb[0].mxu0
        %v1464 = vadd.f32 %v1303, %v1463
        %v1465 = vpop.f32.mrb[0].mxu0
        %v1466 = vpop.f32.mrb[0].mxu0
        %v1467 = vadd.f32 %v1306, %v1466
        %v1468 = vpop.f32.mrb[0].mxu0
        %1469 = vmatprep.mubr.bf16.mxu0 0
        %1470 = vmatmul.mubr.bf16.gmra.mrb[0].mxu0 %v970
        %v1471 = vpop.f32.mrb[0].mxu0
        %v1472 = vadd.f32 %v1311, %v1471
        %v1473 = vpop.f32.mrb[0].mxu0
        %v1474 = vpop.f32.mrb[0].mxu0
        %v1475 = vadd.f32 %v1314, %v1474
        %v1476 = vpop.f32.mrb[0].mxu0
        %1477 = vmatprep.mubr.bf16.mxu0 0
        %1478 = vmatmul.mubr.bf16.gmra.mrb[0].mxu0 %v971
        %v1479 = vpop.f32.mrb[0].mxu0
        %v1480 = vadd.f32 %v1319, %v1479
        %v1481 = vpop.f32.mrb[0].mxu0
        %v1482 = vpop.f32.mrb[0].mxu0
        %v1483 = vadd.f32 %v1322, %v1482
        %v1484 = vpop.f32.mrb[0].mxu0
        %1485 = vmatprep.mubr.bf16.mxu0 0
        %1486 = vmatmul.mubr.bf16.gmra.mrb[0].mxu0 %v972
        %v1487 = vpop.f32.mrb[0].mxu0
        %v1488 = vadd.f32 %v1327, %v1487
        %v1489 = vpop.f32.mrb[0].mxu0
        %v1490 = vpop.f32.mrb[0].mxu0
        %v1491 = vadd.f32 %v1330, %v1490
        %v1492 = vpop.f32.mrb[0].mxu0
        %1493 = vdwg.mxu0
        %1494 = vmatprep.subr.mxu0 0.0
        %1495 = vmatpush1.msra.mxu0 %v1368
        %1496 = vmatprep.subr.mxu0 0.0
        %1497 = vmatpush1.msra.mxu0 %v1371
        %1498 = vmatprep.subr.mxu0 0.0
        %1499 = vmatpush1.msra.mxu0 %v1376
        %1500 = vmatprep.subr.mxu0 0.0
        %1501 = vmatpush1.msra.mxu0 %v1379
        %1502 = vmatprep.subr.mxu0 0.0
        %1503 = vmatpush1.msra.mxu0 %v1384
        %1504 = vmatprep.subr.mxu0 0.0
        %1505 = vmatpush1.msra.mxu0 %v1387
        %1506 = vmatprep.subr.mxu0 0.0
        %1507 = vmatpush1.msra.mxu0 %v1392
        %1508 = vmatprep.subr.mxu0 0.0
        %1509 = vmatpush1.msra.mxu0 %v1395
        %1510 = vmatprep.subr.mxu0 0.0
        %1511 = vmatpush1.msra.mxu0 %v1400
        %1512 = vmatprep.subr.mxu0 0.0
        %1513 = vmatpush1.msra.mxu0 %v1403
        %1514 = vmatprep.subr.mxu0 0.0
        %1515 = vmatpush1.msra.mxu0 %v1408
        %1516 = vmatprep.subr.mxu0 0.0
        %1517 = vmatpush1.msra.mxu0 %v1411
        %1518 = vmatprep.subr.mxu0 0.0
        %1519 = vmatpush1.msra.mxu0 %v1416
        %1520 = vmatprep.subr.mxu0 0.0
        %1521 = vmatpush1.msra.mxu0 %v1419
        %1522 = vmatprep.subr.mxu0 0.0
        %1523 = vmatpush1.msra.mxu0 %v1424
        %1524 = vmatprep.subr.mxu0 0.0
        %1525 = vmatpush1.msra.mxu0 %v1427
        %1526 = vmatprep.subr.mxu0 0.0
        %1527 = vmatpush1.msra.mxu0 %v1432
        %1528 = vmatprep.subr.mxu0 0.0
        %1529 = vmatpush1.msra.mxu0 %v1435
        %1530 = vmatprep.subr.mxu0 0.0
        %1531 = vmatpush1.msra.mxu0 %v1440
        %1532 = vmatprep.subr.mxu0 0.0
        %1533 = vmatpush1.msra.mxu0 %v1443
        %1534 = vmatprep.subr.mxu0 0.0
        %1535 = vmatpush1.msra.mxu0 %v1448
        %1536 = vmatprep.subr.mxu0 0.0
        %1537 = vmatpush1.msra.mxu0 %v1451
        %1538 = vmatprep.subr.mxu0 0.0
        %1539 = vmatpush1.msra.mxu0 %v1456
        %1540 = vmatprep.subr.mxu0 0.0
        %1541 = vmatpush1.msra.mxu0 %v1459
        %1542 = vmatprep.subr.mxu0 0.0
        %1543 = vmatpush1.msra.mxu0 %v1464
        %1544 = vmatprep.subr.mxu0 0.0
        %1545 = vmatpush1.msra.mxu0 %v1467
        %1546 = vmatprep.subr.mxu0 0.0
        %1547 = vmatpush1.msra.mxu0 %v1472
        %1548 = vmatprep.subr.mxu0 0.0
        %1549 = vmatpush1.msra.mxu0 %v1475
        %1550 = vmatprep.subr.mxu0 0.0
        %1551 = vmatpush1.msra.mxu0 %v1480
        %1552 = vmatprep.subr.mxu0 0.0
        %1553 = vmatpush1.msra.mxu0 %v1483
        %1554 = vmatprep.subr.mxu0 0.0
        %1555 = vmatpush1.msra.mxu0 %v1488
        %1556 = vmatprep.subr.mxu0 0.0
        %1557 = vmatpush1.msra.mxu0 %v1491
        %1558 = vmatprep.mubr.f32.mxu0 %v368
        %1559 = vmatmul.mubr.f32.gmra.mrb[0].mxu0 %v367
        %v1560 = vpop.f32.mrb[0].mxu0
        %v1561 = vadd.f32 0.0, %v1560
        %v1562 = vpop.f32.mrb[0].mxu0
        %1563 = vdwg.mxu0
        %v1564 = vmul.f32 %v1368, %v1368
        %v1565 = vmul.f32 %v1371, %v1371
        %v1566 = vmul.f32 %v1376, %v1376
        %v1567 = vmul.f32 %v1379, %v1379
        %v1568 = vmul.f32 %v1384, %v1384
        %v1569 = vmul.f32 %v1387, %v1387
        %v1570 = vmul.f32 %v1392, %v1392
        %v1571 = vmul.f32 %v1395, %v1395
        %v1572 = vmul.f32 %v1400, %v1400
        %v1573 = vmul.f32 %v1403, %v1403
        %v1574 = vmul.f32 %v1408, %v1408
        %v1575 = vmul.f32 %v1411, %v1411
        %v1576 = vmul.f32 %v1416, %v1416
        %v1577 = vmul.f32 %v1419, %v1419
        %v1578 = vmul.f32 %v1424, %v1424
        %v1579 = vmul.f32 %v1427, %v1427
        %v1580 = vmul.f32 %v1432, %v1432
        %v1581 = vmul.f32 %v1435, %v1435
        %v1582 = vmul.f32 %v1440, %v1440
        %v1583 = vmul.f32 %v1443, %v1443
        %v1584 = vmul.f32 %v1448, %v1448
        %v1585 = vmul.f32 %v1451, %v1451
        %v1586 = vmul.f32 %v1456, %v1456
        %v1587 = vmul.f32 %v1459, %v1459
        %v1588 = vmul.f32 %v1464, %v1464
        %v1589 = vmul.f32 %v1467, %v1467
        %v1590 = vmul.f32 %v1472, %v1472
        %v1591 = vmul.f32 %v1475, %v1475
        %v1592 = vmul.f32 %v1480, %v1480
        %v1593 = vmul.f32 %v1483, %v1483
        %v1594 = vmul.f32 %v1488, %v1488
        %v1595 = vmul.f32 %v1491, %v1491
        %1596 = vmatprep.subr.mxu0 0.0
        %1597 = vmatpush1.msra.mxu0 %v1564
        %1598 = vmatprep.subr.mxu0 0.0
        %1599 = vmatpush1.msra.mxu0 %v1565
        %1600 = vmatprep.subr.mxu0 0.0
        %1601 = vmatpush1.msra.mxu0 %v1566
        %1602 = vmatprep.subr.mxu0 0.0
        %1603 = vmatpush1.msra.mxu0 %v1567
        %1604 = vmatprep.subr.mxu0 0.0
        %1605 = vmatpush1.msra.mxu0 %v1568
        %1606 = vmatprep.subr.mxu0 0.0
        %1607 = vmatpush1.msra.mxu0 %v1569
        %1608 = vmatprep.subr.mxu0 0.0
        %1609 = vmatpush1.msra.mxu0 %v1570
        %1610 = vmatprep.subr.mxu0 0.0
        %1611 = vmatpush1.msra.mxu0 %v1571
        %1612 = vmatprep.subr.mxu0 0.0
        %1613 = vmatpush1.msra.mxu0 %v1572
        %1614 = vmatprep.subr.mxu0 0.0
        %1615 = vmatpush1.msra.mxu0 %v1573
        %1616 = vmatprep.subr.mxu0 0.0
        %1617 = vmatpush1.msra.mxu0 %v1574
        %1618 = vmatprep.subr.mxu0 0.0
        %1619 = vmatpush1.msra.mxu0 %v1575
        %1620 = vmatprep.subr.mxu0 0.0
        %1621 = vmatpush1.msra.mxu0 %v1576
        %1622 = vmatprep.subr.mxu0 0.0
        %1623 = vmatpush1.msra.mxu0 %v1577
        %1624 = vmatprep.subr.mxu0 0.0
        %1625 = vmatpush1.msra.mxu0 %v1578
        %1626 = vmatprep.subr.mxu0 0.0
        %1627 = vmatpush1.msra.mxu0 %v1579
        %1628 = vmatprep.subr.mxu0 0.0
        %1629 = vmatpush1.msra.mxu0 %v1580
        %1630 = vmatprep.subr.mxu0 0.0
        %1631 = vmatpush1.msra.mxu0 %v1581
        %1632 = vmatprep.subr.mxu0 0.0
        %1633 = vmatpush1.msra.mxu0 %v1582
        %1634 = vmatprep.subr.mxu0 0.0
        %1635 = vmatpush1.msra.mxu0 %v1583
        %1636 = vmatprep.subr.mxu0 0.0
        %1637 = vmatpush1.msra.mxu0 %v1584
        %1638 = vmatprep.subr.mxu0 0.0
        %1639 = vmatpush1.msra.mxu0 %v1585
        %1640 = vmatprep.subr.mxu0 0.0
        %1641 = vmatpush1.msra.mxu0 %v1586
        %1642 = vmatprep.subr.mxu0 0.0
        %1643 = vmatpush1.msra.mxu0 %v1587
        %1644 = vmatprep.subr.mxu0 0.0
        %1645 = vmatpush1.msra.mxu0 %v1588
        %1646 = vmatprep.subr.mxu0 0.0
        %1647 = vmatpush1.msra.mxu0 %v1589
        %1648 = vmatprep.subr.mxu0 0.0
        %1649 = vmatpush1.msra.mxu0 %v1590
        %1650 = vmatprep.subr.mxu0 0.0
        %1651 = vmatpush1.msra.mxu0 %v1591
        %1652 = vmatprep.subr.mxu0 0.0
        %1653 = vmatpush1.msra.mxu0 %v1592
        %1654 = vmatprep.subr.mxu0 0.0
        %1655 = vmatpush1.msra.mxu0 %v1593
        %1656 = vmatprep.subr.mxu0 0.0
        %1657 = vmatpush1.msra.mxu0 %v1594
        %1658 = vmatprep.subr.mxu0 0.0
        %1659 = vmatpush1.msra.mxu0 %v1595
        %1660 = vmatprep.mubr.f32.mxu0 %v368
        %1661 = vmatmul.mubr.f32.gmra.mrb[0].mxu0 %v367
        %v1662 = vpop.f32.mrb[0].mxu0
        %v1663 = vadd.f32 0.0, %v1662
        %v1664 = vpop.f32.mrb[0].mxu0
        %1665 = vdwg.mxu0
        %v1666 = vpack.c.bf16 %v1371, %v1368
        %v1667 = vpack.c.bf16 %v1379, %v1376
        %v1668 = vpack.c.bf16 %v1387, %v1384
        %v1669 = vpack.c.bf16 %v1395, %v1392
        %v1670 = vpack.c.bf16 %v1403, %v1400
        %v1671 = vpack.c.bf16 %v1411, %v1408
        %v1672 = vpack.c.bf16 %v1419, %v1416
        %v1673 = vpack.c.bf16 %v1427, %v1424
        %v1674 = vpack.c.bf16 %v1435, %v1432
        %v1675 = vpack.c.bf16 %v1443, %v1440
        %v1676 = vpack.c.bf16 %v1451, %v1448
        %v1677 = vpack.c.bf16 %v1459, %v1456
        %v1678 = vpack.c.bf16 %v1467, %v1464
        %v1679 = vpack.c.bf16 %v1475, %v1472
        %v1680 = vpack.c.bf16 %v1483, %v1480
        %v1681 = vpack.c.bf16 %v1491, %v1488
        %1682 = vmatprep.subr.mxu0 0.0
        %1683 = vmatpush1.msra.mxu0 %v332
        %1684 = vmatprep.subr.mxu0 0.0
        %1685 = vmatpush1.msra.mxu0 %v333
        %1686 = vmatprep.subr.mxu0 0.0
        %1687 = vmatpush1.msra.mxu0 %v334
        %1688 = vmatprep.subr.mxu0 0.0
        %1689 = vmatpush1.msra.mxu0 %v335
        %1690 = vmatprep.subr.mxu0 0.0
        %1691 = vmatpush1.msra.mxu0 %v336
        %1692 = vmatprep.subr.mxu0 0.0
        %1693 = vmatpush1.msra.mxu0 %v337
        %1694 = vmatprep.subr.mxu0 0.0
        %1695 = vmatpush1.msra.mxu0 %v338
        %1696 = vmatprep.subr.mxu0 0.0
        %1697 = vmatpush1.msra.mxu0 %v339
        %1698 = vmatprep.subr.mxu0 0.0
        %1699 = vmatpush1.msra.mxu0 %v340
        %1700 = vmatprep.subr.mxu0 0.0
        %1701 = vmatpush1.msra.mxu0 %v341
        %1702 = vmatprep.subr.mxu0 0.0
        %1703 = vmatpush1.msra.mxu0 %v342
        %1704 = vmatprep.subr.mxu0 0.0
        %1705 = vmatpush1.msra.mxu0 %v343
        %1706 = vmatprep.subr.mxu0 0.0
        %1707 = vmatpush1.msra.mxu0 %v344
        %1708 = vmatprep.subr.mxu0 0.0
        %1709 = vmatpush1.msra.mxu0 %v345
        %1710 = vmatprep.subr.mxu0 0.0
        %1711 = vmatpush1.msra.mxu0 %v346
        %1712 = vmatprep.subr.mxu0 0.0
        %1713 = vmatpush1.msra.mxu0 %v347
        %1714 = vmatprep.subr.mxu0 0.0
        %1715 = vmatpush1.msra.mxu0 0.0
        %1716 = vmatprep.subr.mxu0 0.0
        %1717 = vmatpush1.msra.mxu0 0.0
        %1718 = vmatprep.subr.mxu0 0.0
        %1719 = vmatpush1.msra.mxu0 0.0
        %1720 = vmatprep.subr.mxu0 0.0
        %1721 = vmatpush1.msra.mxu0 0.0
        %1722 = vmatprep.subr.mxu0 0.0
        %1723 = vmatpush1.msra.mxu0 0.0
        %1724 = vmatprep.subr.mxu0 0.0
        %1725 = vmatpush1.msra.mxu0 0.0
        %1726 = vmatprep.subr.mxu0 0.0
        %1727 = vmatpush1.msra.mxu0 0.0
        %1728 = vmatprep.subr.mxu0 0.0
        %1729 = vmatpush1.msra.mxu0 0.0
        %1730 = vmatprep.subr.mxu0 0.0
        %1731 = vmatpush1.msra.mxu0 0.0
        %1732 = vmatprep.subr.mxu0 0.0
        %1733 = vmatpush1.msra.mxu0 0.0
        %1734 = vmatprep.subr.mxu0 0.0
        %1735 = vmatpush1.msra.mxu0 0.0
        %1736 = vmatprep.subr.mxu0 0.0
        %1737 = vmatpush1.msra.mxu0 0.0
        %1738 = vmatprep.subr.mxu0 0.0
        %1739 = vmatpush1.msra.mxu0 0.0
        %1740 = vmatprep.subr.mxu0 0.0
        %1741 = vmatpush1.msra.mxu0 0.0
        %1742 = vmatprep.subr.mxu0 0.0
        %1743 = vmatpush1.msra.mxu0 0.0
        %1744 = vmatprep.subr.mxu0 0.0
        %1745 = vmatpush1.msra.mxu0 0.0
        %1746 = vmatprep.mubr.f32.mxu0 0.0
        %1747 = vmatmul.mubr.f32.gmra.mrb[0].mxu0 %v1561
        %v1748 = vpop.f32.mrb[0].mxu0
        %v1749 = vadd.f32 0.0, %v1748
        %v1750 = vpop.f32.mrb[0].mxu0
        %1751 = vdwg.mxu0
        %1752 = vmatprep.subr.mxu0 0.0
        %1753 = vmatpush1.msra.mxu0 %v332
        %1754 = vmatprep.subr.mxu0 0.0
        %1755 = vmatpush1.msra.mxu0 %v333
        %1756 = vmatprep.subr.mxu0 0.0
        %1757 = vmatpush1.msra.mxu0 %v334
        %1758 = vmatprep.subr.mxu0 0.0
        %1759 = vmatpush1.msra.mxu0 %v335
        %1760 = vmatprep.subr.mxu0 0.0
        %1761 = vmatpush1.msra.mxu0 %v336
        %1762 = vmatprep.subr.mxu0 0.0
        %1763 = vmatpush1.msra.mxu0 %v337
        %1764 = vmatprep.subr.mxu0 0.0
        %1765 = vmatpush1.msra.mxu0 %v338
        %1766 = vmatprep.subr.mxu0 0.0
        %1767 = vmatpush1.msra.mxu0 %v339
        %1768 = vmatprep.subr.mxu0 0.0
        %1769 = vmatpush1.msra.mxu0 %v340
        %1770 = vmatprep.subr.mxu0 0.0
        %1771 = vmatpush1.msra.mxu0 %v341
        %1772 = vmatprep.subr.mxu0 0.0
        %1773 = vmatpush1.msra.mxu0 %v342
        %1774 = vmatprep.subr.mxu0 0.0
        %1775 = vmatpush1.msra.mxu0 %v343
        %1776 = vmatprep.subr.mxu0 0.0
        %1777 = vmatpush1.msra.mxu0 %v344
        %1778 = vmatprep.subr.mxu0 0.0
        %1779 = vmatpush1.msra.mxu0 %v345
        %1780 = vmatprep.subr.mxu0 0.0
        %1781 = vmatpush1.msra.mxu0 %v346
        %1782 = vmatprep.subr.mxu0 0.0
        %1783 = vmatpush1.msra.mxu0 %v347
        %1784 = vmatprep.subr.mxu0 0.0
        %1785 = vmatpush1.msra.mxu0 0.0
        %1786 = vmatprep.subr.mxu0 0.0
        %1787 = vmatpush1.msra.mxu0 0.0
        %1788 = vmatprep.subr.mxu0 0.0
        %1789 = vmatpush1.msra.mxu0 0.0
        %1790 = vmatprep.subr.mxu0 0.0
        %1791 = vmatpush1.msra.mxu0 0.0
        %1792 = vmatprep.subr.mxu0 0.0
        %1793 = vmatpush1.msra.mxu0 0.0
        %1794 = vmatprep.subr.mxu0 0.0
        %1795 = vmatpush1.msra.mxu0 0.0
        %1796 = vmatprep.subr.mxu0 0.0
        %1797 = vmatpush1.msra.mxu0 0.0
        %1798 = vmatprep.subr.mxu0 0.0
        %1799 = vmatpush1.msra.mxu0 0.0
        %1800 = vmatprep.subr.mxu0 0.0
        %1801 = vmatpush1.msra.mxu0 0.0
        %1802 = vmatprep.subr.mxu0 0.0
        %1803 = vmatpush1.msra.mxu0 0.0
        %1804 = vmatprep.subr.mxu0 0.0
        %1805 = vmatpush1.msra.mxu0 0.0
        %1806 = vmatprep.subr.mxu0 0.0
        %1807 = vmatpush1.msra.mxu0 0.0
        %1808 = vmatprep.subr.mxu0 0.0
        %1809 = vmatpush1.msra.mxu0 0.0
        %1810 = vmatprep.subr.mxu0 0.0
        %1811 = vmatpush1.msra.mxu0 0.0
        %1812 = vmatprep.subr.mxu0 0.0
        %1813 = vmatpush1.msra.mxu0 0.0
        %1814 = vmatprep.subr.mxu0 0.0
        %1815 = vmatpush1.msra.mxu0 0.0
        %1816 = vmatprep.mubr.f32.mxu0 0.0
        %1817 = vmatmul.mubr.f32.gmra.mrb[0].mxu0 %v1663
        %v1818 = vpop.f32.mrb[0].mxu0
        %v1819 = vadd.f32 0.0, %v1818
        %v1820 = vpop.f32.mrb[0].mxu0
        %1821 = vdwg.mxu0
        %v1822 = vmul.f32 %v1749, %v1749
        %v1823 = vsub.f32 %v1819, %v1822
        %v1824 = vmax.f32 %v1823, 0.0
        %v1825 = vadd.f32 %v1824, 1e-05
        %v1826 = vrsqrt.pop %v1825
        %s1827 = scalar_lea.vmem %s2, 1
        %v1828 = vld [vmem:[%s1827] sm:$0x1]
        %v1829 = vmul.f32 %v1826, %v1828
        %s1830 = scalar_lea.vmem %s3, 1
        %v1831 = vld [vmem:[%s1830] sm:$0x1]
        %v1832 = vmul.f32 %v1749, %v1829
        %v1833 = vsub.f32 %v1831, %v1832
        %v1834 = vunpack.c.l.bf16 %v1666
        %v1835 = vunpack.c.h.bf16 %v1666
        %v1836 = vunpack.c.l.bf16 %v1667
        %v1837 = vunpack.c.h.bf16 %v1667
        %v1838 = vunpack.c.l.bf16 %v1668
        %v1839 = vunpack.c.h.bf16 %v1668
        %v1840 = vunpack.c.l.bf16 %v1669
        %v1841 = vunpack.c.h.bf16 %v1669
        %v1842 = vunpack.c.l.bf16 %v1670
        %v1843 = vunpack.c.h.bf16 %v1670
        %v1844 = vunpack.c.l.bf16 %v1671
        %v1845 = vunpack.c.h.bf16 %v1671
        %v1846 = vunpack.c.l.bf16 %v1672
        %v1847 = vunpack.c.h.bf16 %v1672
        %v1848 = vunpack.c.l.bf16 %v1673
        %v1849 = vunpack.c.h.bf16 %v1673
        %v1850 = vunpack.c.l.bf16 %v1674
        %v1851 = vunpack.c.h.bf16 %v1674
        %v1852 = vunpack.c.l.bf16 %v1675
        %v1853 = vunpack.c.h.bf16 %v1675
        %v1854 = vunpack.c.l.bf16 %v1676
        %v1855 = vunpack.c.h.bf16 %v1676
        %v1856 = vunpack.c.l.bf16 %v1677
        %v1857 = vunpack.c.h.bf16 %v1677
        %v1858 = vunpack.c.l.bf16 %v1678
        %v1859 = vunpack.c.h.bf16 %v1678
        %v1860 = vunpack.c.l.bf16 %v1679
        %v1861 = vunpack.c.h.bf16 %v1679
        %v1862 = vunpack.c.l.bf16 %v1680
        %v1863 = vunpack.c.h.bf16 %v1680
        %v1864 = vunpack.c.l.bf16 %v1681
        %v1865 = vunpack.c.h.bf16 %v1681
        %v1866 = vlaneseq
        %v1867 = vshrl.u32 %v1866, 7
        %v1868 = vsub.s32 0, %v1867
        %v1869 = vrot.slane %v1829, %v1868
        %v1870 = vmul.f32 %v1834, %v1869
        %v1871 = vmul.f32 %v1835, %v1869
        %v1872 = vmul.f32 %v1836, %v1869
        %v1873 = vmul.f32 %v1837, %v1869
        %v1874 = vmul.f32 %v1838, %v1869
        %v1875 = vmul.f32 %v1839, %v1869
        %v1876 = vmul.f32 %v1840, %v1869
        %v1877 = vmul.f32 %v1841, %v1869
        %v1878 = vmul.f32 %v1842, %v1869
        %v1879 = vmul.f32 %v1843, %v1869
        %v1880 = vmul.f32 %v1844, %v1869
        %v1881 = vmul.f32 %v1845, %v1869
        %v1882 = vmul.f32 %v1846, %v1869
        %v1883 = vmul.f32 %v1847, %v1869
        %v1884 = vmul.f32 %v1848, %v1869
        %v1885 = vmul.f32 %v1849, %v1869
        %v1886 = vmul.f32 %v1850, %v1869
        %v1887 = vmul.f32 %v1851, %v1869
        %v1888 = vmul.f32 %v1852, %v1869
        %v1889 = vmul.f32 %v1853, %v1869
        %v1890 = vmul.f32 %v1854, %v1869
        %v1891 = vmul.f32 %v1855, %v1869
        %v1892 = vmul.f32 %v1856, %v1869
        %v1893 = vmul.f32 %v1857, %v1869
        %v1894 = vmul.f32 %v1858, %v1869
        %v1895 = vmul.f32 %v1859, %v1869
        %v1896 = vmul.f32 %v1860, %v1869
        %v1897 = vmul.f32 %v1861, %v1869
        %v1898 = vmul.f32 %v1862, %v1869
        %v1899 = vmul.f32 %v1863, %v1869
        %v1900 = vmul.f32 %v1864, %v1869
        %v1901 = vmul.f32 %v1865, %v1869
        %v1903 = vlaneseq
        %v1904 = vshrl.u32 %v1903, 7
        %v1905 = vsub.s32 0, %v1904
        %v1906 = vrot.slane %v1833, %v1905
        %v1908 = vadd.f32 %v1870, %v1906
        %v1909 = vadd.f32 %v1871, %v1906
        %v1910 = vadd.f32 %v1872, %v1906
        %v1911 = vadd.f32 %v1873, %v1906
        %v1912 = vadd.f32 %v1874, %v1906
        %v1913 = vadd.f32 %v1875, %v1906
        %v1914 = vadd.f32 %v1876, %v1906
        %v1915 = vadd.f32 %v1877, %v1906
        %v1916 = vadd.f32 %v1878, %v1906
        %v1917 = vadd.f32 %v1879, %v1906
        %v1918 = vadd.f32 %v1880, %v1906
        %v1919 = vadd.f32 %v1881, %v1906
        %v1920 = vadd.f32 %v1882, %v1906
        %v1921 = vadd.f32 %v1883, %v1906
        %v1922 = vadd.f32 %v1884, %v1906
        %v1923 = vadd.f32 %v1885, %v1906
        %v1924 = vadd.f32 %v1886, %v1906
        %v1925 = vadd.f32 %v1887, %v1906
        %v1926 = vadd.f32 %v1888, %v1906
        %v1927 = vadd.f32 %v1889, %v1906
        %v1928 = vadd.f32 %v1890, %v1906
        %v1929 = vadd.f32 %v1891, %v1906
        %v1930 = vadd.f32 %v1892, %v1906
        %v1931 = vadd.f32 %v1893, %v1906
        %v1932 = vadd.f32 %v1894, %v1906
        %v1933 = vadd.f32 %v1895, %v1906
        %v1934 = vadd.f32 %v1896, %v1906
        %v1935 = vadd.f32 %v1897, %v1906
        %v1936 = vadd.f32 %v1898, %v1906
        %v1937 = vadd.f32 %v1899, %v1906
        %v1938 = vadd.f32 %v1900, %v1906
        %v1939 = vadd.f32 %v1901, %v1906
        %v1940 = vmul.f32 %v1908, 0.5
        %v1941 = vmul.f32 %v1909, 0.5
        %v1942 = vmul.f32 %v1910, 0.5
        %v1943 = vmul.f32 %v1911, 0.5
        %v1944 = vmul.f32 %v1912, 0.5
        %v1945 = vmul.f32 %v1913, 0.5
        %v1946 = vmul.f32 %v1914, 0.5
        %v1947 = vmul.f32 %v1915, 0.5
        %v1948 = vmul.f32 %v1916, 0.5
        %v1949 = vmul.f32 %v1917, 0.5
        %v1950 = vmul.f32 %v1918, 0.5
        %v1951 = vmul.f32 %v1919, 0.5
        %v1952 = vmul.f32 %v1920, 0.5
        %v1953 = vmul.f32 %v1921, 0.5
        %v1954 = vmul.f32 %v1922, 0.5
        %v1955 = vmul.f32 %v1923, 0.5
        %v1956 = vmul.f32 %v1924, 0.5
        %v1957 = vmul.f32 %v1925, 0.5
        %v1958 = vmul.f32 %v1926, 0.5
        %v1959 = vmul.f32 %v1927, 0.5
        %v1960 = vmul.f32 %v1928, 0.5
        %v1961 = vmul.f32 %v1929, 0.5
        %v1962 = vmul.f32 %v1930, 0.5
        %v1963 = vmul.f32 %v1931, 0.5
        %v1964 = vmul.f32 %v1932, 0.5
        %v1965 = vmul.f32 %v1933, 0.5
        %v1966 = vmul.f32 %v1934, 0.5
        %v1967 = vmul.f32 %v1935, 0.5
        %v1968 = vmul.f32 %v1936, 0.5
        %v1969 = vmul.f32 %v1937, 0.5
        %v1970 = vmul.f32 %v1938, 0.5
        %v1971 = vmul.f32 %v1939, 0.5
        %v1972 = vtanh.pop %v1940
        %v1973 = vtanh.pop %v1941
        %v1974 = vtanh.pop %v1942
        %v1975 = vtanh.pop %v1943
        %v1976 = vtanh.pop %v1944
        %v1977 = vtanh.pop %v1945
        %v1978 = vtanh.pop %v1946
        %v1979 = vtanh.pop %v1947
        %v1980 = vtanh.pop %v1948
        %v1981 = vtanh.pop %v1949
        %v1982 = vtanh.pop %v1950
        %v1983 = vtanh.pop %v1951
        %v1984 = vtanh.pop %v1952
        %v1985 = vtanh.pop %v1953
        %v1986 = vtanh.pop %v1954
        %v1987 = vtanh.pop %v1955
        %v1988 = vtanh.pop %v1956
        %v1989 = vtanh.pop %v1957
        %v1990 = vtanh.pop %v1958
        %v1991 = vtanh.pop %v1959
        %v1992 = vtanh.pop %v1960
        %v1993 = vtanh.pop %v1961
        %v1994 = vtanh.pop %v1962
        %v1995 = vtanh.pop %v1963
        %v1996 = vtanh.pop %v1964
        %v1997 = vtanh.pop %v1965
        %v1998 = vtanh.pop %v1966
        %v1999 = vtanh.pop %v1967
        %v2000 = vtanh.pop %v1968
        %v2001 = vtanh.pop %v1969
        %v2002 = vtanh.pop %v1970
        %v2003 = vtanh.pop %v1971
        %v2004 = vadd.f32 %v1972, 1.0
        %v2005 = vadd.f32 %v1973, 1.0
        %v2006 = vadd.f32 %v1974, 1.0
        %v2007 = vadd.f32 %v1975, 1.0
        %v2008 = vadd.f32 %v1976, 1.0
        %v2009 = vadd.f32 %v1977, 1.0
        %v2010 = vadd.f32 %v1978, 1.0
        %v2011 = vadd.f32 %v1979, 1.0
        %v2012 = vadd.f32 %v1980, 1.0
        %v2013 = vadd.f32 %v1981, 1.0
        %v2014 = vadd.f32 %v1982, 1.0
        %v2015 = vadd.f32 %v1983, 1.0
        %v2016 = vadd.f32 %v1984, 1.0
        %v2017 = vadd.f32 %v1985, 1.0
        %v2018 = vadd.f32 %v1986, 1.0
        %v2019 = vadd.f32 %v1987, 1.0
        %v2020 = vadd.f32 %v1988, 1.0
        %v2021 = vadd.f32 %v1989, 1.0
        %v2022 = vadd.f32 %v1990, 1.0
        %v2023 = vadd.f32 %v1991, 1.0
        %v2024 = vadd.f32 %v1992, 1.0
        %v2025 = vadd.f32 %v1993, 1.0
        %v2026 = vadd.f32 %v1994, 1.0
        %v2027 = vadd.f32 %v1995, 1.0
        %v2028 = vadd.f32 %v1996, 1.0
        %v2029 = vadd.f32 %v1997, 1.0
        %v2030 = vadd.f32 %v1998, 1.0
        %v2031 = vadd.f32 %v1999, 1.0
        %v2032 = vadd.f32 %v2000, 1.0
        %v2033 = vadd.f32 %v2001, 1.0
        %v2034 = vadd.f32 %v2002, 1.0
        %v2035 = vadd.f32 %v2003, 1.0
        %v2036 = vmul.f32 %v2004, 0.5
        %v2037 = vmul.f32 %v2005, 0.5
        %v2038 = vmul.f32 %v2006, 0.5
        %v2039 = vmul.f32 %v2007, 0.5
        %v2040 = vmul.f32 %v2008, 0.5
        %v2041 = vmul.f32 %v2009, 0.5
        %v2042 = vmul.f32 %v2010, 0.5
        %v2043 = vmul.f32 %v2011, 0.5
        %v2044 = vmul.f32 %v2012, 0.5
        %v2045 = vmul.f32 %v2013, 0.5
        %v2046 = vmul.f32 %v2014, 0.5
        %v2047 = vmul.f32 %v2015, 0.5
        %v2048 = vmul.f32 %v2016, 0.5
        %v2049 = vmul.f32 %v2017, 0.5
        %v2050 = vmul.f32 %v2018, 0.5
        %v2051 = vmul.f32 %v2019, 0.5
        %v2052 = vmul.f32 %v2020, 0.5
        %v2053 = vmul.f32 %v2021, 0.5
        %v2054 = vmul.f32 %v2022, 0.5
        %v2055 = vmul.f32 %v2023, 0.5
        %v2056 = vmul.f32 %v2024, 0.5
        %v2057 = vmul.f32 %v2025, 0.5
        %v2058 = vmul.f32 %v2026, 0.5
        %v2059 = vmul.f32 %v2027, 0.5
        %v2060 = vmul.f32 %v2028, 0.5
        %v2061 = vmul.f32 %v2029, 0.5
        %v2062 = vmul.f32 %v2030, 0.5
        %v2063 = vmul.f32 %v2031, 0.5
        %v2064 = vmul.f32 %v2032, 0.5
        %v2065 = vmul.f32 %v2033, 0.5
        %v2066 = vmul.f32 %v2034, 0.5
        %v2067 = vmul.f32 %v2035, 0.5
        %v2068 = vmul.f32 %v1908, %v2036
        %v2069 = vmul.f32 %v1909, %v2037
        %v2070 = vmul.f32 %v1910, %v2038
        %v2071 = vmul.f32 %v1911, %v2039
        %v2072 = vmul.f32 %v1912, %v2040
        %v2073 = vmul.f32 %v1913, %v2041
        %v2074 = vmul.f32 %v1914, %v2042
        %v2075 = vmul.f32 %v1915, %v2043
        %v2076 = vmul.f32 %v1916, %v2044
        %v2077 = vmul.f32 %v1917, %v2045
        %v2078 = vmul.f32 %v1918, %v2046
        %v2079 = vmul.f32 %v1919, %v2047
        %v2080 = vmul.f32 %v1920, %v2048
        %v2081 = vmul.f32 %v1921, %v2049
        %v2082 = vmul.f32 %v1922, %v2050
        %v2083 = vmul.f32 %v1923, %v2051
        %v2084 = vmul.f32 %v1924, %v2052
        %v2085 = vmul.f32 %v1925, %v2053
        %v2086 = vmul.f32 %v1926, %v2054
        %v2087 = vmul.f32 %v1927, %v2055
        %v2088 = vmul.f32 %v1928, %v2056
        %v2089 = vmul.f32 %v1929, %v2057
        %v2090 = vmul.f32 %v1930, %v2058
        %v2091 = vmul.f32 %v1931, %v2059
        %v2092 = vmul.f32 %v1932, %v2060
        %v2093 = vmul.f32 %v1933, %v2061
        %v2094 = vmul.f32 %v1934, %v2062
        %v2095 = vmul.f32 %v1935, %v2063
        %v2096 = vmul.f32 %v1936, %v2064
        %v2097 = vmul.f32 %v1937, %v2065
        %v2098 = vmul.f32 %v1938, %v2066
        %v2099 = vmul.f32 %v1939, %v2067
        %v2100 = vpack.c.bf16 %v2069, %v2068
        %v2101 = vpack.c.bf16 %v2071, %v2070
        %v2102 = vpack.c.bf16 %v2073, %v2072
        %v2103 = vpack.c.bf16 %v2075, %v2074
        %v2104 = vpack.c.bf16 %v2077, %v2076
        %v2105 = vpack.c.bf16 %v2079, %v2078
        %v2106 = vpack.c.bf16 %v2081, %v2080
        %v2107 = vpack.c.bf16 %v2083, %v2082
        %v2108 = vpack.c.bf16 %v2085, %v2084
        %v2109 = vpack.c.bf16 %v2087, %v2086
        %v2110 = vpack.c.bf16 %v2089, %v2088
        %v2111 = vpack.c.bf16 %v2091, %v2090
        %v2112 = vpack.c.bf16 %v2093, %v2092
        %v2113 = vpack.c.bf16 %v2095, %v2094
        %v2114 = vpack.c.bf16 %v2097, %v2096
        %v2115 = vpack.c.bf16 %v2099, %v2098
        %s2116 = scalar_lea.vmem [#allocation7], 192
        %v2117 = vld [vmem:[%s2116] sm:$0xf]
        %v2118 = vld [vmem:[%s2116 + $0x4] sm:$0xf]
        %v2119 = vld [vmem:[%s2116 + $0x8] sm:$0xf]
        %v2120 = vld [vmem:[%s2116 + $0xc] sm:$0xf]
        %v2121 = vld [vmem:[%s2116 + $0x10] sm:$0xf]
        %v2122 = vld [vmem:[%s2116 + $0x14] sm:$0xf]
        %v2123 = vld [vmem:[%s2116 + $0x18] sm:$0xf]
        %v2124 = vld [vmem:[%s2116 + $0x1c] sm:$0xf]
        %v2125 = vld [vmem:[%s2116 + $0x20] sm:$0xf]
        %v2126 = vld [vmem:[%s2116 + $0x24] sm:$0xf]
        %v2127 = vld [vmem:[%s2116 + $0x28] sm:$0xf]
        %v2128 = vld [vmem:[%s2116 + $0x2c] sm:$0xf]
        %v2129 = vld [vmem:[%s2116 + $0x30] sm:$0xf]
        %v2130 = vld [vmem:[%s2116 + $0x34] sm:$0xf]
        %v2131 = vld [vmem:[%s2116 + $0x38] sm:$0xf]
        %v2132 = vld [vmem:[%s2116 + $0x3c] sm:$0xf]
        %v2133 = vld [vmem:[%s2116 + $0x40] sm:$0xf]
        %v2134 = vld [vmem:[%s2116 + $0x44] sm:$0xf]
        %v2135 = vld [vmem:[%s2116 + $0x48] sm:$0xf]
        %v2136 = vld [vmem:[%s2116 + $0x4c] sm:$0xf]
        %v2137 = vld [vmem:[%s2116 + $0x50] sm:$0xf]
        %v2138 = vld [vmem:[%s2116 + $0x54] sm:$0xf]
        %v2139 = vld [vmem:[%s2116 + $0x58] sm:$0xf]
        %v2140 = vld [vmem:[%s2116 + $0x5c] sm:$0xf]
        %v2141 = vld [vmem:[%s2116 + $0x60] sm:$0xf]
        %v2142 = vld [vmem:[%s2116 + $0x64] sm:$0xf]
        %v2143 = vld [vmem:[%s2116 + $0x68] sm:$0xf]
        %v2144 = vld [vmem:[%s2116 + $0x6c] sm:$0xf]
        %v2145 = vld [vmem:[%s2116 + $0x70] sm:$0xf]
        %v2146 = vld [vmem:[%s2116 + $0x74] sm:$0xf]
        %v2147 = vld [vmem:[%s2116 + $0x78] sm:$0xf]
        %v2148 = vld [vmem:[%s2116 + $0x7c] sm:$0xf]
        %v2149 = vld [vmem:[%s2116 + $0x80] sm:$0xf]
        %v2150 = vld [vmem:[%s2116 + $0x84] sm:$0xf]
        %v2151 = vld [vmem:[%s2116 + $0x88] sm:$0xf]
        %v2152 = vld [vmem:[%s2116 + $0x8c] sm:$0xf]
        %v2153 = vld [vmem:[%s2116 + $0x90] sm:$0xf]
        %v2154 = vld [vmem:[%s2116 + $0x94] sm:$0xf]
        %v2155 = vld [vmem:[%s2116 + $0x98] sm:$0xf]
        %v2156 = vld [vmem:[%s2116 + $0x9c] sm:$0xf]
        %v2157 = vld [vmem:[%s2116 + $0xa0] sm:$0xf]
        %v2158 = vld [vmem:[%s2116 + $0xa4] sm:$0xf]
        %v2159 = vld [vmem:[%s2116 + $0xa8] sm:$0xf]
        %v2160 = vld [vmem:[%s2116 + $0xac] sm:$0xf]
        %v2161 = vld [vmem:[%s2116 + $0xb0] sm:$0xf]
        %v2162 = vld [vmem:[%s2116 + $0xb4] sm:$0xf]
        %v2163 = vld [vmem:[%s2116 + $0xb8] sm:$0xf]
        %v2164 = vld [vmem:[%s2116 + $0xbc] sm:$0xf]
        %s2165 = scalar_lea.vmem %s5, 1
        %v2166 = vld [vmem:[%s2165] sm:$0x1]
        %v2168 = vlaneseq
        %v2169 = vshrl.u32 %v2168, 7
        %v2170 = vsub.s32 0, %v2169
        %v2171 = vrot.slane %v2166, %v2170
        %v2221 = vunpack.c.l.b16 %v2117
        %v2222 = vunpack.c.l.b16 %v2118
        %v2223 = vunpack.c.l.b16 %v2119
        %v2224 = vunpack.c.l.b16 %v2120
        %v2225 = vunpack.c.l.b16 %v2121
        %v2226 = vunpack.c.l.b16 %v2122
        %v2227 = vunpack.c.l.b16 %v2123
        %v2228 = vunpack.c.l.b16 %v2124
        %v2229 = vunpack.c.l.b16 %v2125
        %v2230 = vunpack.c.l.b16 %v2126
        %v2231 = vunpack.c.l.b16 %v2127
        %v2232 = vunpack.c.l.b16 %v2128
        %v2233 = vunpack.c.l.b16 %v2129
        %v2234 = vunpack.c.l.b16 %v2130
        %v2235 = vunpack.c.l.b16 %v2131
        %v2236 = vunpack.c.l.b16 %v2132
        %v2237 = vunpack.c.l.b16 %v2133
        %v2238 = vunpack.c.l.b16 %v2134
        %v2239 = vunpack.c.l.b16 %v2135
        %v2240 = vunpack.c.l.b16 %v2136
        %v2241 = vunpack.c.l.b16 %v2137
        %v2242 = vunpack.c.l.b16 %v2138
        %v2243 = vunpack.c.l.b16 %v2139
        %v2244 = vunpack.c.l.b16 %v2140
        %v2245 = vunpack.c.l.b16 %v2141
        %v2246 = vunpack.c.l.b16 %v2142
        %v2247 = vunpack.c.l.b16 %v2143
        %v2248 = vunpack.c.l.b16 %v2144
        %v2249 = vunpack.c.l.b16 %v2145
        %v2250 = vunpack.c.l.b16 %v2146
        %v2251 = vunpack.c.l.b16 %v2147
        %v2252 = vunpack.c.l.b16 %v2148
        %v2253 = vunpack.c.l.b16 %v2149
        %v2254 = vunpack.c.l.b16 %v2150
        %v2255 = vunpack.c.l.b16 %v2151
        %v2256 = vunpack.c.l.b16 %v2152
        %v2257 = vunpack.c.l.b16 %v2153
        %v2258 = vunpack.c.l.b16 %v2154
        %v2259 = vunpack.c.l.b16 %v2155
        %v2260 = vunpack.c.l.b16 %v2156
        %v2261 = vunpack.c.l.b16 %v2157
        %v2262 = vunpack.c.l.b16 %v2158
        %v2263 = vunpack.c.l.b16 %v2159
        %v2264 = vunpack.c.l.b16 %v2160
        %v2265 = vunpack.c.l.b16 %v2161
        %v2266 = vunpack.c.l.b16 %v2162
        %v2267 = vunpack.c.l.b16 %v2163
        %v2268 = vunpack.c.l.b16 %v2164
        %v2269 = vpack.c.b16 %v2222, %v2221
        %v2270 = vpack.c.b16 %v2224, %v2223
        %v2271 = vpack.c.b16 %v2226, %v2225
        %v2272 = vpack.c.b16 %v2228, %v2227
        %v2273 = vpack.c.b16 %v2230, %v2229
        %v2274 = vpack.c.b16 %v2232, %v2231
        %v2275 = vpack.c.b16 %v2234, %v2233
        %v2276 = vpack.c.b16 %v2236, %v2235
        %v2277 = vpack.c.b16 %v2238, %v2237
        %v2278 = vpack.c.b16 %v2240, %v2239
        %v2279 = vpack.c.b16 %v2242, %v2241
        %v2280 = vpack.c.b16 %v2244, %v2243
        %v2281 = vpack.c.b16 %v2246, %v2245
        %v2282 = vpack.c.b16 %v2248, %v2247
        %v2283 = vpack.c.b16 %v2250, %v2249
        %v2284 = vpack.c.b16 %v2252, %v2251
        %v2285 = vpack.c.b16 %v2254, %v2253
        %v2286 = vpack.c.b16 %v2256, %v2255
        %v2287 = vpack.c.b16 %v2258, %v2257
        %v2288 = vpack.c.b16 %v2260, %v2259
        %v2289 = vpack.c.b16 %v2262, %v2261
        %v2290 = vpack.c.b16 %v2264, %v2263
        %v2291 = vpack.c.b16 %v2266, %v2265
        %v2292 = vpack.c.b16 %v2268, %v2267
        %2317 = vmatprep.subr.bf16.mxu0 0
        %2318 = vmatpush1.bf16.msra.mxu0 %v2269
        %2319 = vmatprep.subr.bf16.mxu0 0
        %2320 = vmatpush1.bf16.msra.mxu0 %v2270
        %2321 = vmatprep.subr.bf16.mxu0 0
        %2322 = vmatpush1.bf16.msra.mxu0 %v2271
        %2323 = vmatprep.subr.bf16.mxu0 0
        %2324 = vmatpush1.bf16.msra.mxu0 %v2272
        %2325 = vmatprep.subr.bf16.mxu0 0
        %2326 = vmatpush1.bf16.msra.mxu0 %v2273
        %2327 = vmatprep.subr.bf16.mxu0 0
        %2328 = vmatpush1.bf16.msra.mxu0 %v2274
        %2329 = vmatprep.subr.bf16.mxu0 0
        %2330 = vmatpush1.bf16.msra.mxu0 %v2275
        %2331 = vmatprep.subr.bf16.mxu0 0
        %2332 = vmatpush1.bf16.msra.mxu0 %v2276
        %2333 = vmatprep.subr.bf16.mxu0 0
        %2334 = vmatpush1.bf16.msra.mxu0 %v2277
        %2335 = vmatprep.subr.bf16.mxu0 0
        %2336 = vmatpush1.bf16.msra.mxu0 %v2278
        %2337 = vmatprep.subr.bf16.mxu0 0
        %2338 = vmatpush1.bf16.msra.mxu0 %v2279
        %2339 = vmatprep.subr.bf16.mxu0 0
        %2340 = vmatpush1.bf16.msra.mxu0 %v2280
        %2341 = vmatprep.subr.bf16.mxu0 0
        %2342 = vmatpush1.bf16.msra.mxu0 %v2281
        %2343 = vmatprep.subr.bf16.mxu0 0
        %2344 = vmatpush1.bf16.msra.mxu0 %v2282
        %2345 = vmatprep.subr.bf16.mxu0 0
        %2346 = vmatpush1.bf16.msra.mxu0 %v2283
        %2347 = vmatprep.subr.bf16.mxu0 0
        %2348 = vmatpush1.bf16.msra.mxu0 %v2284
        %2349 = vmatprep.mubr.bf16.mxu0 %v2100
        %2350 = vmatmul.mubr.bf16.gmra.mrb[0].mxu0 %v2100
        %v2351 = vpop.f32.mrb[0].mxu0
        %v2352 = vadd.f32 %v2171, %v2351
        %v2353 = vpop.f32.mrb[0].mxu0
        %v2354 = vpop.f32.mrb[0].mxu0
        %v2355 = vadd.f32 %v2171, %v2354
        %v2356 = vpop.f32.mrb[0].mxu0
        %2357 = vmatprep.mubr.bf16.mxu0 %v2101
        %2358 = vmatmul.mubr.bf16.gmra.mrb[0].mxu0 %v2101
        %v2359 = vpop.f32.mrb[0].mxu0
        %v2360 = vadd.f32 %v2171, %v2359
        %v2361 = vpop.f32.mrb[0].mxu0
        %v2362 = vpop.f32.mrb[0].mxu0
        %v2363 = vadd.f32 %v2171, %v2362
        %v2364 = vpop.f32.mrb[0].mxu0
        %2365 = vmatprep.mubr.bf16.mxu0 %v2102
        %2366 = vmatmul.mubr.bf16.gmra.mrb[0].mxu0 %v2102
        %v2367 = vpop.f32.mrb[0].mxu0
        %v2368 = vadd.f32 %v2171, %v2367
        %v2369 = vpop.f32.mrb[0].mxu0
        %v2370 = vpop.f32.mrb[0].mxu0
        %v2371 = vadd.f32 %v2171, %v2370
        %v2372 = vpop.f32.mrb[0].mxu0
        %2373 = vmatprep.mubr.bf16.mxu0 %v2103
        %2374 = vmatmul.mubr.bf16.gmra.mrb[0].mxu0 %v2103
        %v2375 = vpop.f32.mrb[0].mxu0
        %v2376 = vadd.f32 %v2171, %v2375
        %v2377 = vpop.f32.mrb[0].mxu0
        %v2378 = vpop.f32.mrb[0].mxu0
        %v2379 = vadd.f32 %v2171, %v2378
        %v2380 = vpop.f32.mrb[0].mxu0
        %2381 = vmatprep.mubr.bf16.mxu0 %v2104
        %2382 = vmatmul.mubr.bf16.gmra.mrb[0].mxu0 %v2100
        %v2383 = vpop.f32.mrb[0].mxu0
        %v2384 = vadd.f32 %v2171, %v2383
        %v2385 = vpop.f32.mrb[0].mxu0
        %v2386 = vpop.f32.mrb[0].mxu0
        %v2387 = vadd.f32 %v2171, %v2386
        %v2388 = vpop.f32.mrb[0].mxu0
        %2389 = vmatprep.mubr.bf16.mxu0 %v2105
        %2390 = vmatmul.mubr.bf16.gmra.mrb[0].mxu0 %v2101
        %v2391 = vpop.f32.mrb[0].mxu0
        %v2392 = vadd.f32 %v2171, %v2391
        %v2393 = vpop.f32.mrb[0].mxu0
        %v2394 = vpop.f32.mrb[0].mxu0
        %v2395 = vadd.f32 %v2171, %v2394
        %v2396 = vpop.f32.mrb[0].mxu0
        %2397 = vmatprep.mubr.bf16.mxu0 %v2106
        %2398 = vmatmul.mubr.bf16.gmra.mrb[0].mxu0 %v2102
        %v2399 = vpop.f32.mrb[0].mxu0
        %v2400 = vadd.f32 %v2171, %v2399
        %v2401 = vpop.f32.mrb[0].mxu0
        %v2402 = vpop.f32.mrb[0].mxu0
        %v2403 = vadd.f32 %v2171, %v2402
        %v2404 = vpop.f32.mrb[0].mxu0
        %2405 = vmatprep.mubr.bf16.mxu0 %v2107
        %2406 = vmatmul.mubr.bf16.gmra.mrb[0].mxu0 %v2103
        %v2407 = vpop.f32.mrb[0].mxu0
        %v2408 = vadd.f32 %v2171, %v2407
        %v2409 = vpop.f32.mrb[0].mxu0
        %v2410 = vpop.f32.mrb[0].mxu0
        %v2411 = vadd.f32 %v2171, %v2410
        %v2412 = vpop.f32.mrb[0].mxu0
        %2413 = vmatprep.mubr.bf16.mxu0 %v2108
        %2414 = vmatmul.mubr.bf16.gmra.mrb[0].mxu0 %v2104
        %v2415 = vpop.f32.mrb[0].mxu0
        %v2416 = vadd.f32 %v2171, %v2415
        %v2417 = vpop.f32.mrb[0].mxu0
        %v2418 = vpop.f32.mrb[0].mxu0
        %v2419 = vadd.f32 %v2171, %v2418
        %v2420 = vpop.f32.mrb[0].mxu0
        %2421 = vmatprep.mubr.bf16.mxu0 %v2109
        %2422 = vmatmul.mubr.bf16.gmra.mrb[0].mxu0 %v2105
        %v2423 = vpop.f32.mrb[0].mxu0
        %v2424 = vadd.f32 %v2171, %v2423
        %v2425 = vpop.f32.mrb[0].mxu0
        %v2426 = vpop.f32.mrb[0].mxu0
        %v2427 = vadd.f32 %v2171, %v2426
        %v2428 = vpop.f32.mrb[0].mxu0
        %2429 = vmatprep.mubr.bf16.mxu0 %v2110
        %2430 = vmatmul.mubr.bf16.gmra.mrb[0].mxu0 %v2106
        %v2431 = vpop.f32.mrb[0].mxu0
        %v2432 = vadd.f32 %v2171, %v2431
        %v2433 = vpop.f32.mrb[0].mxu0
        %v2434 = vpop.f32.mrb[0].mxu0
        %v2435 = vadd.f32 %v2171, %v2434
        %v2436 = vpop.f32.mrb[0].mxu0
        %2437 = vmatprep.mubr.bf16.mxu0 %v2111
        %2438 = vmatmul.mubr.bf16.gmra.mrb[0].mxu0 %v2107
        %v2439 = vpop.f32.mrb[0].mxu0
        %v2440 = vadd.f32 %v2171, %v2439
        %v2441 = vpop.f32.mrb[0].mxu0
        %v2442 = vpop.f32.mrb[0].mxu0
        %v2443 = vadd.f32 %v2171, %v2442
        %v2444 = vpop.f32.mrb[0].mxu0
        %2445 = vmatprep.mubr.bf16.mxu0 %v2112
        %2446 = vmatmul.mubr.bf16.gmra.mrb[0].mxu0 %v2108
        %v2447 = vpop.f32.mrb[0].mxu0
        %v2448 = vadd.f32 %v2171, %v2447
        %v2449 = vpop.f32.mrb[0].mxu0
        %v2450 = vpop.f32.mrb[0].mxu0
        %v2451 = vadd.f32 %v2171, %v2450
        %v2452 = vpop.f32.mrb[0].mxu0
        %2453 = vmatprep.mubr.bf16.mxu0 %v2113
        %2454 = vmatmul.mubr.bf16.gmra.mrb[0].mxu0 %v2109
        %v2455 = vpop.f32.mrb[0].mxu0
        %v2456 = vadd.f32 %v2171, %v2455
        %v2457 = vpop.f32.mrb[0].mxu0
        %v2458 = vpop.f32.mrb[0].mxu0
        %v2459 = vadd.f32 %v2171, %v2458
        %v2460 = vpop.f32.mrb[0].mxu0
        %2461 = vmatprep.mubr.bf16.mxu0 %v2114
        %2462 = vmatmul.mubr.bf16.gmra.mrb[0].mxu0 %v2110
        %v2463 = vpop.f32.mrb[0].mxu0
        %v2464 = vadd.f32 %v2171, %v2463
        %v2465 = vpop.f32.mrb[0].mxu0
        %v2466 = vpop.f32.mrb[0].mxu0
        %v2467 = vadd.f32 %v2171, %v2466
        %v2468 = vpop.f32.mrb[0].mxu0
        %2469 = vmatprep.mubr.bf16.mxu0 %v2115
        %2470 = vmatmul.mubr.bf16.gmra.mrb[0].mxu0 %v2111
        %v2471 = vpop.f32.mrb[0].mxu0
        %v2472 = vadd.f32 %v2171, %v2471
        %v2473 = vpop.f32.mrb[0].mxu0
        %v2474 = vpop.f32.mrb[0].mxu0
        %v2475 = vadd.f32 %v2171, %v2474
        %v2476 = vpop.f32.mrb[0].mxu0
        %2477 = vdwg.mxu0
        %2478 = vmatprep.subr.bf16.mxu0 0
        %2479 = vmatpush1.bf16.msra.mxu0 %v2285
        %2480 = vmatprep.subr.bf16.mxu0 0
        %2481 = vmatpush1.bf16.msra.mxu0 %v2286
        %2482 = vmatprep.subr.bf16.mxu0 0
        %2483 = vmatpush1.bf16.msra.mxu0 %v2287
        %2484 = vmatprep.subr.bf16.mxu0 0
        %2485 = vmatpush1.bf16.msra.mxu0 %v2288
        %2486 = vmatprep.subr.bf16.mxu0 0
        %2487 = vmatpush1.bf16.msra.mxu0 %v2289
        %2488 = vmatprep.subr.bf16.mxu0 0
        %2489 = vmatpush1.bf16.msra.mxu0 %v2290
        %2490 = vmatprep.subr.bf16.mxu0 0
        %2491 = vmatpush1.bf16.msra.mxu0 %v2291
        %2492 = vmatprep.subr.bf16.mxu0 0
        %2493 = vmatpush1.bf16.msra.mxu0 %v2292
        %2494 = vmatprep.subr.bf16.mxu0 0
        %2495 = vmatpush1.bf16.msra.mxu0 0
        %2496 = vmatprep.subr.bf16.mxu0 0
        %2497 = vmatpush1.bf16.msra.mxu0 0
        %2498 = vmatprep.subr.bf16.mxu0 0
        %2499 = vmatpush1.bf16.msra.mxu0 0
        %2500 = vmatprep.subr.bf16.mxu0 0
        %2501 = vmatpush1.bf16.msra.mxu0 0
        %2502 = vmatprep.subr.bf16.mxu0 0
        %2503 = vmatpush1.bf16.msra.mxu0 0
        %2504 = vmatprep.subr.bf16.mxu0 0
        %2505 = vmatpush1.bf16.msra.mxu0 0
        %2506 = vmatprep.subr.bf16.mxu0 0
        %2507 = vmatpush1.bf16.msra.mxu0 0
        %2508 = vmatprep.subr.bf16.mxu0 0
        %2509 = vmatpush1.bf16.msra.mxu0 0
        %2510 = vmatprep.mubr.bf16.mxu0 0
        %2511 = vmatmul.mubr.bf16.gmra.mrb[0].mxu0 %v2104
        %v2512 = vpop.f32.mrb[0].mxu0
        %v2513 = vadd.f32 %v2352, %v2512
        %v2514 = vpop.f32.mrb[0].mxu0
        %v2515 = vpop.f32.mrb[0].mxu0
        %v2516 = vadd.f32 %v2355, %v2515
        %v2517 = vpop.f32.mrb[0].mxu0
        %2518 = vmatprep.mubr.bf16.mxu0 0
        %2519 = vmatmul.mubr.bf16.gmra.mrb[0].mxu0 %v2105
        %v2520 = vpop.f32.mrb[0].mxu0
        %v2521 = vadd.f32 %v2360, %v2520
        %v2522 = vpop.f32.mrb[0].mxu0
        %v2523 = vpop.f32.mrb[0].mxu0
        %v2524 = vadd.f32 %v2363, %v2523
        %v2525 = vpop.f32.mrb[0].mxu0
        %2526 = vmatprep.mubr.bf16.mxu0 0
        %2527 = vmatmul.mubr.bf16.gmra.mrb[0].mxu0 %v2106
        %v2528 = vpop.f32.mrb[0].mxu0
        %v2529 = vadd.f32 %v2368, %v2528
        %v2530 = vpop.f32.mrb[0].mxu0
        %v2531 = vpop.f32.mrb[0].mxu0
        %v2532 = vadd.f32 %v2371, %v2531
        %v2533 = vpop.f32.mrb[0].mxu0
        %2534 = vmatprep.mubr.bf16.mxu0 0
        %2535 = vmatmul.mubr.bf16.gmra.mrb[0].mxu0 %v2107
        %v2536 = vpop.f32.mrb[0].mxu0
        %v2537 = vadd.f32 %v2376, %v2536
        %v2538 = vpop.f32.mrb[0].mxu0
        %v2539 = vpop.f32.mrb[0].mxu0
        %v2540 = vadd.f32 %v2379, %v2539
        %v2541 = vpop.f32.mrb[0].mxu0
        %2542 = vmatprep.mubr.bf16.mxu0 0
        %2543 = vmatmul.mubr.bf16.gmra.mrb[0].mxu0 %v2108
        %v2544 = vpop.f32.mrb[0].mxu0
        %v2545 = vadd.f32 %v2384, %v2544
        %v2546 = vpop.f32.mrb[0].mxu0
        %v2547 = vpop.f32.mrb[0].mxu0
        %v2548 = vadd.f32 %v2387, %v2547
        %v2549 = vpop.f32.mrb[0].mxu0
        %2550 = vmatprep.mubr.bf16.mxu0 0
        %2551 = vmatmul.mubr.bf16.gmra.mrb[0].mxu0 %v2109
        %v2552 = vpop.f32.mrb[0].mxu0
        %v2553 = vadd.f32 %v2392, %v2552
        %v2554 = vpop.f32.mrb[0].mxu0
        %v2555 = vpop.f32.mrb[0].mxu0
        %v2556 = vadd.f32 %v2395, %v2555
        %v2557 = vpop.f32.mrb[0].mxu0
        %2558 = vmatprep.mubr.bf16.mxu0 0
        %2559 = vmatmul.mubr.bf16.gmra.mrb[0].mxu0 %v2110
        %v2560 = vpop.f32.mrb[0].mxu0
        %v2561 = vadd.f32 %v2400, %v2560
        %v2562 = vpop.f32.mrb[0].mxu0
        %v2563 = vpop.f32.mrb[0].mxu0
        %v2564 = vadd.f32 %v2403, %v2563
        %v2565 = vpop.f32.mrb[0].mxu0
        %2566 = vmatprep.mubr.bf16.mxu0 0
        %2567 = vmatmul.mubr.bf16.gmra.mrb[0].mxu0 %v2111
        %v2568 = vpop.f32.mrb[0].mxu0
        %v2569 = vadd.f32 %v2408, %v2568
        %v2570 = vpop.f32.mrb[0].mxu0
        %v2571 = vpop.f32.mrb[0].mxu0
        %v2572 = vadd.f32 %v2411, %v2571
        %v2573 = vpop.f32.mrb[0].mxu0
        %2574 = vmatprep.mubr.bf16.mxu0 0
        %2575 = vmatmul.mubr.bf16.gmra.mrb[0].mxu0 %v2112
        %v2576 = vpop.f32.mrb[0].mxu0
        %v2577 = vadd.f32 %v2416, %v2576
        %v2578 = vpop.f32.mrb[0].mxu0
        %v2579 = vpop.f32.mrb[0].mxu0
        %v2580 = vadd.f32 %v2419, %v2579
        %v2581 = vpop.f32.mrb[0].mxu0
        %2582 = vmatprep.mubr.bf16.mxu0 0
        %2583 = vmatmul.mubr.bf16.gmra.mrb[0].mxu0 %v2113
        %v2584 = vpop.f32.mrb[0].mxu0
        %v2585 = vadd.f32 %v2424, %v2584
        %v2586 = vpop.f32.mrb[0].mxu0
        %v2587 = vpop.f32.mrb[0].mxu0
        %v2588 = vadd.f32 %v2427, %v2587
        %v2589 = vpop.f32.mrb[0].mxu0
        %2590 = vmatprep.mubr.bf16.mxu0 0
        %2591 = vmatmul.mubr.bf16.gmra.mrb[0].mxu0 %v2114
        %v2592 = vpop.f32.mrb[0].mxu0
        %v2593 = vadd.f32 %v2432, %v2592
        %v2594 = vpop.f32.mrb[0].mxu0
        %v2595 = vpop.f32.mrb[0].mxu0
        %v2596 = vadd.f32 %v2435, %v2595
        %v2597 = vpop.f32.mrb[0].mxu0
        %2598 = vmatprep.mubr.bf16.mxu0 0
        %2599 = vmatmul.mubr.bf16.gmra.mrb[0].mxu0 %v2115
        %v2600 = vpop.f32.mrb[0].mxu0
        %v2601 = vadd.f32 %v2440, %v2600
        %v2602 = vpop.f32.mrb[0].mxu0
        %v2603 = vpop.f32.mrb[0].mxu0
        %v2604 = vadd.f32 %v2443, %v2603
        %v2605 = vpop.f32.mrb[0].mxu0
        %2606 = vmatprep.mubr.bf16.mxu0 0
        %2607 = vmatmul.mubr.bf16.gmra.mrb[0].mxu0 %v2112
        %v2608 = vpop.f32.mrb[0].mxu0
        %v2609 = vadd.f32 %v2448, %v2608
        %v2610 = vpop.f32.mrb[0].mxu0
        %v2611 = vpop.f32.mrb[0].mxu0
        %v2612 = vadd.f32 %v2451, %v2611
        %v2613 = vpop.f32.mrb[0].mxu0
        %2614 = vmatprep.mubr.bf16.mxu0 0
        %2615 = vmatmul.mubr.bf16.gmra.mrb[0].mxu0 %v2113
        %v2616 = vpop.f32.mrb[0].mxu0
        %v2617 = vadd.f32 %v2456, %v2616
        %v2618 = vpop.f32.mrb[0].mxu0
        %v2619 = vpop.f32.mrb[0].mxu0
        %v2620 = vadd.f32 %v2459, %v2619
        %v2621 = vpop.f32.mrb[0].mxu0
        %2622 = vmatprep.mubr.bf16.mxu0 0
        %2623 = vmatmul.mubr.bf16.gmra.mrb[0].mxu0 %v2114
        %v2624 = vpop.f32.mrb[0].mxu0
        %v2625 = vadd.f32 %v2464, %v2624
        %v2626 = vpop.f32.mrb[0].mxu0
        %v2627 = vpop.f32.mrb[0].mxu0
        %v2628 = vadd.f32 %v2467, %v2627
        %v2629 = vpop.f32.mrb[0].mxu0
        %2630 = vmatprep.mubr.bf16.mxu0 0
        %2631 = vmatmul.mubr.bf16.gmra.mrb[0].mxu0 %v2115
        %v2632 = vpop.f32.mrb[0].mxu0
        %v2633 = vadd.f32 %v2472, %v2632
        %v2634 = vpop.f32.mrb[0].mxu0
        %v2635 = vpop.f32.mrb[0].mxu0
        %v2636 = vadd.f32 %v2475, %v2635
        %v2637 = vpop.f32.mrb[0].mxu0
        %2638 = vdwg.mxu0
        %2639 = vmatprep.subr.mxu0 0.0
        %2640 = vmatpush1.msra.mxu0 %v2513
        %2641 = vmatprep.subr.mxu0 0.0
        %2642 = vmatpush1.msra.mxu0 %v2516
        %2643 = vmatprep.subr.mxu0 0.0
        %2644 = vmatpush1.msra.mxu0 %v2521
        %2645 = vmatprep.subr.mxu0 0.0
        %2646 = vmatpush1.msra.mxu0 %v2524
        %2647 = vmatprep.subr.mxu0 0.0
        %2648 = vmatpush1.msra.mxu0 %v2529
        %2649 = vmatprep.subr.mxu0 0.0
        %2650 = vmatpush1.msra.mxu0 %v2532
        %2651 = vmatprep.subr.mxu0 0.0
        %2652 = vmatpush1.msra.mxu0 %v2537
        %2653 = vmatprep.subr.mxu0 0.0
        %2654 = vmatpush1.msra.mxu0 %v2540
        %2655 = vmatprep.subr.mxu0 0.0
        %2656 = vmatpush1.msra.mxu0 %v2545
        %2657 = vmatprep.subr.mxu0 0.0
        %2658 = vmatpush1.msra.mxu0 %v2548
        %2659 = vmatprep.subr.mxu0 0.0
        %2660 = vmatpush1.msra.mxu0 %v2553
        %2661 = vmatprep.subr.mxu0 0.0
        %2662 = vmatpush1.msra.mxu0 %v2556
        %2663 = vmatprep.subr.mxu0 0.0
        %2664 = vmatpush1.msra.mxu0 %v2561
        %2665 = vmatprep.subr.mxu0 0.0
        %2666 = vmatpush1.msra.mxu0 %v2564
        %2667 = vmatprep.subr.mxu0 0.0
        %2668 = vmatpush1.msra.mxu0 %v2569
        %2669 = vmatprep.subr.mxu0 0.0
        %2670 = vmatpush1.msra.mxu0 %v2572
        %2671 = vmatprep.subr.mxu0 0.0
        %2672 = vmatpush1.msra.mxu0 %v2577
        %2673 = vmatprep.subr.mxu0 0.0
        %2674 = vmatpush1.msra.mxu0 %v2580
        %2675 = vmatprep.subr.mxu0 0.0
        %2676 = vmatpush1.msra.mxu0 %v2585
        %2677 = vmatprep.subr.mxu0 0.0
        %2678 = vmatpush1.msra.mxu0 %v2588
        %2679 = vmatprep.subr.mxu0 0.0
        %2680 = vmatpush1.msra.mxu0 %v2593
        %2681 = vmatprep.subr.mxu0 0.0
        %2682 = vmatpush1.msra.mxu0 %v2596
        %2683 = vmatprep.subr.mxu0 0.0
        %2684 = vmatpush1.msra.mxu0 %v2601
        %2685 = vmatprep.subr.mxu0 0.0
        %2686 = vmatpush1.msra.mxu0 %v2604
        %2687 = vmatprep.subr.mxu0 0.0
        %2688 = vmatpush1.msra.mxu0 %v2609
        %2689 = vmatprep.subr.mxu0 0.0
        %2690 = vmatpush1.msra.mxu0 %v2612
        %2691 = vmatprep.subr.mxu0 0.0
        %2692 = vmatpush1.msra.mxu0 %v2617
        %2693 = vmatprep.subr.mxu0 0.0
        %2694 = vmatpush1.msra.mxu0 %v2620
        %2695 = vmatprep.subr.mxu0 0.0
        %2696 = vmatpush1.msra.mxu0 %v2625
        %2697 = vmatprep.subr.mxu0 0.0
        %2698 = vmatpush1.msra.mxu0 %v2628
        %2699 = vmatprep.subr.mxu0 0.0
        %2700 = vmatpush1.msra.mxu0 %v2633
        %2701 = vmatprep.subr.mxu0 0.0
        %2702 = vmatpush1.msra.mxu0 %v2636
        %2703 = vmatprep.mubr.f32.mxu0 %v368
        %2704 = vmatmul.mubr.f32.gmra.mrb[0].mxu0 %v367
        %v2705 = vpop.f32.mrb[0].mxu0
        %v2706 = vadd.f32 0.0, %v2705
        %v2707 = vpop.f32.mrb[0].mxu0
        %2708 = vdwg.mxu0
        %v2709 = vmul.f32 %v2513, %v2513
        %v2710 = vmul.f32 %v2516, %v2516
        %v2711 = vmul.f32 %v2521, %v2521
        %v2712 = vmul.f32 %v2524, %v2524
        %v2713 = vmul.f32 %v2529, %v2529
        %v2714 = vmul.f32 %v2532, %v2532
        %v2715 = vmul.f32 %v2537, %v2537
        %v2716 = vmul.f32 %v2540, %v2540
        %v2717 = vmul.f32 %v2545, %v2545
        %v2718 = vmul.f32 %v2548, %v2548
        %v2719 = vmul.f32 %v2553, %v2553
        %v2720 = vmul.f32 %v2556, %v2556
        %v2721 = vmul.f32 %v2561, %v2561
        %v2722 = vmul.f32 %v2564, %v2564
        %v2723 = vmul.f32 %v2569, %v2569
        %v2724 = vmul.f32 %v2572, %v2572
        %v2725 = vmul.f32 %v2577, %v2577
        %v2726 = vmul.f32 %v2580, %v2580
        %v2727 = vmul.f32 %v2585, %v2585
        %v2728 = vmul.f32 %v2588, %v2588
        %v2729 = vmul.f32 %v2593, %v2593
        %v2730 = vmul.f32 %v2596, %v2596
        %v2731 = vmul.f32 %v2601, %v2601
        %v2732 = vmul.f32 %v2604, %v2604
        %v2733 = vmul.f32 %v2609, %v2609
        %v2734 = vmul.f32 %v2612, %v2612
        %v2735 = vmul.f32 %v2617, %v2617
        %v2736 = vmul.f32 %v2620, %v2620
        %v2737 = vmul.f32 %v2625, %v2625
        %v2738 = vmul.f32 %v2628, %v2628
        %v2739 = vmul.f32 %v2633, %v2633
        %v2740 = vmul.f32 %v2636, %v2636
        %2741 = vmatprep.subr.mxu0 0.0
        %2742 = vmatpush1.msra.mxu0 %v2709
        %2743 = vmatprep.subr.mxu0 0.0
        %2744 = vmatpush1.msra.mxu0 %v2710
        %2745 = vmatprep.subr.mxu0 0.0
        %2746 = vmatpush1.msra.mxu0 %v2711
        %2747 = vmatprep.subr.mxu0 0.0
        %2748 = vmatpush1.msra.mxu0 %v2712
        %2749 = vmatprep.subr.mxu0 0.0
        %2750 = vmatpush1.msra.mxu0 %v2713
        %2751 = vmatprep.subr.mxu0 0.0
        %2752 = vmatpush1.msra.mxu0 %v2714
        %2753 = vmatprep.subr.mxu0 0.0
        %2754 = vmatpush1.msra.mxu0 %v2715
        %2755 = vmatprep.subr.mxu0 0.0
        %2756 = vmatpush1.msra.mxu0 %v2716
        %2757 = vmatprep.subr.mxu0 0.0
        %2758 = vmatpush1.msra.mxu0 %v2717
        %2759 = vmatprep.subr.mxu0 0.0
        %2760 = vmatpush1.msra.mxu0 %v2718
        %2761 = vmatprep.subr.mxu0 0.0
        %2762 = vmatpush1.msra.mxu0 %v2719
        %2763 = vmatprep.subr.mxu0 0.0
        %2764 = vmatpush1.msra.mxu0 %v2720
        %2765 = vmatprep.subr.mxu0 0.0
        %2766 = vmatpush1.msra.mxu0 %v2721
        %2767 = vmatprep.subr.mxu0 0.0
        %2768 = vmatpush1.msra.mxu0 %v2722
        %2769 = vmatprep.subr.mxu0 0.0
        %2770 = vmatpush1.msra.mxu0 %v2723
        %2771 = vmatprep.subr.mxu0 0.0
        %2772 = vmatpush1.msra.mxu0 %v2724
        %2773 = vmatprep.subr.mxu0 0.0
        %2774 = vmatpush1.msra.mxu0 %v2725
        %2775 = vmatprep.subr.mxu0 0.0
        %2776 = vmatpush1.msra.mxu0 %v2726
        %2777 = vmatprep.subr.mxu0 0.0
        %2778 = vmatpush1.msra.mxu0 %v2727
        %2779 = vmatprep.subr.mxu0 0.0
        %2780 = vmatpush1.msra.mxu0 %v2728
        %2781 = vmatprep.subr.mxu0 0.0
        %2782 = vmatpush1.msra.mxu0 %v2729
        %2783 = vmatprep.subr.mxu0 0.0
        %2784 = vmatpush1.msra.mxu0 %v2730
        %2785 = vmatprep.subr.mxu0 0.0
        %2786 = vmatpush1.msra.mxu0 %v2731
        %2787 = vmatprep.subr.mxu0 0.0
        %2788 = vmatpush1.msra.mxu0 %v2732
        %2789 = vmatprep.subr.mxu0 0.0
        %2790 = vmatpush1.msra.mxu0 %v2733
        %2791 = vmatprep.subr.mxu0 0.0
        %2792 = vmatpush1.msra.mxu0 %v2734
        %2793 = vmatprep.subr.mxu0 0.0
        %2794 = vmatpush1.msra.mxu0 %v2735
        %2795 = vmatprep.subr.mxu0 0.0
        %2796 = vmatpush1.msra.mxu0 %v2736
        %2797 = vmatprep.subr.mxu0 0.0
        %2798 = vmatpush1.msra.mxu0 %v2737
        %2799 = vmatprep.subr.mxu0 0.0
        %2800 = vmatpush1.msra.mxu0 %v2738
        %2801 = vmatprep.subr.mxu0 0.0
        %2802 = vmatpush1.msra.mxu0 %v2739
        %2803 = vmatprep.subr.mxu0 0.0
        %2804 = vmatpush1.msra.mxu0 %v2740
        %2805 = vmatprep.mubr.f32.mxu0 %v368
        %2806 = vmatmul.mubr.f32.gmra.mrb[0].mxu0 %v367
        %v2807 = vpop.f32.mrb[0].mxu0
        %v2808 = vadd.f32 0.0, %v2807
        %v2809 = vpop.f32.mrb[0].mxu0
        %2810 = vdwg.mxu0
        %v2811 = vpack.c.bf16 %v2516, %v2513
        %v2812 = vpack.c.bf16 %v2524, %v2521
        %v2813 = vpack.c.bf16 %v2532, %v2529
        %v2814 = vpack.c.bf16 %v2540, %v2537
        %v2815 = vpack.c.bf16 %v2548, %v2545
        %v2816 = vpack.c.bf16 %v2556, %v2553
        %v2817 = vpack.c.bf16 %v2564, %v2561
        %v2818 = vpack.c.bf16 %v2572, %v2569
        %v2819 = vpack.c.bf16 %v2580, %v2577
        %v2820 = vpack.c.bf16 %v2588, %v2585
        %v2821 = vpack.c.bf16 %v2596, %v2593
        %v2822 = vpack.c.bf16 %v2604, %v2601
        %v2823 = vpack.c.bf16 %v2612, %v2609
        %v2824 = vpack.c.bf16 %v2620, %v2617
        %v2825 = vpack.c.bf16 %v2628, %v2625
        %v2826 = vpack.c.bf16 %v2636, %v2633
        %2827 = vmatprep.subr.mxu0 0.0
        %2828 = vmatpush1.msra.mxu0 %v332
        %2829 = vmatprep.subr.mxu0 0.0
        %2830 = vmatpush1.msra.mxu0 %v333
        %2831 = vmatprep.subr.mxu0 0.0
        %2832 = vmatpush1.msra.mxu0 %v334
        %2833 = vmatprep.subr.mxu0 0.0
        %2834 = vmatpush1.msra.mxu0 %v335
        %2835 = vmatprep.subr.mxu0 0.0
        %2836 = vmatpush1.msra.mxu0 %v336
        %2837 = vmatprep.subr.mxu0 0.0
        %2838 = vmatpush1.msra.mxu0 %v337
        %2839 = vmatprep.subr.mxu0 0.0
        %2840 = vmatpush1.msra.mxu0 %v338
        %2841 = vmatprep.subr.mxu0 0.0
        %2842 = vmatpush1.msra.mxu0 %v339
        %2843 = vmatprep.subr.mxu0 0.0
        %2844 = vmatpush1.msra.mxu0 %v340
        %2845 = vmatprep.subr.mxu0 0.0
        %2846 = vmatpush1.msra.mxu0 %v341
        %2847 = vmatprep.subr.mxu0 0.0
        %2848 = vmatpush1.msra.mxu0 %v342
        %2849 = vmatprep.subr.mxu0 0.0
        %2850 = vmatpush1.msra.mxu0 %v343
        %2851 = vmatprep.subr.mxu0 0.0
        %2852 = vmatpush1.msra.mxu0 %v344
        %2853 = vmatprep.subr.mxu0 0.0
        %2854 = vmatpush1.msra.mxu0 %v345
        %2855 = vmatprep.subr.mxu0 0.0
        %2856 = vmatpush1.msra.mxu0 %v346
        %2857 = vmatprep.subr.mxu0 0.0
        %2858 = vmatpush1.msra.mxu0 %v347
        %2859 = vmatprep.subr.mxu0 0.0
        %2860 = vmatpush1.msra.mxu0 0.0
        %2861 = vmatprep.subr.mxu0 0.0
        %2862 = vmatpush1.msra.mxu0 0.0
        %2863 = vmatprep.subr.mxu0 0.0
        %2864 = vmatpush1.msra.mxu0 0.0
        %2865 = vmatprep.subr.mxu0 0.0
        %2866 = vmatpush1.msra.mxu0 0.0
        %2867 = vmatprep.subr.mxu0 0.0
        %2868 = vmatpush1.msra.mxu0 0.0
        %2869 = vmatprep.subr.mxu0 0.0
        %2870 = vmatpush1.msra.mxu0 0.0
        %2871 = vmatprep.subr.mxu0 0.0
        %2872 = vmatpush1.msra.mxu0 0.0
        %2873 = vmatprep.subr.mxu0 0.0
        %2874 = vmatpush1.msra.mxu0 0.0
        %2875 = vmatprep.subr.mxu0 0.0
        %2876 = vmatpush1.msra.mxu0 0.0
        %2877 = vmatprep.subr.mxu0 0.0
        %2878 = vmatpush1.msra.mxu0 0.0
        %2879 = vmatprep.subr.mxu0 0.0
        %2880 = vmatpush1.msra.mxu0 0.0
        %2881 = vmatprep.subr.mxu0 0.0
        %2882 = vmatpush1.msra.mxu0 0.0
        %2883 = vmatprep.subr.mxu0 0.0
        %2884 = vmatpush1.msra.mxu0 0.0
        %2885 = vmatprep.subr.mxu0 0.0
        %2886 = vmatpush1.msra.mxu0 0.0
        %2887 = vmatprep.subr.mxu0 0.0
        %2888 = vmatpush1.msra.mxu0 0.0
        %2889 = vmatprep.subr.mxu0 0.0
        %2890 = vmatpush1.msra.mxu0 0.0
        %2891 = vmatprep.mubr.f32.mxu0 0.0
        %2892 = vmatmul.mubr.f32.gmra.mrb[0].mxu0 %v2706
        %v2893 = vpop.f32.mrb[0].mxu0
        %v2894 = vadd.f32 0.0, %v2893
        %v2895 = vpop.f32.mrb[0].mxu0
        %2896 = vdwg.mxu0
        %2897 = vmatprep.subr.mxu0 0.0
        %2898 = vmatpush1.msra.mxu0 %v332
        %2899 = vmatprep.subr.mxu0 0.0
        %2900 = vmatpush1.msra.mxu0 %v333
        %2901 = vmatprep.subr.mxu0 0.0
        %2902 = vmatpush1.msra.mxu0 %v334
        %2903 = vmatprep.subr.mxu0 0.0
        %2904 = vmatpush1.msra.mxu0 %v335
        %2905 = vmatprep.subr.mxu0 0.0
        %2906 = vmatpush1.msra.mxu0 %v336
        %2907 = vmatprep.subr.mxu0 0.0
        %2908 = vmatpush1.msra.mxu0 %v337
        %2909 = vmatprep.subr.mxu0 0.0
        %2910 = vmatpush1.msra.mxu0 %v338
        %2911 = vmatprep.subr.mxu0 0.0
        %2912 = vmatpush1.msra.mxu0 %v339
        %2913 = vmatprep.subr.mxu0 0.0
        %2914 = vmatpush1.msra.mxu0 %v340
        %2915 = vmatprep.subr.mxu0 0.0
        %2916 = vmatpush1.msra.mxu0 %v341
        %2917 = vmatprep.subr.mxu0 0.0
        %2918 = vmatpush1.msra.mxu0 %v342
        %2919 = vmatprep.subr.mxu0 0.0
        %2920 = vmatpush1.msra.mxu0 %v343
        %2921 = vmatprep.subr.mxu0 0.0
        %2922 = vmatpush1.msra.mxu0 %v344
        %2923 = vmatprep.subr.mxu0 0.0
        %2924 = vmatpush1.msra.mxu0 %v345
        %2925 = vmatprep.subr.mxu0 0.0
        %2926 = vmatpush1.msra.mxu0 %v346
        %2927 = vmatprep.subr.mxu0 0.0
        %2928 = vmatpush1.msra.mxu0 %v347
        %2929 = vmatprep.subr.mxu0 0.0
        %2930 = vmatpush1.msra.mxu0 0.0
        %2931 = vmatprep.subr.mxu0 0.0
        %2932 = vmatpush1.msra.mxu0 0.0
        %2933 = vmatprep.subr.mxu0 0.0
        %2934 = vmatpush1.msra.mxu0 0.0
        %2935 = vmatprep.subr.mxu0 0.0
        %2936 = vmatpush1.msra.mxu0 0.0
        %2937 = vmatprep.subr.mxu0 0.0
        %2938 = vmatpush1.msra.mxu0 0.0
        %2939 = vmatprep.subr.mxu0 0.0
        %2940 = vmatpush1.msra.mxu0 0.0
        %2941 = vmatprep.subr.mxu0 0.0
        %2942 = vmatpush1.msra.mxu0 0.0
        %2943 = vmatprep.subr.mxu0 0.0
        %2944 = vmatpush1.msra.mxu0 0.0
        %2945 = vmatprep.subr.mxu0 0.0
        %2946 = vmatpush1.msra.mxu0 0.0
        %2947 = vmatprep.subr.mxu0 0.0
        %2948 = vmatpush1.msra.mxu0 0.0
        %2949 = vmatprep.subr.mxu0 0.0
        %2950 = vmatpush1.msra.mxu0 0.0
        %2951 = vmatprep.subr.mxu0 0.0
        %2952 = vmatpush1.msra.mxu0 0.0
        %2953 = vmatprep.subr.mxu0 0.0
        %2954 = vmatpush1.msra.mxu0 0.0
        %2955 = vmatprep.subr.mxu0 0.0
        %2956 = vmatpush1.msra.mxu0 0.0
        %2957 = vmatprep.subr.mxu0 0.0
        %2958 = vmatpush1.msra.mxu0 0.0
        %2959 = vmatprep.subr.mxu0 0.0
        %2960 = vmatpush1.msra.mxu0 0.0
        %2961 = vmatprep.mubr.f32.mxu0 0.0
        %2962 = vmatmul.mubr.f32.gmra.mrb[0].mxu0 %v2808
        %v2963 = vpop.f32.mrb[0].mxu0
        %v2964 = vadd.f32 0.0, %v2963
        %v2965 = vpop.f32.mrb[0].mxu0
        %2966 = vdwg.mxu0
        %v2967 = vmul.f32 %v2894, %v2894
        %v2968 = vsub.f32 %v2964, %v2967
        %v2969 = vmax.f32 %v2968, 0.0
        %v2970 = vadd.f32 %v2969, 1e-05
        %v2971 = vrsqrt.pop %v2970
        %s2972 = scalar_lea.vmem %s2, 2
        %v2973 = vld [vmem:[%s2972] sm:$0x1]
        %v2974 = vmul.f32 %v2971, %v2973
        %s2975 = scalar_lea.vmem %s3, 2
        %v2976 = vld [vmem:[%s2975] sm:$0x1]
        %v2977 = vmul.f32 %v2894, %v2974
        %v2978 = vsub.f32 %v2976, %v2977
        %v2979 = vunpack.c.l.bf16 %v2811
        %v2980 = vunpack.c.h.bf16 %v2811
        %v2981 = vunpack.c.l.bf16 %v2812
        %v2982 = vunpack.c.h.bf16 %v2812
        %v2983 = vunpack.c.l.bf16 %v2813
        %v2984 = vunpack.c.h.bf16 %v2813
        %v2985 = vunpack.c.l.bf16 %v2814
        %v2986 = vunpack.c.h.bf16 %v2814
        %v2987 = vunpack.c.l.bf16 %v2815
        %v2988 = vunpack.c.h.bf16 %v2815
        %v2989 = vunpack.c.l.bf16 %v2816
        %v2990 = vunpack.c.h.bf16 %v2816
        %v2991 = vunpack.c.l.bf16 %v2817
        %v2992 = vunpack.c.h.bf16 %v2817
        %v2993 = vunpack.c.l.bf16 %v2818
        %v2994 = vunpack.c.h.bf16 %v2818
        %v2995 = vunpack.c.l.bf16 %v2819
        %v2996 = vunpack.c.h.bf16 %v2819
        %v2997 = vunpack.c.l.bf16 %v2820
        %v2998 = vunpack.c.h.bf16 %v2820
        %v2999 = vunpack.c.l.bf16 %v2821
        %v3000 = vunpack.c.h.bf16 %v2821
        %v3001 = vunpack.c.l.bf16 %v2822
        %v3002 = vunpack.c.h.bf16 %v2822
        %v3003 = vunpack.c.l.bf16 %v2823
        %v3004 = vunpack.c.h.bf16 %v2823
        %v3005 = vunpack.c.l.bf16 %v2824
        %v3006 = vunpack.c.h.bf16 %v2824
        %v3007 = vunpack.c.l.bf16 %v2825
        %v3008 = vunpack.c.h.bf16 %v2825
        %v3009 = vunpack.c.l.bf16 %v2826
        %v3010 = vunpack.c.h.bf16 %v2826
        %v3011 = vlaneseq
        %v3012 = vshrl.u32 %v3011, 7
        %v3013 = vsub.s32 0, %v3012
        %v3014 = vrot.slane %v2974, %v3013
        %v3015 = vmul.f32 %v2979, %v3014
        %v3016 = vmul.f32 %v2980, %v3014
        %v3017 = vmul.f32 %v2981, %v3014
        %v3018 = vmul.f32 %v2982, %v3014
        %v3019 = vmul.f32 %v2983, %v3014
        %v3020 = vmul.f32 %v2984, %v3014
        %v3021 = vmul.f32 %v2985, %v3014
        %v3022 = vmul.f32 %v2986, %v3014
        %v3023 = vmul.f32 %v2987, %v3014
        %v3024 = vmul.f32 %v2988, %v3014
        %v3025 = vmul.f32 %v2989, %v3014
        %v3026 = vmul.f32 %v2990, %v3014
        %v3027 = vmul.f32 %v2991, %v3014
        %v3028 = vmul.f32 %v2992, %v3014
        %v3029 = vmul.f32 %v2993, %v3014
        %v3030 = vmul.f32 %v2994, %v3014
        %v3031 = vmul.f32 %v2995, %v3014
        %v3032 = vmul.f32 %v2996, %v3014
        %v3033 = vmul.f32 %v2997, %v3014
        %v3034 = vmul.f32 %v2998, %v3014
        %v3035 = vmul.f32 %v2999, %v3014
        %v3036 = vmul.f32 %v3000, %v3014
        %v3037 = vmul.f32 %v3001, %v3014
        %v3038 = vmul.f32 %v3002, %v3014
        %v3039 = vmul.f32 %v3003, %v3014
        %v3040 = vmul.f32 %v3004, %v3014
        %v3041 = vmul.f32 %v3005, %v3014
        %v3042 = vmul.f32 %v3006, %v3014
        %v3043 = vmul.f32 %v3007, %v3014
        %v3044 = vmul.f32 %v3008, %v3014
        %v3045 = vmul.f32 %v3009, %v3014
        %v3046 = vmul.f32 %v3010, %v3014
        %v3048 = vlaneseq
        %v3049 = vshrl.u32 %v3048, 7
        %v3050 = vsub.s32 0, %v3049
        %v3051 = vrot.slane %v2978, %v3050
        %v3053 = vadd.f32 %v3015, %v3051
        %v3054 = vadd.f32 %v3016, %v3051
        %v3055 = vadd.f32 %v3017, %v3051
        %v3056 = vadd.f32 %v3018, %v3051
        %v3057 = vadd.f32 %v3019, %v3051
        %v3058 = vadd.f32 %v3020, %v3051
        %v3059 = vadd.f32 %v3021, %v3051
        %v3060 = vadd.f32 %v3022, %v3051
        %v3061 = vadd.f32 %v3023, %v3051
        %v3062 = vadd.f32 %v3024, %v3051
        %v3063 = vadd.f32 %v3025, %v3051
        %v3064 = vadd.f32 %v3026, %v3051
        %v3065 = vadd.f32 %v3027, %v3051
        %v3066 = vadd.f32 %v3028, %v3051
        %v3067 = vadd.f32 %v3029, %v3051
        %v3068 = vadd.f32 %v3030, %v3051
        %v3069 = vadd.f32 %v3031, %v3051
        %v3070 = vadd.f32 %v3032, %v3051
        %v3071 = vadd.f32 %v3033, %v3051
        %v3072 = vadd.f32 %v3034, %v3051
        %v3073 = vadd.f32 %v3035, %v3051
        %v3074 = vadd.f32 %v3036, %v3051
        %v3075 = vadd.f32 %v3037, %v3051
        %v3076 = vadd.f32 %v3038, %v3051
        %v3077 = vadd.f32 %v3039, %v3051
        %v3078 = vadd.f32 %v3040, %v3051
        %v3079 = vadd.f32 %v3041, %v3051
        %v3080 = vadd.f32 %v3042, %v3051
        %v3081 = vadd.f32 %v3043, %v3051
        %v3082 = vadd.f32 %v3044, %v3051
        %v3083 = vadd.f32 %v3045, %v3051
        %v3084 = vadd.f32 %v3046, %v3051
        %v3085 = vmul.f32 %v3053, 0.5
        %v3086 = vmul.f32 %v3054, 0.5
        %v3087 = vmul.f32 %v3055, 0.5
        %v3088 = vmul.f32 %v3056, 0.5
        %v3089 = vmul.f32 %v3057, 0.5
        %v3090 = vmul.f32 %v3058, 0.5
        %v3091 = vmul.f32 %v3059, 0.5
        %v3092 = vmul.f32 %v3060, 0.5
        %v3093 = vmul.f32 %v3061, 0.5
        %v3094 = vmul.f32 %v3062, 0.5
        %v3095 = vmul.f32 %v3063, 0.5
        %v3096 = vmul.f32 %v3064, 0.5
        %v3097 = vmul.f32 %v3065, 0.5
        %v3098 = vmul.f32 %v3066, 0.5
        %v3099 = vmul.f32 %v3067, 0.5
        %v3100 = vmul.f32 %v3068, 0.5
        %v3101 = vmul.f32 %v3069, 0.5
        %v3102 = vmul.f32 %v3070, 0.5
        %v3103 = vmul.f32 %v3071, 0.5
        %v3104 = vmul.f32 %v3072, 0.5
        %v3105 = vmul.f32 %v3073, 0.5
        %v3106 = vmul.f32 %v3074, 0.5
        %v3107 = vmul.f32 %v3075, 0.5
        %v3108 = vmul.f32 %v3076, 0.5
        %v3109 = vmul.f32 %v3077, 0.5
        %v3110 = vmul.f32 %v3078, 0.5
        %v3111 = vmul.f32 %v3079, 0.5
        %v3112 = vmul.f32 %v3080, 0.5
        %v3113 = vmul.f32 %v3081, 0.5
        %v3114 = vmul.f32 %v3082, 0.5
        %v3115 = vmul.f32 %v3083, 0.5
        %v3116 = vmul.f32 %v3084, 0.5
        %v3117 = vtanh.pop %v3085
        %v3118 = vtanh.pop %v3086
        %v3119 = vtanh.pop %v3087
        %v3120 = vtanh.pop %v3088
        %v3121 = vtanh.pop %v3089
        %v3122 = vtanh.pop %v3090
        %v3123 = vtanh.pop %v3091
        %v3124 = vtanh.pop %v3092
        %v3125 = vtanh.pop %v3093
        %v3126 = vtanh.pop %v3094
        %v3127 = vtanh.pop %v3095
        %v3128 = vtanh.pop %v3096
        %v3129 = vtanh.pop %v3097
        %v3130 = vtanh.pop %v3098
        %v3131 = vtanh.pop %v3099
        %v3132 = vtanh.pop %v3100
        %v3133 = vtanh.pop %v3101
        %v3134 = vtanh.pop %v3102
        %v3135 = vtanh.pop %v3103
        %v3136 = vtanh.pop %v3104
        %v3137 = vtanh.pop %v3105
        %v3138 = vtanh.pop %v3106
        %v3139 = vtanh.pop %v3107
        %v3140 = vtanh.pop %v3108
        %v3141 = vtanh.pop %v3109
        %v3142 = vtanh.pop %v3110
        %v3143 = vtanh.pop %v3111
        %v3144 = vtanh.pop %v3112
        %v3145 = vtanh.pop %v3113
        %v3146 = vtanh.pop %v3114
        %v3147 = vtanh.pop %v3115
        %v3148 = vtanh.pop %v3116
        %v3149 = vadd.f32 %v3117, 1.0
        %v3150 = vadd.f32 %v3118, 1.0
        %v3151 = vadd.f32 %v3119, 1.0
        %v3152 = vadd.f32 %v3120, 1.0
        %v3153 = vadd.f32 %v3121, 1.0
        %v3154 = vadd.f32 %v3122, 1.0
        %v3155 = vadd.f32 %v3123, 1.0
        %v3156 = vadd.f32 %v3124, 1.0
        %v3157 = vadd.f32 %v3125, 1.0
        %v3158 = vadd.f32 %v3126, 1.0
        %v3159 = vadd.f32 %v3127, 1.0
        %v3160 = vadd.f32 %v3128, 1.0
        %v3161 = vadd.f32 %v3129, 1.0
        %v3162 = vadd.f32 %v3130, 1.0
        %v3163 = vadd.f32 %v3131, 1.0
        %v3164 = vadd.f32 %v3132, 1.0
        %v3165 = vadd.f32 %v3133, 1.0
        %v3166 = vadd.f32 %v3134, 1.0
        %v3167 = vadd.f32 %v3135, 1.0
        %v3168 = vadd.f32 %v3136, 1.0
        %v3169 = vadd.f32 %v3137, 1.0
        %v3170 = vadd.f32 %v3138, 1.0
        %v3171 = vadd.f32 %v3139, 1.0
        %v3172 = vadd.f32 %v3140, 1.0
        %v3173 = vadd.f32 %v3141, 1.0
        %v3174 = vadd.f32 %v3142, 1.0
        %v3175 = vadd.f32 %v3143, 1.0
        %v3176 = vadd.f32 %v3144, 1.0
        %v3177 = vadd.f32 %v3145, 1.0
        %v3178 = vadd.f32 %v3146, 1.0
        %v3179 = vadd.f32 %v3147, 1.0
        %v3180 = vadd.f32 %v3148, 1.0
        %v3181 = vmul.f32 %v3149, 0.5
        %v3182 = vmul.f32 %v3150, 0.5
        %v3183 = vmul.f32 %v3151, 0.5
        %v3184 = vmul.f32 %v3152, 0.5
        %v3185 = vmul.f32 %v3153, 0.5
        %v3186 = vmul.f32 %v3154, 0.5
        %v3187 = vmul.f32 %v3155, 0.5
        %v3188 = vmul.f32 %v3156, 0.5
        %v3189 = vmul.f32 %v3157, 0.5
        %v3190 = vmul.f32 %v3158, 0.5
        %v3191 = vmul.f32 %v3159, 0.5
        %v3192 = vmul.f32 %v3160, 0.5
        %v3193 = vmul.f32 %v3161, 0.5
        %v3194 = vmul.f32 %v3162, 0.5
        %v3195 = vmul.f32 %v3163, 0.5
        %v3196 = vmul.f32 %v3164, 0.5
        %v3197 = vmul.f32 %v3165, 0.5
        %v3198 = vmul.f32 %v3166, 0.5
        %v3199 = vmul.f32 %v3167, 0.5
        %v3200 = vmul.f32 %v3168, 0.5
        %v3201 = vmul.f32 %v3169, 0.5
        %v3202 = vmul.f32 %v3170, 0.5
        %v3203 = vmul.f32 %v3171, 0.5
        %v3204 = vmul.f32 %v3172, 0.5
        %v3205 = vmul.f32 %v3173, 0.5
        %v3206 = vmul.f32 %v3174, 0.5
        %v3207 = vmul.f32 %v3175, 0.5
        %v3208 = vmul.f32 %v3176, 0.5
        %v3209 = vmul.f32 %v3177, 0.5
        %v3210 = vmul.f32 %v3178, 0.5
        %v3211 = vmul.f32 %v3179, 0.5
        %v3212 = vmul.f32 %v3180, 0.5
        %v3213 = vmul.f32 %v3053, %v3181
        %v3214 = vmul.f32 %v3054, %v3182
        %v3215 = vmul.f32 %v3055, %v3183
        %v3216 = vmul.f32 %v3056, %v3184
        %v3217 = vmul.f32 %v3057, %v3185
        %v3218 = vmul.f32 %v3058, %v3186
        %v3219 = vmul.f32 %v3059, %v3187
        %v3220 = vmul.f32 %v3060, %v3188
        %v3221 = vmul.f32 %v3061, %v3189
        %v3222 = vmul.f32 %v3062, %v3190
        %v3223 = vmul.f32 %v3063, %v3191
        %v3224 = vmul.f32 %v3064, %v3192
        %v3225 = vmul.f32 %v3065, %v3193
        %v3226 = vmul.f32 %v3066, %v3194
        %v3227 = vmul.f32 %v3067, %v3195
        %v3228 = vmul.f32 %v3068, %v3196
        %v3229 = vmul.f32 %v3069, %v3197
        %v3230 = vmul.f32 %v3070, %v3198
        %v3231 = vmul.f32 %v3071, %v3199
        %v3232 = vmul.f32 %v3072, %v3200
        %v3233 = vmul.f32 %v3073, %v3201
        %v3234 = vmul.f32 %v3074, %v3202
        %v3235 = vmul.f32 %v3075, %v3203
        %v3236 = vmul.f32 %v3076, %v3204
        %v3237 = vmul.f32 %v3077, %v3205
        %v3238 = vmul.f32 %v3078, %v3206
        %v3239 = vmul.f32 %v3079, %v3207
        %v3240 = vmul.f32 %v3080, %v3208
        %v3241 = vmul.f32 %v3081, %v3209
        %v3242 = vmul.f32 %v3082, %v3210
        %v3243 = vmul.f32 %v3083, %v3211
        %v3244 = vmul.f32 %v3084, %v3212
        %v3245 = vpack.c.bf16 %v3214, %v3213
        %v3246 = vpack.c.bf16 %v3216, %v3215
        %v3247 = vpack.c.bf16 %v3218, %v3217
        %v3248 = vpack.c.bf16 %v3220, %v3219
        %v3249 = vpack.c.bf16 %v3222, %v3221
        %v3250 = vpack.c.bf16 %v3224, %v3223
        %v3251 = vpack.c.bf16 %v3226, %v3225
        %v3252 = vpack.c.bf16 %v3228, %v3227
        %v3253 = vpack.c.bf16 %v3230, %v3229
        %v3254 = vpack.c.bf16 %v3232, %v3231
        %v3255 = vpack.c.bf16 %v3234, %v3233
        %v3256 = vpack.c.bf16 %v3236, %v3235
        %v3257 = vpack.c.bf16 %v3238, %v3237
        %v3258 = vpack.c.bf16 %v3240, %v3239
        %v3259 = vpack.c.bf16 %v3242, %v3241
        %v3260 = vpack.c.bf16 %v3244, %v3243
        %s3261 = scalar_lea.vmem [#allocation7], 384
        %v3262 = vld [vmem:[%s3261] sm:$0xf]
        %v3263 = vld [vmem:[%s3261 + $0x4] sm:$0xf]
        %v3264 = vld [vmem:[%s3261 + $0x8] sm:$0xf]
        %v3265 = vld [vmem:[%s3261 + $0xc] sm:$0xf]
        %v3266 = vld [vmem:[%s3261 + $0x10] sm:$0xf]
        %v3267 = vld [vmem:[%s3261 + $0x14] sm:$0xf]
        %v3268 = vld [vmem:[%s3261 + $0x18] sm:$0xf]
        %v3269 = vld [vmem:[%s3261 + $0x1c] sm:$0xf]
        %v3270 = vld [vmem:[%s3261 + $0x20] sm:$0xf]
        %v3271 = vld [vmem:[%s3261 + $0x24] sm:$0xf]
        %v3272 = vld [vmem:[%s3261 + $0x28] sm:$0xf]
        %v3273 = vld [vmem:[%s3261 + $0x2c] sm:$0xf]
        %v3274 = vld [vmem:[%s3261 + $0x30] sm:$0xf]
        %v3275 = vld [vmem:[%s3261 + $0x34] sm:$0xf]
        %v3276 = vld [vmem:[%s3261 + $0x38] sm:$0xf]
        %v3277 = vld [vmem:[%s3261 + $0x3c] sm:$0xf]
        %v3278 = vld [vmem:[%s3261 + $0x40] sm:$0xf]
        %v3279 = vld [vmem:[%s3261 + $0x44] sm:$0xf]
        %v3280 = vld [vmem:[%s3261 + $0x48] sm:$0xf]
        %v3281 = vld [vmem:[%s3261 + $0x4c] sm:$0xf]
        %v3282 = vld [vmem:[%s3261 + $0x50] sm:$0xf]
        %v3283 = vld [vmem:[%s3261 + $0x54] sm:$0xf]
        %v3284 = vld [vmem:[%s3261 + $0x58] sm:$0xf]
        %v3285 = vld [vmem:[%s3261 + $0x5c] sm:$0xf]
        %v3286 = vld [vmem:[%s3261 + $0x60] sm:$0xf]
        %v3287 = vld [vmem:[%s3261 + $0x64] sm:$0xf]
        %v3288 = vld [vmem:[%s3261 + $0x68] sm:$0xf]
        %v3289 = vld [vmem:[%s3261 + $0x6c] sm:$0xf]
        %v3290 = vld [vmem:[%s3261 + $0x70] sm:$0xf]
        %v3291 = vld [vmem:[%s3261 + $0x74] sm:$0xf]
        %v3292 = vld [vmem:[%s3261 + $0x78] sm:$0xf]
        %v3293 = vld [vmem:[%s3261 + $0x7c] sm:$0xf]
        %v3294 = vld [vmem:[%s3261 + $0x80] sm:$0xf]
        %v3295 = vld [vmem:[%s3261 + $0x84] sm:$0xf]
        %v3296 = vld [vmem:[%s3261 + $0x88] sm:$0xf]
        %v3297 = vld [vmem:[%s3261 + $0x8c] sm:$0xf]
        %v3298 = vld [vmem:[%s3261 + $0x90] sm:$0xf]
        %v3299 = vld [vmem:[%s3261 + $0x94] sm:$0xf]
        %v3300 = vld [vmem:[%s3261 + $0x98] sm:$0xf]
        %v3301 = vld [vmem:[%s3261 + $0x9c] sm:$0xf]
        %v3302 = vld [vmem:[%s3261 + $0xa0] sm:$0xf]
        %v3303 = vld [vmem:[%s3261 + $0xa4] sm:$0xf]
        %v3304 = vld [vmem:[%s3261 + $0xa8] sm:$0xf]
        %v3305 = vld [vmem:[%s3261 + $0xac] sm:$0xf]
        %v3306 = vld [vmem:[%s3261 + $0xb0] sm:$0xf]
        %v3307 = vld [vmem:[%s3261 + $0xb4] sm:$0xf]
        %v3308 = vld [vmem:[%s3261 + $0xb8] sm:$0xf]
        %v3309 = vld [vmem:[%s3261 + $0xbc] sm:$0xf]
        %s3310 = scalar_lea.vmem %s5, 2
        %v3311 = vld [vmem:[%s3310] sm:$0x1]
        %v3313 = vlaneseq
        %v3314 = vshrl.u32 %v3313, 7
        %v3315 = vsub.s32 0, %v3314
        %v3316 = vrot.slane %v3311, %v3315
        %v3366 = vunpack.c.l.b16 %v3262
        %v3367 = vunpack.c.l.b16 %v3263
        %v3368 = vunpack.c.l.b16 %v3264
        %v3369 = vunpack.c.l.b16 %v3265
        %v3370 = vunpack.c.l.b16 %v3266
        %v3371 = vunpack.c.l.b16 %v3267
        %v3372 = vunpack.c.l.b16 %v3268
        %v3373 = vunpack.c.l.b16 %v3269
        %v3374 = vunpack.c.l.b16 %v3270
        %v3375 = vunpack.c.l.b16 %v3271
        %v3376 = vunpack.c.l.b16 %v3272
        %v3377 = vunpack.c.l.b16 %v3273
        %v3378 = vunpack.c.l.b16 %v3274
        %v3379 = vunpack.c.l.b16 %v3275
        %v3380 = vunpack.c.l.b16 %v3276
        %v3381 = vunpack.c.l.b16 %v3277
        %v3382 = vunpack.c.l.b16 %v3278
        %v3383 = vunpack.c.l.b16 %v3279
        %v3384 = vunpack.c.l.b16 %v3280
        %v3385 = vunpack.c.l.b16 %v3281
        %v3386 = vunpack.c.l.b16 %v3282
        %v3387 = vunpack.c.l.b16 %v3283
        %v3388 = vunpack.c.l.b16 %v3284
        %v3389 = vunpack.c.l.b16 %v3285
        %v3390 = vunpack.c.l.b16 %v3286
        %v3391 = vunpack.c.l.b16 %v3287
        %v3392 = vunpack.c.l.b16 %v3288
        %v3393 = vunpack.c.l.b16 %v3289
        %v3394 = vunpack.c.l.b16 %v3290
        %v3395 = vunpack.c.l.b16 %v3291
        %v3396 = vunpack.c.l.b16 %v3292
        %v3397 = vunpack.c.l.b16 %v3293
        %v3398 = vunpack.c.l.b16 %v3294
        %v3399 = vunpack.c.l.b16 %v3295
        %v3400 = vunpack.c.l.b16 %v3296
        %v3401 = vunpack.c.l.b16 %v3297
        %v3402 = vunpack.c.l.b16 %v3298
        %v3403 = vunpack.c.l.b16 %v3299
        %v3404 = vunpack.c.l.b16 %v3300
        %v3405 = vunpack.c.l.b16 %v3301
        %v3406 = vunpack.c.l.b16 %v3302
        %v3407 = vunpack.c.l.b16 %v3303
        %v3408 = vunpack.c.l.b16 %v3304
        %v3409 = vunpack.c.l.b16 %v3305
        %v3410 = vunpack.c.l.b16 %v3306
        %v3411 = vunpack.c.l.b16 %v3307
        %v3412 = vunpack.c.l.b16 %v3308
        %v3413 = vunpack.c.l.b16 %v3309
        %v3414 = vpack.c.b16 %v3367, %v3366
        %v3415 = vpack.c.b16 %v3369, %v3368
        %v3416 = vpack.c.b16 %v3371, %v3370
        %v3417 = vpack.c.b16 %v3373, %v3372
        %v3418 = vpack.c.b16 %v3375, %v3374
        %v3419 = vpack.c.b16 %v3377, %v3376
        %v3420 = vpack.c.b16 %v3379, %v3378
        %v3421 = vpack.c.b16 %v3381, %v3380
        %v3422 = vpack.c.b16 %v3383, %v3382
        %v3423 = vpack.c.b16 %v3385, %v3384
        %v3424 = vpack.c.b16 %v3387, %v3386
        %v3425 = vpack.c.b16 %v3389, %v3388
        %v3426 = vpack.c.b16 %v3391, %v3390
        %v3427 = vpack.c.b16 %v3393, %v3392
        %v3428 = vpack.c.b16 %v3395, %v3394
        %v3429 = vpack.c.b16 %v3397, %v3396
        %v3430 = vpack.c.b16 %v3399, %v3398
        %v3431 = vpack.c.b16 %v3401, %v3400
        %v3432 = vpack.c.b16 %v3403, %v3402
        %v3433 = vpack.c.b16 %v3405, %v3404
        %v3434 = vpack.c.b16 %v3407, %v3406
        %v3435 = vpack.c.b16 %v3409, %v3408
        %v3436 = vpack.c.b16 %v3411, %v3410
        %v3437 = vpack.c.b16 %v3413, %v3412
        %3462 = vmatprep.subr.bf16.mxu0 0
        %3463 = vmatpush1.bf16.msra.mxu0 %v3414
        %3464 = vmatprep.subr.bf16.mxu0 0
        %3465 = vmatpush1.bf16.msra.mxu0 %v3415
        %3466 = vmatprep.subr.bf16.mxu0 0
        %3467 = vmatpush1.bf16.msra.mxu0 %v3416
        %3468 = vmatprep.subr.bf16.mxu0 0
        %3469 = vmatpush1.bf16.msra.mxu0 %v3417
        %3470 = vmatprep.subr.bf16.mxu0 0
        %3471 = vmatpush1.bf16.msra.mxu0 %v3418
        %3472 = vmatprep.subr.bf16.mxu0 0
        %3473 = vmatpush1.bf16.msra.mxu0 %v3419
        %3474 = vmatprep.subr.bf16.mxu0 0
        %3475 = vmatpush1.bf16.msra.mxu0 %v3420
        %3476 = vmatprep.subr.bf16.mxu0 0
        %3477 = vmatpush1.bf16.msra.mxu0 %v3421
        %3478 = vmatprep.subr.bf16.mxu0 0
        %3479 = vmatpush1.bf16.msra.mxu0 %v3422
        %3480 = vmatprep.subr.bf16.mxu0 0
        %3481 = vmatpush1.bf16.msra.mxu0 %v3423
        %3482 = vmatprep.subr.bf16.mxu0 0
        %3483 = vmatpush1.bf16.msra.mxu0 %v3424
        %3484 = vmatprep.subr.bf16.mxu0 0
        %3485 = vmatpush1.bf16.msra.mxu0 %v3425
        %3486 = vmatprep.subr.bf16.mxu0 0
        %3487 = vmatpush1.bf16.msra.mxu0 %v3426
        %3488 = vmatprep.subr.bf16.mxu0 0
        %3489 = vmatpush1.bf16.msra.mxu0 %v3427
        %3490 = vmatprep.subr.bf16.mxu0 0
        %3491 = vmatpush1.bf16.msra.mxu0 %v3428
        %3492 = vmatprep.subr.bf16.mxu0 0
        %3493 = vmatpush1.bf16.msra.mxu0 %v3429
        %3494 = vmatprep.mubr.bf16.mxu0 %v3245
        %3495 = vmatmul.mubr.bf16.gmra.mrb[0].mxu0 %v3245
        %v3496 = vpop.f32.mrb[0].mxu0
        %v3497 = vadd.f32 %v3316, %v3496
        %v3498 = vpop.f32.mrb[0].mxu0
        %v3499 = vpop.f32.mrb[0].mxu0
        %v3500 = vadd.f32 %v3316, %v3499
        %v3501 = vpop.f32.mrb[0].mxu0
        %3502 = vmatprep.mubr.bf16.mxu0 %v3246
        %3503 = vmatmul.mubr.bf16.gmra.mrb[0].mxu0 %v3246
        %v3504 = vpop.f32.mrb[0].mxu0
        %v3505 = vadd.f32 %v3316, %v3504
        %v3506 = vpop.f32.mrb[0].mxu0
        %v3507 = vpop.f32.mrb[0].mxu0
        %v3508 = vadd.f32 %v3316, %v3507
        %v3509 = vpop.f32.mrb[0].mxu0
        %3510 = vmatprep.mubr.bf16.mxu0 %v3247
        %3511 = vmatmul.mubr.bf16.gmra.mrb[0].mxu0 %v3247
        %v3512 = vpop.f32.mrb[0].mxu0
        %v3513 = vadd.f32 %v3316, %v3512
        %v3514 = vpop.f32.mrb[0].mxu0
        %v3515 = vpop.f32.mrb[0].mxu0
        %v3516 = vadd.f32 %v3316, %v3515
        %v3517 = vpop.f32.mrb[0].mxu0
        %3518 = vmatprep.mubr.bf16.mxu0 %v3248
        %3519 = vmatmul.mubr.bf16.gmra.mrb[0].mxu0 %v3248
        %v3520 = vpop.f32.mrb[0].mxu0
        %v3521 = vadd.f32 %v3316, %v3520
        %v3522 = vpop.f32.mrb[0].mxu0
        %v3523 = vpop.f32.mrb[0].mxu0
        %v3524 = vadd.f32 %v3316, %v3523
        %v3525 = vpop.f32.mrb[0].mxu0
        %3526 = vmatprep.mubr.bf16.mxu0 %v3249
        %3527 = vmatmul.mubr.bf16.gmra.mrb[0].mxu0 %v3245
        %v3528 = vpop.f32.mrb[0].mxu0
        %v3529 = vadd.f32 %v3316, %v3528
        %v3530 = vpop.f32.mrb[0].mxu0
        %v3531 = vpop.f32.mrb[0].mxu0
        %v3532 = vadd.f32 %v3316, %v3531
        %v3533 = vpop.f32.mrb[0].mxu0
        %3534 = vmatprep.mubr.bf16.mxu0 %v3250
        %3535 = vmatmul.mubr.bf16.gmra.mrb[0].mxu0 %v3246
        %v3536 = vpop.f32.mrb[0].mxu0
        %v3537 = vadd.f32 %v3316, %v3536
        %v3538 = vpop.f32.mrb[0].mxu0
        %v3539 = vpop.f32.mrb[0].mxu0
        %v3540 = vadd.f32 %v3316, %v3539
        %v3541 = vpop.f32.mrb[0].mxu0
        %3542 = vmatprep.mubr.bf16.mxu0 %v3251
        %3543 = vmatmul.mubr.bf16.gmra.mrb[0].mxu0 %v3247
        %v3544 = vpop.f32.mrb[0].mxu0
        %v3545 = vadd.f32 %v3316, %v3544
        %v3546 = vpop.f32.mrb[0].mxu0
        %v3547 = vpop.f32.mrb[0].mxu0
        %v3548 = vadd.f32 %v3316, %v3547
        %v3549 = vpop.f32.mrb[0].mxu0
        %3550 = vmatprep.mubr.bf16.mxu0 %v3252
        %3551 = vmatmul.mubr.bf16.gmra.mrb[0].mxu0 %v3248
        %v3552 = vpop.f32.mrb[0].mxu0
        %v3553 = vadd.f32 %v3316, %v3552
        %v3554 = vpop.f32.mrb[0].mxu0
        %v3555 = vpop.f32.mrb[0].mxu0
        %v3556 = vadd.f32 %v3316, %v3555
        %v3557 = vpop.f32.mrb[0].mxu0
        %3558 = vmatprep.mubr.bf16.mxu0 %v3253
        %3559 = vmatmul.mubr.bf16.gmra.mrb[0].mxu0 %v3249
        %v3560 = vpop.f32.mrb[0].mxu0
        %v3561 = vadd.f32 %v3316, %v3560
        %v3562 = vpop.f32.mrb[0].mxu0
        %v3563 = vpop.f32.mrb[0].mxu0
        %v3564 = vadd.f32 %v3316, %v3563
        %v3565 = vpop.f32.mrb[0].mxu0
        %3566 = vmatprep.mubr.bf16.mxu0 %v3254
        %3567 = vmatmul.mubr.bf16.gmra.mrb[0].mxu0 %v3250
        %v3568 = vpop.f32.mrb[0].mxu0
        %v3569 = vadd.f32 %v3316, %v3568
        %v3570 = vpop.f32.mrb[0].mxu0
        %v3571 = vpop.f32.mrb[0].mxu0
        %v3572 = vadd.f32 %v3316, %v3571
        %v3573 = vpop.f32.mrb[0].mxu0
        %3574 = vmatprep.mubr.bf16.mxu0 %v3255
        %3575 = vmatmul.mubr.bf16.gmra.mrb[0].mxu0 %v3251
        %v3576 = vpop.f32.mrb[0].mxu0
        %v3577 = vadd.f32 %v3316, %v3576
        %v3578 = vpop.f32.mrb[0].mxu0
        %v3579 = vpop.f32.mrb[0].mxu0
        %v3580 = vadd.f32 %v3316, %v3579
        %v3581 = vpop.f32.mrb[0].mxu0
        %3582 = vmatprep.mubr.bf16.mxu0 %v3256
        %3583 = vmatmul.mubr.bf16.gmra.mrb[0].mxu0 %v3252
        %v3584 = vpop.f32.mrb[0].mxu0
        %v3585 = vadd.f32 %v3316, %v3584
        %v3586 = vpop.f32.mrb[0].mxu0
        %v3587 = vpop.f32.mrb[0].mxu0
        %v3588 = vadd.f32 %v3316, %v3587
        %v3589 = vpop.f32.mrb[0].mxu0
        %3590 = vmatprep.mubr.bf16.mxu0 %v3257
        %3591 = vmatmul.mubr.bf16.gmra.mrb[0].mxu0 %v3253
        %v3592 = vpop.f32.mrb[0].mxu0
        %v3593 = vadd.f32 %v3316, %v3592
        %v3594 = vpop.f32.mrb[0].mxu0
        %v3595 = vpop.f32.mrb[0].mxu0
        %v3596 = vadd.f32 %v3316, %v3595
        %v3597 = vpop.f32.mrb[0].mxu0
        %3598 = vmatprep.mubr.bf16.mxu0 %v3258
        %3599 = vmatmul.mubr.bf16.gmra.mrb[0].mxu0 %v3254
        %v3600 = vpop.f32.mrb[0].mxu0
        %v3601 = vadd.f32 %v3316, %v3600
        %v3602 = vpop.f32.mrb[0].mxu0
        %v3603 = vpop.f32.mrb[0].mxu0
        %v3604 = vadd.f32 %v3316, %v3603
        %v3605 = vpop.f32.mrb[0].mxu0
        %3606 = vmatprep.mubr.bf16.mxu0 %v3259
        %3607 = vmatmul.mubr.bf16.gmra.mrb[0].mxu0 %v3255
        %v3608 = vpop.f32.mrb[0].mxu0
        %v3609 = vadd.f32 %v3316, %v3608
        %v3610 = vpop.f32.mrb[0].mxu0
        %v3611 = vpop.f32.mrb[0].mxu0
        %v3612 = vadd.f32 %v3316, %v3611
        %v3613 = vpop.f32.mrb[0].mxu0
        %3614 = vmatprep.mubr.bf16.mxu0 %v3260
        %3615 = vmatmul.mubr.bf16.gmra.mrb[0].mxu0 %v3256
        %v3616 = vpop.f32.mrb[0].mxu0
        %v3617 = vadd.f32 %v3316, %v3616
        %v3618 = vpop.f32.mrb[0].mxu0
        %v3619 = vpop.f32.mrb[0].mxu0
        %v3620 = vadd.f32 %v3316, %v3619
        %v3621 = vpop.f32.mrb[0].mxu0
        %3622 = vdwg.mxu0
        %3623 = vmatprep.subr.bf16.mxu0 0
        %3624 = vmatpush1.bf16.msra.mxu0 %v3430
        %3625 = vmatprep.subr.bf16.mxu0 0
        %3626 = vmatpush1.bf16.msra.mxu0 %v3431
        %3627 = vmatprep.subr.bf16.mxu0 0
        %3628 = vmatpush1.bf16.msra.mxu0 %v3432
        %3629 = vmatprep.subr.bf16.mxu0 0
        %3630 = vmatpush1.bf16.msra.mxu0 %v3433
        %3631 = vmatprep.subr.bf16.mxu0 0
        %3632 = vmatpush1.bf16.msra.mxu0 %v3434
        %3633 = vmatprep.subr.bf16.mxu0 0
        %3634 = vmatpush1.bf16.msra.mxu0 %v3435
        %3635 = vmatprep.subr.bf16.mxu0 0
        %3636 = vmatpush1.bf16.msra.mxu0 %v3436
        %3637 = vmatprep.subr.bf16.mxu0 0
        %3638 = vmatpush1.bf16.msra.mxu0 %v3437
        %3639 = vmatprep.subr.bf16.mxu0 0
        %3640 = vmatpush1.bf16.msra.mxu0 0
        %3641 = vmatprep.subr.bf16.mxu0 0
        %3642 = vmatpush1.bf16.msra.mxu0 0
        %3643 = vmatprep.subr.bf16.mxu0 0
        %3644 = vmatpush1.bf16.msra.mxu0 0
        %3645 = vmatprep.subr.bf16.mxu0 0
        %3646 = vmatpush1.bf16.msra.mxu0 0
        %3647 = vmatprep.subr.bf16.mxu0 0
        %3648 = vmatpush1.bf16.msra.mxu0 0
        %3649 = vmatprep.subr.bf16.mxu0 0
        %3650 = vmatpush1.bf16.msra.mxu0 0
        %3651 = vmatprep.subr.bf16.mxu0 0
        %3652 = vmatpush1.bf16.msra.mxu0 0
        %3653 = vmatprep.subr.bf16.mxu0 0
        %3654 = vmatpush1.bf16.msra.mxu0 0
        %3655 = vmatprep.mubr.bf16.mxu0 0
        %3656 = vmatmul.mubr.bf16.gmra.mrb[0].mxu0 %v3249
        %v3657 = vpop.f32.mrb[0].mxu0
        %v3658 = vadd.f32 %v3497, %v3657
        %v3659 = vpop.f32.mrb[0].mxu0
        %v3660 = vpop.f32.mrb[0].mxu0
        %v3661 = vadd.f32 %v3500, %v3660
        %v3662 = vpop.f32.mrb[0].mxu0
        %3663 = vmatprep.mubr.bf16.mxu0 0
        %3664 = vmatmul.mubr.bf16.gmra.mrb[0].mxu0 %v3250
        %v3665 = vpop.f32.mrb[0].mxu0
        %v3666 = vadd.f32 %v3505, %v3665
        %v3667 = vpop.f32.mrb[0].mxu0
        %v3668 = vpop.f32.mrb[0].mxu0
        %v3669 = vadd.f32 %v3508, %v3668
        %v3670 = vpop.f32.mrb[0].mxu0
        %3671 = vmatprep.mubr.bf16.mxu0 0
        %3672 = vmatmul.mubr.bf16.gmra.mrb[0].mxu0 %v3251
        %v3673 = vpop.f32.mrb[0].mxu0
        %v3674 = vadd.f32 %v3513, %v3673
        %v3675 = vpop.f32.mrb[0].mxu0
        %v3676 = vpop.f32.mrb[0].mxu0
        %v3677 = vadd.f32 %v3516, %v3676
        %v3678 = vpop.f32.mrb[0].mxu0
        %3679 = vmatprep.mubr.bf16.mxu0 0
        %3680 = vmatmul.mubr.bf16.gmra.mrb[0].mxu0 %v3252
        %v3681 = vpop.f32.mrb[0].mxu0
        %v3682 = vadd.f32 %v3521, %v3681
        %v3683 = vpop.f32.mrb[0].mxu0
        %v3684 = vpop.f32.mrb[0].mxu0
        %v3685 = vadd.f32 %v3524, %v3684
        %v3686 = vpop.f32.mrb[0].mxu0
        %3687 = vmatprep.mubr.bf16.mxu0 0
        %3688 = vmatmul.mubr.bf16.gmra.mrb[0].mxu0 %v3253
        %v3689 = vpop.f32.mrb[0].mxu0
        %v3690 = vadd.f32 %v3529, %v3689
        %v3691 = vpop.f32.mrb[0].mxu0
        %v3692 = vpop.f32.mrb[0].mxu0
        %v3693 = vadd.f32 %v3532, %v3692
        %v3694 = vpop.f32.mrb[0].mxu0
        %3695 = vmatprep.mubr.bf16.mxu0 0
        %3696 = vmatmul.mubr.bf16.gmra.mrb[0].mxu0 %v3254
        %v3697 = vpop.f32.mrb[0].mxu0
        %v3698 = vadd.f32 %v3537, %v3697
        %v3699 = vpop.f32.mrb[0].mxu0
        %v3700 = vpop.f32.mrb[0].mxu0
        %v3701 = vadd.f32 %v3540, %v3700
        %v3702 = vpop.f32.mrb[0].mxu0
        %3703 = vmatprep.mubr.bf16.mxu0 0
        %3704 = vmatmul.mubr.bf16.gmra.mrb[0].mxu0 %v3255
        %v3705 = vpop.f32.mrb[0].mxu0
        %v3706 = vadd.f32 %v3545, %v3705
        %v3707 = vpop.f32.mrb[0].mxu0
        %v3708 = vpop.f32.mrb[0].mxu0
        %v3709 = vadd.f32 %v3548, %v3708
        %v3710 = vpop.f32.mrb[0].mxu0
        %3711 = vmatprep.mubr.bf16.mxu0 0
        %3712 = vmatmul.mubr.bf16.gmra.mrb[0].mxu0 %v3256
        %v3713 = vpop.f32.mrb[0].mxu0
        %v3714 = vadd.f32 %v3553, %v3713
        %v3715 = vpop.f32.mrb[0].mxu0
        %v3716 = vpop.f32.mrb[0].mxu0
        %v3717 = vadd.f32 %v3556, %v3716
        %v3718 = vpop.f32.mrb[0].mxu0
        %3719 = vmatprep.mubr.bf16.mxu0 0
        %3720 = vmatmul.mubr.bf16.gmra.mrb[0].mxu0 %v3257
        %v3721 = vpop.f32.mrb[0].mxu0
        %v3722 = vadd.f32 %v3561, %v3721
        %v3723 = vpop.f32.mrb[0].mxu0
        %v3724 = vpop.f32.mrb[0].mxu0
        %v3725 = vadd.f32 %v3564, %v3724
        %v3726 = vpop.f32.mrb[0].mxu0
        %3727 = vmatprep.mubr.bf16.mxu0 0
        %3728 = vmatmul.mubr.bf16.gmra.mrb[0].mxu0 %v3258
        %v3729 = vpop.f32.mrb[0].mxu0
        %v3730 = vadd.f32 %v3569, %v3729
        %v3731 = vpop.f32.mrb[0].mxu0
        %v3732 = vpop.f32.mrb[0].mxu0
        %v3733 = vadd.f32 %v3572, %v3732
        %v3734 = vpop.f32.mrb[0].mxu0
        %3735 = vmatprep.mubr.bf16.mxu0 0
        %3736 = vmatmul.mubr.bf16.gmra.mrb[0].mxu0 %v3259
        %v3737 = vpop.f32.mrb[0].mxu0
        %v3738 = vadd.f32 %v3577, %v3737
        %v3739 = vpop.f32.mrb[0].mxu0
        %v3740 = vpop.f32.mrb[0].mxu0
        %v3741 = vadd.f32 %v3580, %v3740
        %v3742 = vpop.f32.mrb[0].mxu0
        %3743 = vmatprep.mubr.bf16.mxu0 0
        %3744 = vmatmul.mubr.bf16.gmra.mrb[0].mxu0 %v3260
        %v3745 = vpop.f32.mrb[0].mxu0
        %v3746 = vadd.f32 %v3585, %v3745
        %v3747 = vpop.f32.mrb[0].mxu0
        %v3748 = vpop.f32.mrb[0].mxu0
        %v3749 = vadd.f32 %v3588, %v3748
        %v3750 = vpop.f32.mrb[0].mxu0
        %3751 = vmatprep.mubr.bf16.mxu0 0
        %3752 = vmatmul.mubr.bf16.gmra.mrb[0].mxu0 %v3257
        %v3753 = vpop.f32.mrb[0].mxu0
        %v3754 = vadd.f32 %v3593, %v3753
        %v3755 = vpop.f32.mrb[0].mxu0
        %v3756 = vpop.f32.mrb[0].mxu0
        %v3757 = vadd.f32 %v3596, %v3756
        %v3758 = vpop.f32.mrb[0].mxu0
        %3759 = vmatprep.mubr.bf16.mxu0 0
        %3760 = vmatmul.mubr.bf16.gmra.mrb[0].mxu0 %v3258
        %v3761 = vpop.f32.mrb[0].mxu0
        %v3762 = vadd.f32 %v3601, %v3761
        %v3763 = vpop.f32.mrb[0].mxu0
        %v3764 = vpop.f32.mrb[0].mxu0
        %v3765 = vadd.f32 %v3604, %v3764
        %v3766 = vpop.f32.mrb[0].mxu0
        %3767 = vmatprep.mubr.bf16.mxu0 0
        %3768 = vmatmul.mubr.bf16.gmra.mrb[0].mxu0 %v3259
        %v3769 = vpop.f32.mrb[0].mxu0
        %v3770 = vadd.f32 %v3609, %v3769
        %v3771 = vpop.f32.mrb[0].mxu0
        %v3772 = vpop.f32.mrb[0].mxu0
        %v3773 = vadd.f32 %v3612, %v3772
        %v3774 = vpop.f32.mrb[0].mxu0
        %3775 = vmatprep.mubr.bf16.mxu0 0
        %3776 = vmatmul.mubr.bf16.gmra.mrb[0].mxu0 %v3260
        %v3777 = vpop.f32.mrb[0].mxu0
        %v3778 = vadd.f32 %v3617, %v3777
        %v3779 = vpop.f32.mrb[0].mxu0
        %v3780 = vpop.f32.mrb[0].mxu0
        %v3781 = vadd.f32 %v3620, %v3780
        %v3782 = vpop.f32.mrb[0].mxu0
        %3783 = vdwg.mxu0
        %3784 = vmatprep.subr.mxu0 0.0
        %3785 = vmatpush1.msra.mxu0 %v3658
        %3786 = vmatprep.subr.mxu0 0.0
        %3787 = vmatpush1.msra.mxu0 %v3661
        %3788 = vmatprep.subr.mxu0 0.0
        %3789 = vmatpush1.msra.mxu0 %v3666
        %3790 = vmatprep.subr.mxu0 0.0
        %3791 = vmatpush1.msra.mxu0 %v3669
        %3792 = vmatprep.subr.mxu0 0.0
        %3793 = vmatpush1.msra.mxu0 %v3674
        %3794 = vmatprep.subr.mxu0 0.0
        %3795 = vmatpush1.msra.mxu0 %v3677
        %3796 = vmatprep.subr.mxu0 0.0
        %3797 = vmatpush1.msra.mxu0 %v3682
        %3798 = vmatprep.subr.mxu0 0.0
        %3799 = vmatpush1.msra.mxu0 %v3685
        %3800 = vmatprep.subr.mxu0 0.0
        %3801 = vmatpush1.msra.mxu0 %v3690
        %3802 = vmatprep.subr.mxu0 0.0
        %3803 = vmatpush1.msra.mxu0 %v3693
        %3804 = vmatprep.subr.mxu0 0.0
        %3805 = vmatpush1.msra.mxu0 %v3698
        %3806 = vmatprep.subr.mxu0 0.0
        %3807 = vmatpush1.msra.mxu0 %v3701
        %3808 = vmatprep.subr.mxu0 0.0
        %3809 = vmatpush1.msra.mxu0 %v3706
        %3810 = vmatprep.subr.mxu0 0.0
        %3811 = vmatpush1.msra.mxu0 %v3709
        %3812 = vmatprep.subr.mxu0 0.0
        %3813 = vmatpush1.msra.mxu0 %v3714
        %3814 = vmatprep.subr.mxu0 0.0
        %3815 = vmatpush1.msra.mxu0 %v3717
        %3816 = vmatprep.subr.mxu0 0.0
        %3817 = vmatpush1.msra.mxu0 %v3722
        %3818 = vmatprep.subr.mxu0 0.0
        %3819 = vmatpush1.msra.mxu0 %v3725
        %3820 = vmatprep.subr.mxu0 0.0
        %3821 = vmatpush1.msra.mxu0 %v3730
        %3822 = vmatprep.subr.mxu0 0.0
        %3823 = vmatpush1.msra.mxu0 %v3733
        %3824 = vmatprep.subr.mxu0 0.0
        %3825 = vmatpush1.msra.mxu0 %v3738
        %3826 = vmatprep.subr.mxu0 0.0
        %3827 = vmatpush1.msra.mxu0 %v3741
        %3828 = vmatprep.subr.mxu0 0.0
        %3829 = vmatpush1.msra.mxu0 %v3746
        %3830 = vmatprep.subr.mxu0 0.0
        %3831 = vmatpush1.msra.mxu0 %v3749
        %3832 = vmatprep.subr.mxu0 0.0
        %3833 = vmatpush1.msra.mxu0 %v3754
        %3834 = vmatprep.subr.mxu0 0.0
        %3835 = vmatpush1.msra.mxu0 %v3757
        %3836 = vmatprep.subr.mxu0 0.0
        %3837 = vmatpush1.msra.mxu0 %v3762
        %3838 = vmatprep.subr.mxu0 0.0
        %3839 = vmatpush1.msra.mxu0 %v3765
        %3840 = vmatprep.subr.mxu0 0.0
        %3841 = vmatpush1.msra.mxu0 %v3770
        %3842 = vmatprep.subr.mxu0 0.0
        %3843 = vmatpush1.msra.mxu0 %v3773
        %3844 = vmatprep.subr.mxu0 0.0
        %3845 = vmatpush1.msra.mxu0 %v3778
        %3846 = vmatprep.subr.mxu0 0.0
        %3847 = vmatpush1.msra.mxu0 %v3781
        %3848 = vmatprep.mubr.f32.mxu0 %v368
        %3849 = vmatmul.mubr.f32.gmra.mrb[0].mxu0 %v367
        %v3850 = vpop.f32.mrb[0].mxu0
        %v3851 = vadd.f32 0.0, %v3850
        %v3852 = vpop.f32.mrb[0].mxu0
        %3853 = vdwg.mxu0
        %v3854 = vmul.f32 %v3658, %v3658
        %v3855 = vmul.f32 %v3661, %v3661
        %v3856 = vmul.f32 %v3666, %v3666
        %v3857 = vmul.f32 %v3669, %v3669
        %v3858 = vmul.f32 %v3674, %v3674
        %v3859 = vmul.f32 %v3677, %v3677
        %v3860 = vmul.f32 %v3682, %v3682
        %v3861 = vmul.f32 %v3685, %v3685
        %v3862 = vmul.f32 %v3690, %v3690
        %v3863 = vmul.f32 %v3693, %v3693
        %v3864 = vmul.f32 %v3698, %v3698
        %v3865 = vmul.f32 %v3701, %v3701
        %v3866 = vmul.f32 %v3706, %v3706
        %v3867 = vmul.f32 %v3709, %v3709
        %v3868 = vmul.f32 %v3714, %v3714
        %v3869 = vmul.f32 %v3717, %v3717
        %v3870 = vmul.f32 %v3722, %v3722
        %v3871 = vmul.f32 %v3725, %v3725
        %v3872 = vmul.f32 %v3730, %v3730
        %v3873 = vmul.f32 %v3733, %v3733
        %v3874 = vmul.f32 %v3738, %v3738
        %v3875 = vmul.f32 %v3741, %v3741
        %v3876 = vmul.f32 %v3746, %v3746
        %v3877 = vmul.f32 %v3749, %v3749
        %v3878 = vmul.f32 %v3754, %v3754
        %v3879 = vmul.f32 %v3757, %v3757
        %v3880 = vmul.f32 %v3762, %v3762
        %v3881 = vmul.f32 %v3765, %v3765
        %v3882 = vmul.f32 %v3770, %v3770
        %v3883 = vmul.f32 %v3773, %v3773
        %v3884 = vmul.f32 %v3778, %v3778
        %v3885 = vmul.f32 %v3781, %v3781
        %3886 = vmatprep.subr.mxu0 0.0
        %3887 = vmatpush1.msra.mxu0 %v3854
        %3888 = vmatprep.subr.mxu0 0.0
        %3889 = vmatpush1.msra.mxu0 %v3855
        %3890 = vmatprep.subr.mxu0 0.0
        %3891 = vmatpush1.msra.mxu0 %v3856
        %3892 = vmatprep.subr.mxu0 0.0
        %3893 = vmatpush1.msra.mxu0 %v3857
        %3894 = vmatprep.subr.mxu0 0.0
        %3895 = vmatpush1.msra.mxu0 %v3858
        %3896 = vmatprep.subr.mxu0 0.0
        %3897 = vmatpush1.msra.mxu0 %v3859
        %3898 = vmatprep.subr.mxu0 0.0
        %3899 = vmatpush1.msra.mxu0 %v3860
        %3900 = vmatprep.subr.mxu0 0.0
        %3901 = vmatpush1.msra.mxu0 %v3861
        %3902 = vmatprep.subr.mxu0 0.0
        %3903 = vmatpush1.msra.mxu0 %v3862
        %3904 = vmatprep.subr.mxu0 0.0
        %3905 = vmatpush1.msra.mxu0 %v3863
        %3906 = vmatprep.subr.mxu0 0.0
        %3907 = vmatpush1.msra.mxu0 %v3864
        %3908 = vmatprep.subr.mxu0 0.0
        %3909 = vmatpush1.msra.mxu0 %v3865
        %3910 = vmatprep.subr.mxu0 0.0
        %3911 = vmatpush1.msra.mxu0 %v3866
        %3912 = vmatprep.subr.mxu0 0.0
        %3913 = vmatpush1.msra.mxu0 %v3867
        %3914 = vmatprep.subr.mxu0 0.0
        %3915 = vmatpush1.msra.mxu0 %v3868
        %3916 = vmatprep.subr.mxu0 0.0
        %3917 = vmatpush1.msra.mxu0 %v3869
        %3918 = vmatprep.subr.mxu0 0.0
        %3919 = vmatpush1.msra.mxu0 %v3870
        %3920 = vmatprep.subr.mxu0 0.0
        %3921 = vmatpush1.msra.mxu0 %v3871
        %3922 = vmatprep.subr.mxu0 0.0
        %3923 = vmatpush1.msra.mxu0 %v3872
        %3924 = vmatprep.subr.mxu0 0.0
        %3925 = vmatpush1.msra.mxu0 %v3873
        %3926 = vmatprep.subr.mxu0 0.0
        %3927 = vmatpush1.msra.mxu0 %v3874
        %3928 = vmatprep.subr.mxu0 0.0
        %3929 = vmatpush1.msra.mxu0 %v3875
        %3930 = vmatprep.subr.mxu0 0.0
        %3931 = vmatpush1.msra.mxu0 %v3876
        %3932 = vmatprep.subr.mxu0 0.0
        %3933 = vmatpush1.msra.mxu0 %v3877
        %3934 = vmatprep.subr.mxu0 0.0
        %3935 = vmatpush1.msra.mxu0 %v3878
        %3936 = vmatprep.subr.mxu0 0.0
        %3937 = vmatpush1.msra.mxu0 %v3879
        %3938 = vmatprep.subr.mxu0 0.0
        %3939 = vmatpush1.msra.mxu0 %v3880
        %3940 = vmatprep.subr.mxu0 0.0
        %3941 = vmatpush1.msra.mxu0 %v3881
        %3942 = vmatprep.subr.mxu0 0.0
        %3943 = vmatpush1.msra.mxu0 %v3882
        %3944 = vmatprep.subr.mxu0 0.0
        %3945 = vmatpush1.msra.mxu0 %v3883
        %3946 = vmatprep.subr.mxu0 0.0
        %3947 = vmatpush1.msra.mxu0 %v3884
        %3948 = vmatprep.subr.mxu0 0.0
        %3949 = vmatpush1.msra.mxu0 %v3885
        %3950 = vmatprep.mubr.f32.mxu0 %v368
        %3951 = vmatmul.mubr.f32.gmra.mrb[0].mxu0 %v367
        %v3952 = vpop.f32.mrb[0].mxu0
        %v3953 = vadd.f32 0.0, %v3952
        %v3954 = vpop.f32.mrb[0].mxu0
        %3955 = vdwg.mxu0
        %v3956 = vpack.c.bf16 %v3661, %v3658
        %v3957 = vpack.c.bf16 %v3669, %v3666
        %v3958 = vpack.c.bf16 %v3677, %v3674
        %v3959 = vpack.c.bf16 %v3685, %v3682
        %v3960 = vpack.c.bf16 %v3693, %v3690
        %v3961 = vpack.c.bf16 %v3701, %v3698
        %v3962 = vpack.c.bf16 %v3709, %v3706
        %v3963 = vpack.c.bf16 %v3717, %v3714
        %v3964 = vpack.c.bf16 %v3725, %v3722
        %v3965 = vpack.c.bf16 %v3733, %v3730
        %v3966 = vpack.c.bf16 %v3741, %v3738
        %v3967 = vpack.c.bf16 %v3749, %v3746
        %v3968 = vpack.c.bf16 %v3757, %v3754
        %v3969 = vpack.c.bf16 %v3765, %v3762
        %v3970 = vpack.c.bf16 %v3773, %v3770
        %v3971 = vpack.c.bf16 %v3781, %v3778
        %3972 = vmatprep.subr.mxu0 0.0
        %3973 = vmatpush1.msra.mxu0 %v332
        %3974 = vmatprep.subr.mxu0 0.0
        %3975 = vmatpush1.msra.mxu0 %v333
        %3976 = vmatprep.subr.mxu0 0.0
        %3977 = vmatpush1.msra.mxu0 %v334
        %3978 = vmatprep.subr.mxu0 0.0
        %3979 = vmatpush1.msra.mxu0 %v335
        %3980 = vmatprep.subr.mxu0 0.0
        %3981 = vmatpush1.msra.mxu0 %v336
        %3982 = vmatprep.subr.mxu0 0.0
        %3983 = vmatpush1.msra.mxu0 %v337
        %3984 = vmatprep.subr.mxu0 0.0
        %3985 = vmatpush1.msra.mxu0 %v338
        %3986 = vmatprep.subr.mxu0 0.0
        %3987 = vmatpush1.msra.mxu0 %v339
        %3988 = vmatprep.subr.mxu0 0.0
        %3989 = vmatpush1.msra.mxu0 %v340
        %3990 = vmatprep.subr.mxu0 0.0
        %3991 = vmatpush1.msra.mxu0 %v341
        %3992 = vmatprep.subr.mxu0 0.0
        %3993 = vmatpush1.msra.mxu0 %v342
        %3994 = vmatprep.subr.mxu0 0.0
        %3995 = vmatpush1.msra.mxu0 %v343
        %3996 = vmatprep.subr.mxu0 0.0
        %3997 = vmatpush1.msra.mxu0 %v344
        %3998 = vmatprep.subr.mxu0 0.0
        %3999 = vmatpush1.msra.mxu0 %v345
        %4000 = vmatprep.subr.mxu0 0.0
        %4001 = vmatpush1.msra.mxu0 %v346
        %4002 = vmatprep.subr.mxu0 0.0
        %4003 = vmatpush1.msra.mxu0 %v347
        %4004 = vmatprep.subr.mxu0 0.0
        %4005 = vmatpush1.msra.mxu0 0.0
        %4006 = vmatprep.subr.mxu0 0.0
        %4007 = vmatpush1.msra.mxu0 0.0
        %4008 = vmatprep.subr.mxu0 0.0
        %4009 = vmatpush1.msra.mxu0 0.0
        %4010 = vmatprep.subr.mxu0 0.0
        %4011 = vmatpush1.msra.mxu0 0.0
        %4012 = vmatprep.subr.mxu0 0.0
        %4013 = vmatpush1.msra.mxu0 0.0
        %4014 = vmatprep.subr.mxu0 0.0
        %4015 = vmatpush1.msra.mxu0 0.0
        %4016 = vmatprep.subr.mxu0 0.0
        %4017 = vmatpush1.msra.mxu0 0.0
        %4018 = vmatprep.subr.mxu0 0.0
        %4019 = vmatpush1.msra.mxu0 0.0
        %4020 = vmatprep.subr.mxu0 0.0
        %4021 = vmatpush1.msra.mxu0 0.0
        %4022 = vmatprep.subr.mxu0 0.0
        %4023 = vmatpush1.msra.mxu0 0.0
        %4024 = vmatprep.subr.mxu0 0.0
        %4025 = vmatpush1.msra.mxu0 0.0
        %4026 = vmatprep.subr.mxu0 0.0
        %4027 = vmatpush1.msra.mxu0 0.0
        %4028 = vmatprep.subr.mxu0 0.0
        %4029 = vmatpush1.msra.mxu0 0.0
        %4030 = vmatprep.subr.mxu0 0.0
        %4031 = vmatpush1.msra.mxu0 0.0
        %4032 = vmatprep.subr.mxu0 0.0
        %4033 = vmatpush1.msra.mxu0 0.0
        %4034 = vmatprep.subr.mxu0 0.0
        %4035 = vmatpush1.msra.mxu0 0.0
        %4036 = vmatprep.mubr.f32.mxu0 0.0
        %4037 = vmatmul.mubr.f32.gmra.mrb[0].mxu0 %v3851
        %v4038 = vpop.f32.mrb[0].mxu0
        %v4039 = vadd.f32 0.0, %v4038
        %v4040 = vpop.f32.mrb[0].mxu0
        %4041 = vdwg.mxu0
        %4042 = vmatprep.subr.mxu0 0.0
        %4043 = vmatpush1.msra.mxu0 %v332
        %4044 = vmatprep.subr.mxu0 0.0
        %4045 = vmatpush1.msra.mxu0 %v333
        %4046 = vmatprep.subr.mxu0 0.0
        %4047 = vmatpush1.msra.mxu0 %v334
        %4048 = vmatprep.subr.mxu0 0.0
        %4049 = vmatpush1.msra.mxu0 %v335
        %4050 = vmatprep.subr.mxu0 0.0
        %4051 = vmatpush1.msra.mxu0 %v336
        %4052 = vmatprep.subr.mxu0 0.0
        %4053 = vmatpush1.msra.mxu0 %v337
        %4054 = vmatprep.subr.mxu0 0.0
        %4055 = vmatpush1.msra.mxu0 %v338
        %4056 = vmatprep.subr.mxu0 0.0
        %4057 = vmatpush1.msra.mxu0 %v339
        %4058 = vmatprep.subr.mxu0 0.0
        %4059 = vmatpush1.msra.mxu0 %v340
        %4060 = vmatprep.subr.mxu0 0.0
        %4061 = vmatpush1.msra.mxu0 %v341
        %4062 = vmatprep.subr.mxu0 0.0
        %4063 = vmatpush1.msra.mxu0 %v342
        %4064 = vmatprep.subr.mxu0 0.0
        %4065 = vmatpush1.msra.mxu0 %v343
        %4066 = vmatprep.subr.mxu0 0.0
        %4067 = vmatpush1.msra.mxu0 %v344
        %4068 = vmatprep.subr.mxu0 0.0
        %4069 = vmatpush1.msra.mxu0 %v345
        %4070 = vmatprep.subr.mxu0 0.0
        %4071 = vmatpush1.msra.mxu0 %v346
        %4072 = vmatprep.subr.mxu0 0.0
        %4073 = vmatpush1.msra.mxu0 %v347
        %4074 = vmatprep.subr.mxu0 0.0
        %4075 = vmatpush1.msra.mxu0 0.0
        %4076 = vmatprep.subr.mxu0 0.0
        %4077 = vmatpush1.msra.mxu0 0.0
        %4078 = vmatprep.subr.mxu0 0.0
        %4079 = vmatpush1.msra.mxu0 0.0
        %4080 = vmatprep.subr.mxu0 0.0
        %4081 = vmatpush1.msra.mxu0 0.0
        %4082 = vmatprep.subr.mxu0 0.0
        %4083 = vmatpush1.msra.mxu0 0.0
        %4084 = vmatprep.subr.mxu0 0.0
        %4085 = vmatpush1.msra.mxu0 0.0
        %4086 = vmatprep.subr.mxu0 0.0
        %4087 = vmatpush1.msra.mxu0 0.0
        %4088 = vmatprep.subr.mxu0 0.0
        %4089 = vmatpush1.msra.mxu0 0.0
        %4090 = vmatprep.subr.mxu0 0.0
        %4091 = vmatpush1.msra.mxu0 0.0
        %4092 = vmatprep.subr.mxu0 0.0
        %4093 = vmatpush1.msra.mxu0 0.0
        %4094 = vmatprep.subr.mxu0 0.0
        %4095 = vmatpush1.msra.mxu0 0.0
        %4096 = vmatprep.subr.mxu0 0.0
        %4097 = vmatpush1.msra.mxu0 0.0
        %4098 = vmatprep.subr.mxu0 0.0
        %4099 = vmatpush1.msra.mxu0 0.0
        %4100 = vmatprep.subr.mxu0 0.0
        %4101 = vmatpush1.msra.mxu0 0.0
        %4102 = vmatprep.subr.mxu0 0.0
        %4103 = vmatpush1.msra.mxu0 0.0
        %4104 = vmatprep.subr.mxu0 0.0
        %4105 = vmatpush1.msra.mxu0 0.0
        %4106 = vmatprep.mubr.f32.mxu0 0.0
        %4107 = vmatmul.mubr.f32.gmra.mrb[0].mxu0 %v3953
        %v4108 = vpop.f32.mrb[0].mxu0
        %v4109 = vadd.f32 0.0, %v4108
        %v4110 = vpop.f32.mrb[0].mxu0
        %4111 = vdwg.mxu0
        %v4112 = vmul.f32 %v4039, %v4039
        %v4113 = vsub.f32 %v4109, %v4112
        %v4114 = vmax.f32 %v4113, 0.0
        %v4115 = vadd.f32 %v4114, 1e-05
        %v4116 = vrsqrt.pop %v4115
        %s4117 = scalar_lea.vmem %s2, 3
        %v4118 = vld [vmem:[%s4117] sm:$0x1]
        %v4119 = vmul.f32 %v4116, %v4118
        %s4120 = scalar_lea.vmem %s3, 3
        %v4121 = vld [vmem:[%s4120] sm:$0x1]
        %v4122 = vmul.f32 %v4039, %v4119
        %v4123 = vsub.f32 %v4121, %v4122
        %v4124 = vunpack.c.l.bf16 %v3956
        %v4125 = vunpack.c.h.bf16 %v3956
        %v4126 = vunpack.c.l.bf16 %v3957
        %v4127 = vunpack.c.h.bf16 %v3957
        %v4128 = vunpack.c.l.bf16 %v3958
        %v4129 = vunpack.c.h.bf16 %v3958
        %v4130 = vunpack.c.l.bf16 %v3959
        %v4131 = vunpack.c.h.bf16 %v3959
        %v4132 = vunpack.c.l.bf16 %v3960
        %v4133 = vunpack.c.h.bf16 %v3960
        %v4134 = vunpack.c.l.bf16 %v3961
        %v4135 = vunpack.c.h.bf16 %v3961
        %v4136 = vunpack.c.l.bf16 %v3962
        %v4137 = vunpack.c.h.bf16 %v3962
        %v4138 = vunpack.c.l.bf16 %v3963
        %v4139 = vunpack.c.h.bf16 %v3963
        %v4140 = vunpack.c.l.bf16 %v3964
        %v4141 = vunpack.c.h.bf16 %v3964
        %v4142 = vunpack.c.l.bf16 %v3965
        %v4143 = vunpack.c.h.bf16 %v3965
        %v4144 = vunpack.c.l.bf16 %v3966
        %v4145 = vunpack.c.h.bf16 %v3966
        %v4146 = vunpack.c.l.bf16 %v3967
        %v4147 = vunpack.c.h.bf16 %v3967
        %v4148 = vunpack.c.l.bf16 %v3968
        %v4149 = vunpack.c.h.bf16 %v3968
        %v4150 = vunpack.c.l.bf16 %v3969
        %v4151 = vunpack.c.h.bf16 %v3969
        %v4152 = vunpack.c.l.bf16 %v3970
        %v4153 = vunpack.c.h.bf16 %v3970
        %v4154 = vunpack.c.l.bf16 %v3971
        %v4155 = vunpack.c.h.bf16 %v3971
        %v4156 = vlaneseq
        %v4157 = vshrl.u32 %v4156, 7
        %v4158 = vsub.s32 0, %v4157
        %v4159 = vrot.slane %v4119, %v4158
        %v4160 = vmul.f32 %v4124, %v4159
        %v4161 = vmul.f32 %v4125, %v4159
        %v4162 = vmul.f32 %v4126, %v4159
        %v4163 = vmul.f32 %v4127, %v4159
        %v4164 = vmul.f32 %v4128, %v4159
        %v4165 = vmul.f32 %v4129, %v4159
        %v4166 = vmul.f32 %v4130, %v4159
        %v4167 = vmul.f32 %v4131, %v4159
        %v4168 = vmul.f32 %v4132, %v4159
        %v4169 = vmul.f32 %v4133, %v4159
        %v4170 = vmul.f32 %v4134, %v4159
        %v4171 = vmul.f32 %v4135, %v4159
        %v4172 = vmul.f32 %v4136, %v4159
        %v4173 = vmul.f32 %v4137, %v4159
        %v4174 = vmul.f32 %v4138, %v4159
        %v4175 = vmul.f32 %v4139, %v4159
        %v4176 = vmul.f32 %v4140, %v4159
        %v4177 = vmul.f32 %v4141, %v4159
        %v4178 = vmul.f32 %v4142, %v4159
        %v4179 = vmul.f32 %v4143, %v4159
        %v4180 = vmul.f32 %v4144, %v4159
        %v4181 = vmul.f32 %v4145, %v4159
        %v4182 = vmul.f32 %v4146, %v4159
        %v4183 = vmul.f32 %v4147, %v4159
        %v4184 = vmul.f32 %v4148, %v4159
        %v4185 = vmul.f32 %v4149, %v4159
        %v4186 = vmul.f32 %v4150, %v4159
        %v4187 = vmul.f32 %v4151, %v4159
        %v4188 = vmul.f32 %v4152, %v4159
        %v4189 = vmul.f32 %v4153, %v4159
        %v4190 = vmul.f32 %v4154, %v4159
        %v4191 = vmul.f32 %v4155, %v4159
        %v4193 = vlaneseq
        %v4194 = vshrl.u32 %v4193, 7
        %v4195 = vsub.s32 0, %v4194
        %v4196 = vrot.slane %v4123, %v4195
        %v4198 = vadd.f32 %v4160, %v4196
        %v4199 = vadd.f32 %v4161, %v4196
        %v4200 = vadd.f32 %v4162, %v4196
        %v4201 = vadd.f32 %v4163, %v4196
        %v4202 = vadd.f32 %v4164, %v4196
        %v4203 = vadd.f32 %v4165, %v4196
        %v4204 = vadd.f32 %v4166, %v4196
        %v4205 = vadd.f32 %v4167, %v4196
        %v4206 = vadd.f32 %v4168, %v4196
        %v4207 = vadd.f32 %v4169, %v4196
        %v4208 = vadd.f32 %v4170, %v4196
        %v4209 = vadd.f32 %v4171, %v4196
        %v4210 = vadd.f32 %v4172, %v4196
        %v4211 = vadd.f32 %v4173, %v4196
        %v4212 = vadd.f32 %v4174, %v4196
        %v4213 = vadd.f32 %v4175, %v4196
        %v4214 = vadd.f32 %v4176, %v4196
        %v4215 = vadd.f32 %v4177, %v4196
        %v4216 = vadd.f32 %v4178, %v4196
        %v4217 = vadd.f32 %v4179, %v4196
        %v4218 = vadd.f32 %v4180, %v4196
        %v4219 = vadd.f32 %v4181, %v4196
        %v4220 = vadd.f32 %v4182, %v4196
        %v4221 = vadd.f32 %v4183, %v4196
        %v4222 = vadd.f32 %v4184, %v4196
        %v4223 = vadd.f32 %v4185, %v4196
        %v4224 = vadd.f32 %v4186, %v4196
        %v4225 = vadd.f32 %v4187, %v4196
        %v4226 = vadd.f32 %v4188, %v4196
        %v4227 = vadd.f32 %v4189, %v4196
        %v4228 = vadd.f32 %v4190, %v4196
        %v4229 = vadd.f32 %v4191, %v4196
        %v4230 = vmul.f32 %v4198, 0.5
        %v4231 = vmul.f32 %v4199, 0.5
        %v4232 = vmul.f32 %v4200, 0.5
        %v4233 = vmul.f32 %v4201, 0.5
        %v4234 = vmul.f32 %v4202, 0.5
        %v4235 = vmul.f32 %v4203, 0.5
        %v4236 = vmul.f32 %v4204, 0.5
        %v4237 = vmul.f32 %v4205, 0.5
        %v4238 = vmul.f32 %v4206, 0.5
        %v4239 = vmul.f32 %v4207, 0.5
        %v4240 = vmul.f32 %v4208, 0.5
        %v4241 = vmul.f32 %v4209, 0.5
        %v4242 = vmul.f32 %v4210, 0.5
        %v4243 = vmul.f32 %v4211, 0.5
        %v4244 = vmul.f32 %v4212, 0.5
        %v4245 = vmul.f32 %v4213, 0.5
        %v4246 = vmul.f32 %v4214, 0.5
        %v4247 = vmul.f32 %v4215, 0.5
        %v4248 = vmul.f32 %v4216, 0.5
        %v4249 = vmul.f32 %v4217, 0.5
        %v4250 = vmul.f32 %v4218, 0.5
        %v4251 = vmul.f32 %v4219, 0.5
        %v4252 = vmul.f32 %v4220, 0.5
        %v4253 = vmul.f32 %v4221, 0.5
        %v4254 = vmul.f32 %v4222, 0.5
        %v4255 = vmul.f32 %v4223, 0.5
        %v4256 = vmul.f32 %v4224, 0.5
        %v4257 = vmul.f32 %v4225, 0.5
        %v4258 = vmul.f32 %v4226, 0.5
        %v4259 = vmul.f32 %v4227, 0.5
        %v4260 = vmul.f32 %v4228, 0.5
        %v4261 = vmul.f32 %v4229, 0.5
        %v4262 = vtanh.pop %v4230
        %v4263 = vtanh.pop %v4231
        %v4264 = vtanh.pop %v4232
        %v4265 = vtanh.pop %v4233
        %v4266 = vtanh.pop %v4234
        %v4267 = vtanh.pop %v4235
        %v4268 = vtanh.pop %v4236
        %v4269 = vtanh.pop %v4237
        %v4270 = vtanh.pop %v4238
        %v4271 = vtanh.pop %v4239
        %v4272 = vtanh.pop %v4240
        %v4273 = vtanh.pop %v4241
        %v4274 = vtanh.pop %v4242
        %v4275 = vtanh.pop %v4243
        %v4276 = vtanh.pop %v4244
        %v4277 = vtanh.pop %v4245
        %v4278 = vtanh.pop %v4246
        %v4279 = vtanh.pop %v4247
        %v4280 = vtanh.pop %v4248
        %v4281 = vtanh.pop %v4249
        %v4282 = vtanh.pop %v4250
        %v4283 = vtanh.pop %v4251
        %v4284 = vtanh.pop %v4252
        %v4285 = vtanh.pop %v4253
        %v4286 = vtanh.pop %v4254
        %v4287 = vtanh.pop %v4255
        %v4288 = vtanh.pop %v4256
        %v4289 = vtanh.pop %v4257
        %v4290 = vtanh.pop %v4258
        %v4291 = vtanh.pop %v4259
        %v4292 = vtanh.pop %v4260
        %v4293 = vtanh.pop %v4261
        %v4294 = vadd.f32 %v4262, 1.0
        %v4295 = vadd.f32 %v4263, 1.0
        %v4296 = vadd.f32 %v4264, 1.0
        %v4297 = vadd.f32 %v4265, 1.0
        %v4298 = vadd.f32 %v4266, 1.0
        %v4299 = vadd.f32 %v4267, 1.0
        %v4300 = vadd.f32 %v4268, 1.0
        %v4301 = vadd.f32 %v4269, 1.0
        %v4302 = vadd.f32 %v4270, 1.0
        %v4303 = vadd.f32 %v4271, 1.0
        %v4304 = vadd.f32 %v4272, 1.0
        %v4305 = vadd.f32 %v4273, 1.0
        %v4306 = vadd.f32 %v4274, 1.0
        %v4307 = vadd.f32 %v4275, 1.0
        %v4308 = vadd.f32 %v4276, 1.0
        %v4309 = vadd.f32 %v4277, 1.0
        %v4310 = vadd.f32 %v4278, 1.0
        %v4311 = vadd.f32 %v4279, 1.0
        %v4312 = vadd.f32 %v4280, 1.0
        %v4313 = vadd.f32 %v4281, 1.0
        %v4314 = vadd.f32 %v4282, 1.0
        %v4315 = vadd.f32 %v4283, 1.0
        %v4316 = vadd.f32 %v4284, 1.0
        %v4317 = vadd.f32 %v4285, 1.0
        %v4318 = vadd.f32 %v4286, 1.0
        %v4319 = vadd.f32 %v4287, 1.0
        %v4320 = vadd.f32 %v4288, 1.0
        %v4321 = vadd.f32 %v4289, 1.0
        %v4322 = vadd.f32 %v4290, 1.0
        %v4323 = vadd.f32 %v4291, 1.0
        %v4324 = vadd.f32 %v4292, 1.0
        %v4325 = vadd.f32 %v4293, 1.0
        %v4326 = vmul.f32 %v4294, 0.5
        %v4327 = vmul.f32 %v4295, 0.5
        %v4328 = vmul.f32 %v4296, 0.5
        %v4329 = vmul.f32 %v4297, 0.5
        %v4330 = vmul.f32 %v4298, 0.5
        %v4331 = vmul.f32 %v4299, 0.5
        %v4332 = vmul.f32 %v4300, 0.5
        %v4333 = vmul.f32 %v4301, 0.5
        %v4334 = vmul.f32 %v4302, 0.5
        %v4335 = vmul.f32 %v4303, 0.5
        %v4336 = vmul.f32 %v4304, 0.5
        %v4337 = vmul.f32 %v4305, 0.5
        %v4338 = vmul.f32 %v4306, 0.5
        %v4339 = vmul.f32 %v4307, 0.5
        %v4340 = vmul.f32 %v4308, 0.5
        %v4341 = vmul.f32 %v4309, 0.5
        %v4342 = vmul.f32 %v4310, 0.5
        %v4343 = vmul.f32 %v4311, 0.5
        %v4344 = vmul.f32 %v4312, 0.5
        %v4345 = vmul.f32 %v4313, 0.5
        %v4346 = vmul.f32 %v4314, 0.5
        %v4347 = vmul.f32 %v4315, 0.5
        %v4348 = vmul.f32 %v4316, 0.5
        %v4349 = vmul.f32 %v4317, 0.5
        %v4350 = vmul.f32 %v4318, 0.5
        %v4351 = vmul.f32 %v4319, 0.5
        %v4352 = vmul.f32 %v4320, 0.5
        %v4353 = vmul.f32 %v4321, 0.5
        %v4354 = vmul.f32 %v4322, 0.5
        %v4355 = vmul.f32 %v4323, 0.5
        %v4356 = vmul.f32 %v4324, 0.5
        %v4357 = vmul.f32 %v4325, 0.5
        %v4358 = vmul.f32 %v4198, %v4326
        %v4359 = vmul.f32 %v4199, %v4327
        %v4360 = vmul.f32 %v4200, %v4328
        %v4361 = vmul.f32 %v4201, %v4329
        %v4362 = vmul.f32 %v4202, %v4330
        %v4363 = vmul.f32 %v4203, %v4331
        %v4364 = vmul.f32 %v4204, %v4332
        %v4365 = vmul.f32 %v4205, %v4333
        %v4366 = vmul.f32 %v4206, %v4334
        %v4367 = vmul.f32 %v4207, %v4335
        %v4368 = vmul.f32 %v4208, %v4336
        %v4369 = vmul.f32 %v4209, %v4337
        %v4370 = vmul.f32 %v4210, %v4338
        %v4371 = vmul.f32 %v4211, %v4339
        %v4372 = vmul.f32 %v4212, %v4340
        %v4373 = vmul.f32 %v4213, %v4341
        %v4374 = vmul.f32 %v4214, %v4342
        %v4375 = vmul.f32 %v4215, %v4343
        %v4376 = vmul.f32 %v4216, %v4344
        %v4377 = vmul.f32 %v4217, %v4345
        %v4378 = vmul.f32 %v4218, %v4346
        %v4379 = vmul.f32 %v4219, %v4347
        %v4380 = vmul.f32 %v4220, %v4348
        %v4381 = vmul.f32 %v4221, %v4349
        %v4382 = vmul.f32 %v4222, %v4350
        %v4383 = vmul.f32 %v4223, %v4351
        %v4384 = vmul.f32 %v4224, %v4352
        %v4385 = vmul.f32 %v4225, %v4353
        %v4386 = vmul.f32 %v4226, %v4354
        %v4387 = vmul.f32 %v4227, %v4355
        %v4388 = vmul.f32 %v4228, %v4356
        %v4389 = vmul.f32 %v4229, %v4357
        %v4390 = vpack.c.bf16 %v4359, %v4358
        %v4391 = vpack.c.bf16 %v4361, %v4360
        %v4392 = vpack.c.bf16 %v4363, %v4362
        %v4393 = vpack.c.bf16 %v4365, %v4364
        %v4394 = vpack.c.bf16 %v4367, %v4366
        %v4395 = vpack.c.bf16 %v4369, %v4368
        %v4396 = vpack.c.bf16 %v4371, %v4370
        %v4397 = vpack.c.bf16 %v4373, %v4372
        %v4398 = vpack.c.bf16 %v4375, %v4374
        %v4399 = vpack.c.bf16 %v4377, %v4376
        %v4400 = vpack.c.bf16 %v4379, %v4378
        %v4401 = vpack.c.bf16 %v4381, %v4380
        %v4402 = vpack.c.bf16 %v4383, %v4382
        %v4403 = vpack.c.bf16 %v4385, %v4384
        %v4404 = vpack.c.bf16 %v4387, %v4386
        %v4405 = vpack.c.bf16 %v4389, %v4388
        %s4406 = scalar_lea.vmem [#allocation7], 576
        %v4407 = vld [vmem:[%s4406] sm:$0xf]
        %v4408 = vld [vmem:[%s4406 + $0x4] sm:$0xf]
        %v4409 = vld [vmem:[%s4406 + $0x8] sm:$0xf]
        %v4410 = vld [vmem:[%s4406 + $0xc] sm:$0xf]
        %v4411 = vld [vmem:[%s4406 + $0x10] sm:$0xf]
        %v4412 = vld [vmem:[%s4406 + $0x14] sm:$0xf]
        %v4413 = vld [vmem:[%s4406 + $0x18] sm:$0xf]
        %v4414 = vld [vmem:[%s4406 + $0x1c] sm:$0xf]
        %v4415 = vld [vmem:[%s4406 + $0x20] sm:$0xf]
        %v4416 = vld [vmem:[%s4406 + $0x24] sm:$0xf]
        %v4417 = vld [vmem:[%s4406 + $0x28] sm:$0xf]
        %v4418 = vld [vmem:[%s4406 + $0x2c] sm:$0xf]
        %v4419 = vld [vmem:[%s4406 + $0x30] sm:$0xf]
        %v4420 = vld [vmem:[%s4406 + $0x34] sm:$0xf]
        %v4421 = vld [vmem:[%s4406 + $0x38] sm:$0xf]
        %v4422 = vld [vmem:[%s4406 + $0x3c] sm:$0xf]
        %v4423 = vld [vmem:[%s4406 + $0x40] sm:$0xf]
        %v4424 = vld [vmem:[%s4406 + $0x44] sm:$0xf]
        %v4425 = vld [vmem:[%s4406 + $0x48] sm:$0xf]
        %v4426 = vld [vmem:[%s4406 + $0x4c] sm:$0xf]
        %v4427 = vld [vmem:[%s4406 + $0x50] sm:$0xf]
        %v4428 = vld [vmem:[%s4406 + $0x54] sm:$0xf]
        %v4429 = vld [vmem:[%s4406 + $0x58] sm:$0xf]
        %v4430 = vld [vmem:[%s4406 + $0x5c] sm:$0xf]
        %v4431 = vld [vmem:[%s4406 + $0x60] sm:$0xf]
        %v4432 = vld [vmem:[%s4406 + $0x64] sm:$0xf]
        %v4433 = vld [vmem:[%s4406 + $0x68] sm:$0xf]
        %v4434 = vld [vmem:[%s4406 + $0x6c] sm:$0xf]
        %v4435 = vld [vmem:[%s4406 + $0x70] sm:$0xf]
        %v4436 = vld [vmem:[%s4406 + $0x74] sm:$0xf]
        %v4437 = vld [vmem:[%s4406 + $0x78] sm:$0xf]
        %v4438 = vld [vmem:[%s4406 + $0x7c] sm:$0xf]
        %v4439 = vld [vmem:[%s4406 + $0x80] sm:$0xf]
        %v4440 = vld [vmem:[%s4406 + $0x84] sm:$0xf]
        %v4441 = vld [vmem:[%s4406 + $0x88] sm:$0xf]
        %v4442 = vld [vmem:[%s4406 + $0x8c] sm:$0xf]
        %v4443 = vld [vmem:[%s4406 + $0x90] sm:$0xf]
        %v4444 = vld [vmem:[%s4406 + $0x94] sm:$0xf]
        %v4445 = vld [vmem:[%s4406 + $0x98] sm:$0xf]
        %v4446 = vld [vmem:[%s4406 + $0x9c] sm:$0xf]
        %v4447 = vld [vmem:[%s4406 + $0xa0] sm:$0xf]
        %v4448 = vld [vmem:[%s4406 + $0xa4] sm:$0xf]
        %v4449 = vld [vmem:[%s4406 + $0xa8] sm:$0xf]
        %v4450 = vld [vmem:[%s4406 + $0xac] sm:$0xf]
        %v4451 = vld [vmem:[%s4406 + $0xb0] sm:$0xf]
        %v4452 = vld [vmem:[%s4406 + $0xb4] sm:$0xf]
        %v4453 = vld [vmem:[%s4406 + $0xb8] sm:$0xf]
        %v4454 = vld [vmem:[%s4406 + $0xbc] sm:$0xf]
        %s4455 = scalar_lea.vmem %s5, 3
        %v4456 = vld [vmem:[%s4455] sm:$0x1]
        %v4458 = vlaneseq
        %v4459 = vshrl.u32 %v4458, 7
        %v4460 = vsub.s32 0, %v4459
        %v4461 = vrot.slane %v4456, %v4460
        %v4511 = vunpack.c.l.b16 %v4407
        %v4512 = vunpack.c.l.b16 %v4408
        %v4513 = vunpack.c.l.b16 %v4409
        %v4514 = vunpack.c.l.b16 %v4410
        %v4515 = vunpack.c.l.b16 %v4411
        %v4516 = vunpack.c.l.b16 %v4412
        %v4517 = vunpack.c.l.b16 %v4413
        %v4518 = vunpack.c.l.b16 %v4414
        %v4519 = vunpack.c.l.b16 %v4415
        %v4520 = vunpack.c.l.b16 %v4416
        %v4521 = vunpack.c.l.b16 %v4417
        %v4522 = vunpack.c.l.b16 %v4418
        %v4523 = vunpack.c.l.b16 %v4419
        %v4524 = vunpack.c.l.b16 %v4420
        %v4525 = vunpack.c.l.b16 %v4421
        %v4526 = vunpack.c.l.b16 %v4422
        %v4527 = vunpack.c.l.b16 %v4423
        %v4528 = vunpack.c.l.b16 %v4424
        %v4529 = vunpack.c.l.b16 %v4425
        %v4530 = vunpack.c.l.b16 %v4426
        %v4531 = vunpack.c.l.b16 %v4427
        %v4532 = vunpack.c.l.b16 %v4428
        %v4533 = vunpack.c.l.b16 %v4429
        %v4534 = vunpack.c.l.b16 %v4430
        %v4535 = vunpack.c.l.b16 %v4431
        %v4536 = vunpack.c.l.b16 %v4432
        %v4537 = vunpack.c.l.b16 %v4433
        %v4538 = vunpack.c.l.b16 %v4434
        %v4539 = vunpack.c.l.b16 %v4435
        %v4540 = vunpack.c.l.b16 %v4436
        %v4541 = vunpack.c.l.b16 %v4437
        %v4542 = vunpack.c.l.b16 %v4438
        %v4543 = vunpack.c.l.b16 %v4439
        %v4544 = vunpack.c.l.b16 %v4440
        %v4545 = vunpack.c.l.b16 %v4441
        %v4546 = vunpack.c.l.b16 %v4442
        %v4547 = vunpack.c.l.b16 %v4443
        %v4548 = vunpack.c.l.b16 %v4444
        %v4549 = vunpack.c.l.b16 %v4445
        %v4550 = vunpack.c.l.b16 %v4446
        %v4551 = vunpack.c.l.b16 %v4447
        %v4552 = vunpack.c.l.b16 %v4448
        %v4553 = vunpack.c.l.b16 %v4449
        %v4554 = vunpack.c.l.b16 %v4450
        %v4555 = vunpack.c.l.b16 %v4451
        %v4556 = vunpack.c.l.b16 %v4452
        %v4557 = vunpack.c.l.b16 %v4453
        %v4558 = vunpack.c.l.b16 %v4454
        %v4559 = vpack.c.b16 %v4512, %v4511
        %v4560 = vpack.c.b16 %v4514, %v4513
        %v4561 = vpack.c.b16 %v4516, %v4515
        %v4562 = vpack.c.b16 %v4518, %v4517
        %v4563 = vpack.c.b16 %v4520, %v4519
        %v4564 = vpack.c.b16 %v4522, %v4521
        %v4565 = vpack.c.b16 %v4524, %v4523
        %v4566 = vpack.c.b16 %v4526, %v4525
        %v4567 = vpack.c.b16 %v4528, %v4527
        %v4568 = vpack.c.b16 %v4530, %v4529
        %v4569 = vpack.c.b16 %v4532, %v4531
        %v4570 = vpack.c.b16 %v4534, %v4533
        %v4571 = vpack.c.b16 %v4536, %v4535
        %v4572 = vpack.c.b16 %v4538, %v4537
        %v4573 = vpack.c.b16 %v4540, %v4539
        %v4574 = vpack.c.b16 %v4542, %v4541
        %v4575 = vpack.c.b16 %v4544, %v4543
        %v4576 = vpack.c.b16 %v4546, %v4545
        %v4577 = vpack.c.b16 %v4548, %v4547
        %v4578 = vpack.c.b16 %v4550, %v4549
        %v4579 = vpack.c.b16 %v4552, %v4551
        %v4580 = vpack.c.b16 %v4554, %v4553
        %v4581 = vpack.c.b16 %v4556, %v4555
        %v4582 = vpack.c.b16 %v4558, %v4557
        %4607 = vmatprep.subr.bf16.mxu0 0
        %4608 = vmatpush1.bf16.msra.mxu0 %v4559
        %4609 = vmatprep.subr.bf16.mxu0 0
        %4610 = vmatpush1.bf16.msra.mxu0 %v4560
        %4611 = vmatprep.subr.bf16.mxu0 0
        %4612 = vmatpush1.bf16.msra.mxu0 %v4561
        %4613 = vmatprep.subr.bf16.mxu0 0
        %4614 = vmatpush1.bf16.msra.mxu0 %v4562
        %4615 = vmatprep.subr.bf16.mxu0 0
        %4616 = vmatpush1.bf16.msra.mxu0 %v4563
        %4617 = vmatprep.subr.bf16.mxu0 0
        %4618 = vmatpush1.bf16.msra.mxu0 %v4564
        %4619 = vmatprep.subr.bf16.mxu0 0
        %4620 = vmatpush1.bf16.msra.mxu0 %v4565
        %4621 = vmatprep.subr.bf16.mxu0 0
        %4622 = vmatpush1.bf16.msra.mxu0 %v4566
        %4623 = vmatprep.subr.bf16.mxu0 0
        %4624 = vmatpush1.bf16.msra.mxu0 %v4567
        %4625 = vmatprep.subr.bf16.mxu0 0
        %4626 = vmatpush1.bf16.msra.mxu0 %v4568
        %4627 = vmatprep.subr.bf16.mxu0 0
        %4628 = vmatpush1.bf16.msra.mxu0 %v4569
        %4629 = vmatprep.subr.bf16.mxu0 0
        %4630 = vmatpush1.bf16.msra.mxu0 %v4570
        %4631 = vmatprep.subr.bf16.mxu0 0
        %4632 = vmatpush1.bf16.msra.mxu0 %v4571
        %4633 = vmatprep.subr.bf16.mxu0 0
        %4634 = vmatpush1.bf16.msra.mxu0 %v4572
        %4635 = vmatprep.subr.bf16.mxu0 0
        %4636 = vmatpush1.bf16.msra.mxu0 %v4573
        %4637 = vmatprep.subr.bf16.mxu0 0
        %4638 = vmatpush1.bf16.msra.mxu0 %v4574
        %4639 = vmatprep.mubr.bf16.mxu0 %v4390
        %4640 = vmatmul.mubr.bf16.gmra.mrb[0].mxu0 %v4390
        %v4641 = vpop.f32.mrb[0].mxu0
        %v4642 = vadd.f32 %v4461, %v4641
        %v4643 = vpop.f32.mrb[0].mxu0
        %v4644 = vpop.f32.mrb[0].mxu0
        %v4645 = vadd.f32 %v4461, %v4644
        %v4646 = vpop.f32.mrb[0].mxu0
        %4647 = vmatprep.mubr.bf16.mxu0 %v4391
        %4648 = vmatmul.mubr.bf16.gmra.mrb[0].mxu0 %v4391
        %v4649 = vpop.f32.mrb[0].mxu0
        %v4650 = vadd.f32 %v4461, %v4649
        %v4651 = vpop.f32.mrb[0].mxu0
        %v4652 = vpop.f32.mrb[0].mxu0
        %v4653 = vadd.f32 %v4461, %v4652
        %v4654 = vpop.f32.mrb[0].mxu0
        %4655 = vmatprep.mubr.bf16.mxu0 %v4392
        %4656 = vmatmul.mubr.bf16.gmra.mrb[0].mxu0 %v4392
        %v4657 = vpop.f32.mrb[0].mxu0
        %v4658 = vadd.f32 %v4461, %v4657
        %v4659 = vpop.f32.mrb[0].mxu0
        %v4660 = vpop.f32.mrb[0].mxu0
        %v4661 = vadd.f32 %v4461, %v4660
        %v4662 = vpop.f32.mrb[0].mxu0
        %4663 = vmatprep.mubr.bf16.mxu0 %v4393
        %4664 = vmatmul.mubr.bf16.gmra.mrb[0].mxu0 %v4393
        %v4665 = vpop.f32.mrb[0].mxu0
        %v4666 = vadd.f32 %v4461, %v4665
        %v4667 = vpop.f32.mrb[0].mxu0
        %v4668 = vpop.f32.mrb[0].mxu0
        %v4669 = vadd.f32 %v4461, %v4668
        %v4670 = vpop.f32.mrb[0].mxu0
        %4671 = vmatprep.mubr.bf16.mxu0 %v4394
        %4672 = vmatmul.mubr.bf16.gmra.mrb[0].mxu0 %v4390
        %v4673 = vpop.f32.mrb[0].mxu0
        %v4674 = vadd.f32 %v4461, %v4673
        %v4675 = vpop.f32.mrb[0].mxu0
        %v4676 = vpop.f32.mrb[0].mxu0
        %v4677 = vadd.f32 %v4461, %v4676
        %v4678 = vpop.f32.mrb[0].mxu0
        %4679 = vmatprep.mubr.bf16.mxu0 %v4395
        %4680 = vmatmul.mubr.bf16.gmra.mrb[0].mxu0 %v4391
        %v4681 = vpop.f32.mrb[0].mxu0
        %v4682 = vadd.f32 %v4461, %v4681
        %v4683 = vpop.f32.mrb[0].mxu0
        %v4684 = vpop.f32.mrb[0].mxu0
        %v4685 = vadd.f32 %v4461, %v4684
        %v4686 = vpop.f32.mrb[0].mxu0
        %4687 = vmatprep.mubr.bf16.mxu0 %v4396
        %4688 = vmatmul.mubr.bf16.gmra.mrb[0].mxu0 %v4392
        %v4689 = vpop.f32.mrb[0].mxu0
        %v4690 = vadd.f32 %v4461, %v4689
        %v4691 = vpop.f32.mrb[0].mxu0
        %v4692 = vpop.f32.mrb[0].mxu0
        %v4693 = vadd.f32 %v4461, %v4692
        %v4694 = vpop.f32.mrb[0].mxu0
        %4695 = vmatprep.mubr.bf16.mxu0 %v4397
        %4696 = vmatmul.mubr.bf16.gmra.mrb[0].mxu0 %v4393
        %v4697 = vpop.f32.mrb[0].mxu0
        %v4698 = vadd.f32 %v4461, %v4697
        %v4699 = vpop.f32.mrb[0].mxu0
        %v4700 = vpop.f32.mrb[0].mxu0
        %v4701 = vadd.f32 %v4461, %v4700
        %v4702 = vpop.f32.mrb[0].mxu0
        %4703 = vmatprep.mubr.bf16.mxu0 %v4398
        %4704 = vmatmul.mubr.bf16.gmra.mrb[0].mxu0 %v4394
        %v4705 = vpop.f32.mrb[0].mxu0
        %v4706 = vadd.f32 %v4461, %v4705
        %v4707 = vpop.f32.mrb[0].mxu0
        %v4708 = vpop.f32.mrb[0].mxu0
        %v4709 = vadd.f32 %v4461, %v4708
        %v4710 = vpop.f32.mrb[0].mxu0
        %4711 = vmatprep.mubr.bf16.mxu0 %v4399
        %4712 = vmatmul.mubr.bf16.gmra.mrb[0].mxu0 %v4395
        %v4713 = vpop.f32.mrb[0].mxu0
        %v4714 = vadd.f32 %v4461, %v4713
        %v4715 = vpop.f32.mrb[0].mxu0
        %v4716 = vpop.f32.mrb[0].mxu0
        %v4717 = vadd.f32 %v4461, %v4716
        %v4718 = vpop.f32.mrb[0].mxu0
        %4719 = vmatprep.mubr.bf16.mxu0 %v4400
        %4720 = vmatmul.mubr.bf16.gmra.mrb[0].mxu0 %v4396
        %v4721 = vpop.f32.mrb[0].mxu0
        %v4722 = vadd.f32 %v4461, %v4721
        %v4723 = vpop.f32.mrb[0].mxu0
        %v4724 = vpop.f32.mrb[0].mxu0
        %v4725 = vadd.f32 %v4461, %v4724
        %v4726 = vpop.f32.mrb[0].mxu0
        %4727 = vmatprep.mubr.bf16.mxu0 %v4401
        %4728 = vmatmul.mubr.bf16.gmra.mrb[0].mxu0 %v4397
        %v4729 = vpop.f32.mrb[0].mxu0
        %v4730 = vadd.f32 %v4461, %v4729
        %v4731 = vpop.f32.mrb[0].mxu0
        %v4732 = vpop.f32.mrb[0].mxu0
        %v4733 = vadd.f32 %v4461, %v4732
        %v4734 = vpop.f32.mrb[0].mxu0
        %4735 = vmatprep.mubr.bf16.mxu0 %v4402
        %4736 = vmatmul.mubr.bf16.gmra.mrb[0].mxu0 %v4398
        %v4737 = vpop.f32.mrb[0].mxu0
        %v4738 = vadd.f32 %v4461, %v4737
        %v4739 = vpop.f32.mrb[0].mxu0
        %v4740 = vpop.f32.mrb[0].mxu0
        %v4741 = vadd.f32 %v4461, %v4740
        %v4742 = vpop.f32.mrb[0].mxu0
        %4743 = vmatprep.mubr.bf16.mxu0 %v4403
        %4744 = vmatmul.mubr.bf16.gmra.mrb[0].mxu0 %v4399
        %v4745 = vpop.f32.mrb[0].mxu0
        %v4746 = vadd.f32 %v4461, %v4745
        %v4747 = vpop.f32.mrb[0].mxu0
        %v4748 = vpop.f32.mrb[0].mxu0
        %v4749 = vadd.f32 %v4461, %v4748
        %v4750 = vpop.f32.mrb[0].mxu0
        %4751 = vmatprep.mubr.bf16.mxu0 %v4404
        %4752 = vmatmul.mubr.bf16.gmra.mrb[0].mxu0 %v4400
        %v4753 = vpop.f32.mrb[0].mxu0
        %v4754 = vadd.f32 %v4461, %v4753
        %v4755 = vpop.f32.mrb[0].mxu0
        %v4756 = vpop.f32.mrb[0].mxu0
        %v4757 = vadd.f32 %v4461, %v4756
        %v4758 = vpop.f32.mrb[0].mxu0
        %4759 = vmatprep.mubr.bf16.mxu0 %v4405
        %4760 = vmatmul.mubr.bf16.gmra.mrb[0].mxu0 %v4401
        %v4761 = vpop.f32.mrb[0].mxu0
        %v4762 = vadd.f32 %v4461, %v4761
        %v4763 = vpop.f32.mrb[0].mxu0
        %v4764 = vpop.f32.mrb[0].mxu0
        %v4765 = vadd.f32 %v4461, %v4764
        %v4766 = vpop.f32.mrb[0].mxu0
        %4767 = vdwg.mxu0
        %4768 = vmatprep.subr.bf16.mxu0 0
        %4769 = vmatpush1.bf16.msra.mxu0 %v4575
        %4770 = vmatprep.subr.bf16.mxu0 0
        %4771 = vmatpush1.bf16.msra.mxu0 %v4576
        %4772 = vmatprep.subr.bf16.mxu0 0
        %4773 = vmatpush1.bf16.msra.mxu0 %v4577
        %4774 = vmatprep.subr.bf16.mxu0 0
        %4775 = vmatpush1.bf16.msra.mxu0 %v4578
        %4776 = vmatprep.subr.bf16.mxu0 0
        %4777 = vmatpush1.bf16.msra.mxu0 %v4579
        %4778 = vmatprep.subr.bf16.mxu0 0
        %4779 = vmatpush1.bf16.msra.mxu0 %v4580
        %4780 = vmatprep.subr.bf16.mxu0 0
        %4781 = vmatpush1.bf16.msra.mxu0 %v4581
        %4782 = vmatprep.subr.bf16.mxu0 0
        %4783 = vmatpush1.bf16.msra.mxu0 %v4582
        %4784 = vmatprep.subr.bf16.mxu0 0
        %4785 = vmatpush1.bf16.msra.mxu0 0
        %4786 = vmatprep.subr.bf16.mxu0 0
        %4787 = vmatpush1.bf16.msra.mxu0 0
        %4788 = vmatprep.subr.bf16.mxu0 0
        %4789 = vmatpush1.bf16.msra.mxu0 0
        %4790 = vmatprep.subr.bf16.mxu0 0
        %4791 = vmatpush1.bf16.msra.mxu0 0
        %4792 = vmatprep.subr.bf16.mxu0 0
        %4793 = vmatpush1.bf16.msra.mxu0 0
        %4794 = vmatprep.subr.bf16.mxu0 0
        %4795 = vmatpush1.bf16.msra.mxu0 0
        %4796 = vmatprep.subr.bf16.mxu0 0
        %4797 = vmatpush1.bf16.msra.mxu0 0
        %4798 = vmatprep.subr.bf16.mxu0 0
        %4799 = vmatpush1.bf16.msra.mxu0 0
        %4800 = vmatprep.mubr.bf16.mxu0 0
        %4801 = vmatmul.mubr.bf16.gmra.mrb[0].mxu0 %v4394
        %v4802 = vpop.f32.mrb[0].mxu0
        %v4803 = vadd.f32 %v4642, %v4802
        %v4804 = vpop.f32.mrb[0].mxu0
        %v4805 = vpop.f32.mrb[0].mxu0
        %v4806 = vadd.f32 %v4645, %v4805
        %v4807 = vpop.f32.mrb[0].mxu0
        %4808 = vmatprep.mubr.bf16.mxu0 0
        %4809 = vmatmul.mubr.bf16.gmra.mrb[0].mxu0 %v4395
        %v4810 = vpop.f32.mrb[0].mxu0
        %v4811 = vadd.f32 %v4650, %v4810
        %v4812 = vpop.f32.mrb[0].mxu0
        %v4813 = vpop.f32.mrb[0].mxu0
        %v4814 = vadd.f32 %v4653, %v4813
        %v4815 = vpop.f32.mrb[0].mxu0
        %4816 = vmatprep.mubr.bf16.mxu0 0
        %4817 = vmatmul.mubr.bf16.gmra.mrb[0].mxu0 %v4396
        %v4818 = vpop.f32.mrb[0].mxu0
        %v4819 = vadd.f32 %v4658, %v4818
        %v4820 = vpop.f32.mrb[0].mxu0
        %v4821 = vpop.f32.mrb[0].mxu0
        %v4822 = vadd.f32 %v4661, %v4821
        %v4823 = vpop.f32.mrb[0].mxu0
        %4824 = vmatprep.mubr.bf16.mxu0 0
        %4825 = vmatmul.mubr.bf16.gmra.mrb[0].mxu0 %v4397
        %v4826 = vpop.f32.mrb[0].mxu0
        %v4827 = vadd.f32 %v4666, %v4826
        %v4828 = vpop.f32.mrb[0].mxu0
        %v4829 = vpop.f32.mrb[0].mxu0
        %v4830 = vadd.f32 %v4669, %v4829
        %v4831 = vpop.f32.mrb[0].mxu0
        %4832 = vmatprep.mubr.bf16.mxu0 0
        %4833 = vmatmul.mubr.bf16.gmra.mrb[0].mxu0 %v4398
        %v4834 = vpop.f32.mrb[0].mxu0
        %v4835 = vadd.f32 %v4674, %v4834
        %v4836 = vpop.f32.mrb[0].mxu0
        %v4837 = vpop.f32.mrb[0].mxu0
        %v4838 = vadd.f32 %v4677, %v4837
        %v4839 = vpop.f32.mrb[0].mxu0
        %4840 = vmatprep.mubr.bf16.mxu0 0
        %4841 = vmatmul.mubr.bf16.gmra.mrb[0].mxu0 %v4399
        %v4842 = vpop.f32.mrb[0].mxu0
        %v4843 = vadd.f32 %v4682, %v4842
        %v4844 = vpop.f32.mrb[0].mxu0
        %v4845 = vpop.f32.mrb[0].mxu0
        %v4846 = vadd.f32 %v4685, %v4845
        %v4847 = vpop.f32.mrb[0].mxu0
        %4848 = vmatprep.mubr.bf16.mxu0 0
        %4849 = vmatmul.mubr.bf16.gmra.mrb[0].mxu0 %v4400
        %v4850 = vpop.f32.mrb[0].mxu0
        %v4851 = vadd.f32 %v4690, %v4850
        %v4852 = vpop.f32.mrb[0].mxu0
        %v4853 = vpop.f32.mrb[0].mxu0
        %v4854 = vadd.f32 %v4693, %v4853
        %v4855 = vpop.f32.mrb[0].mxu0
        %4856 = vmatprep.mubr.bf16.mxu0 0
        %4857 = vmatmul.mubr.bf16.gmra.mrb[0].mxu0 %v4401
        %v4858 = vpop.f32.mrb[0].mxu0
        %v4859 = vadd.f32 %v4698, %v4858
        %v4860 = vpop.f32.mrb[0].mxu0
        %v4861 = vpop.f32.mrb[0].mxu0
        %v4862 = vadd.f32 %v4701, %v4861
        %v4863 = vpop.f32.mrb[0].mxu0
        %4864 = vmatprep.mubr.bf16.mxu0 0
        %4865 = vmatmul.mubr.bf16.gmra.mrb[0].mxu0 %v4402
        %v4866 = vpop.f32.mrb[0].mxu0
        %v4867 = vadd.f32 %v4706, %v4866
        %v4868 = vpop.f32.mrb[0].mxu0
        %v4869 = vpop.f32.mrb[0].mxu0
        %v4870 = vadd.f32 %v4709, %v4869
        %v4871 = vpop.f32.mrb[0].mxu0
        %4872 = vmatprep.mubr.bf16.mxu0 0
        %4873 = vmatmul.mubr.bf16.gmra.mrb[0].mxu0 %v4403
        %v4874 = vpop.f32.mrb[0].mxu0
        %v4875 = vadd.f32 %v4714, %v4874
        %v4876 = vpop.f32.mrb[0].mxu0
        %v4877 = vpop.f32.mrb[0].mxu0
        %v4878 = vadd.f32 %v4717, %v4877
        %v4879 = vpop.f32.mrb[0].mxu0
        %4880 = vmatprep.mubr.bf16.mxu0 0
        %4881 = vmatmul.mubr.bf16.gmra.mrb[0].mxu0 %v4404
        %v4882 = vpop.f32.mrb[0].mxu0
        %v4883 = vadd.f32 %v4722, %v4882
        %v4884 = vpop.f32.mrb[0].mxu0
        %v4885 = vpop.f32.mrb[0].mxu0
        %v4886 = vadd.f32 %v4725, %v4885
        %v4887 = vpop.f32.mrb[0].mxu0
        %4888 = vmatprep.mubr.bf16.mxu0 0
        %4889 = vmatmul.mubr.bf16.gmra.mrb[0].mxu0 %v4405
        %v4890 = vpop.f32.mrb[0].mxu0
        %v4891 = vadd.f32 %v4730, %v4890
        %v4892 = vpop.f32.mrb[0].mxu0
        %v4893 = vpop.f32.mrb[0].mxu0
        %v4894 = vadd.f32 %v4733, %v4893
        %v4895 = vpop.f32.mrb[0].mxu0
        %4896 = vmatprep.mubr.bf16.mxu0 0
        %4897 = vmatmul.mubr.bf16.gmra.mrb[0].mxu0 %v4402
        %v4898 = vpop.f32.mrb[0].mxu0
        %v4899 = vadd.f32 %v4738, %v4898
        %v4900 = vpop.f32.mrb[0].mxu0
        %v4901 = vpop.f32.mrb[0].mxu0
        %v4902 = vadd.f32 %v4741, %v4901
        %v4903 = vpop.f32.mrb[0].mxu0
        %4904 = vmatprep.mubr.bf16.mxu0 0
        %4905 = vmatmul.mubr.bf16.gmra.mrb[0].mxu0 %v4403
        %v4906 = vpop.f32.mrb[0].mxu0
        %v4907 = vadd.f32 %v4746, %v4906
        %v4908 = vpop.f32.mrb[0].mxu0
        %v4909 = vpop.f32.mrb[0].mxu0
        %v4910 = vadd.f32 %v4749, %v4909
        %v4911 = vpop.f32.mrb[0].mxu0
        %4912 = vmatprep.mubr.bf16.mxu0 0
        %4913 = vmatmul.mubr.bf16.gmra.mrb[0].mxu0 %v4404
        %v4914 = vpop.f32.mrb[0].mxu0
        %v4915 = vadd.f32 %v4754, %v4914
        %v4916 = vpop.f32.mrb[0].mxu0
        %v4917 = vpop.f32.mrb[0].mxu0
        %v4918 = vadd.f32 %v4757, %v4917
        %v4919 = vpop.f32.mrb[0].mxu0
        %4920 = vmatprep.mubr.bf16.mxu0 0
        %4921 = vmatmul.mubr.bf16.gmra.mrb[0].mxu0 %v4405
        %v4922 = vpop.f32.mrb[0].mxu0
        %v4923 = vadd.f32 %v4762, %v4922
        %v4924 = vpop.f32.mrb[0].mxu0
        %v4925 = vpop.f32.mrb[0].mxu0
        %v4926 = vadd.f32 %v4765, %v4925
        %v4927 = vpop.f32.mrb[0].mxu0
        %4928 = vdwg.mxu0
        %v4929 = vadd.f32 %v369, %v4803
        %v4930 = vadd.f32 %v370, %v4806
        %v4931 = vadd.f32 %v371, %v4811
        %v4932 = vadd.f32 %v372, %v4814
        %v4933 = vadd.f32 %v373, %v4819
        %v4934 = vadd.f32 %v374, %v4822
        %v4935 = vadd.f32 %v375, %v4827
        %v4936 = vadd.f32 %v376, %v4830
        %v4937 = vadd.f32 %v377, %v4835
        %v4938 = vadd.f32 %v378, %v4838
        %v4939 = vadd.f32 %v379, %v4843
        %v4940 = vadd.f32 %v380, %v4846
        %v4941 = vadd.f32 %v381, %v4851
        %v4942 = vadd.f32 %v382, %v4854
        %v4943 = vadd.f32 %v383, %v4859
        %v4944 = vadd.f32 %v384, %v4862
        %v4945 = vadd.f32 %v385, %v4867
        %v4946 = vadd.f32 %v386, %v4870
        %v4947 = vadd.f32 %v387, %v4875
        %v4948 = vadd.f32 %v388, %v4878
        %v4949 = vadd.f32 %v389, %v4883
        %v4950 = vadd.f32 %v390, %v4886
        %v4951 = vadd.f32 %v391, %v4891
        %v4952 = vadd.f32 %v392, %v4894
        %v4953 = vadd.f32 %v393, %v4899
        %v4954 = vadd.f32 %v394, %v4902
        %v4955 = vadd.f32 %v395, %v4907
        %v4956 = vadd.f32 %v396, %v4910
        %v4957 = vadd.f32 %v397, %v4915
        %v4958 = vadd.f32 %v398, %v4918
        %v4959 = vadd.f32 %v399, %v4923
        %v4960 = vadd.f32 %v400, %v4926
        %4961 = vst [vmem:[%s298] sm:$0xff] %v4929
        %4962 = vst [vmem:[%s298 + $0x8] sm:$0xff] %v4930
        %4963 = vst [vmem:[%s298 + $0x10] sm:$0xff] %v4931
        %4964 = vst [vmem:[%s298 + $0x18] sm:$0xff] %v4932
        %4965 = vst [vmem:[%s298 + $0x20] sm:$0xff] %v4933
        %4966 = vst [vmem:[%s298 + $0x28] sm:$0xff] %v4934
        %4967 = vst [vmem:[%s298 + $0x30] sm:$0xff] %v4935
        %4968 = vst [vmem:[%s298 + $0x38] sm:$0xff] %v4936
        %4969 = vst [vmem:[%s298 + $0x40] sm:$0xff] %v4937
        %4970 = vst [vmem:[%s298 + $0x48] sm:$0xff] %v4938
        %4971 = vst [vmem:[%s298 + $0x50] sm:$0xff] %v4939
        %4972 = vst [vmem:[%s298 + $0x58] sm:$0xff] %v4940
        %4973 = vst [vmem:[%s298 + $0x60] sm:$0xff] %v4941
        %4974 = vst [vmem:[%s298 + $0x68] sm:$0xff] %v4942
        %4975 = vst [vmem:[%s298 + $0x70] sm:$0xff] %v4943
        %4976 = vst [vmem:[%s298 + $0x78] sm:$0xff] %v4944
        %4977 = vst [vmem:[%s298 + $0x80] sm:$0xff] %v4945
        %4978 = vst [vmem:[%s298 + $0x88] sm:$0xff] %v4946
        %4979 = vst [vmem:[%s298 + $0x90] sm:$0xff] %v4947
        %4980 = vst [vmem:[%s298 + $0x98] sm:$0xff] %v4948
        %4981 = vst [vmem:[%s298 + $0xa0] sm:$0xff] %v4949
        %4982 = vst [vmem:[%s298 + $0xa8] sm:$0xff] %v4950
        %4983 = vst [vmem:[%s298 + $0xb0] sm:$0xff] %v4951
        %4984 = vst [vmem:[%s298 + $0xb8] sm:$0xff] %v4952
        %4985 = vst [vmem:[%s298 + $0xc0] sm:$0xff] %v4953
        %4986 = vst [vmem:[%s298 + $0xc8] sm:$0xff] %v4954
        %4987 = vst [vmem:[%s298 + $0xd0] sm:$0xff] %v4955
        %4988 = vst [vmem:[%s298 + $0xd8] sm:$0xff] %v4956
        %4989 = vst [vmem:[%s298 + $0xe0] sm:$0xff] %v4957
        %4990 = vst [vmem:[%s298 + $0xe8] sm:$0xff] %v4958
        %4991 = vst [vmem:[%s298 + $0xf0] sm:$0xff] %v4959
        %4992 = vst [vmem:[%s298 + $0xf8] sm:$0xff] %v4960
        %s4993 = sand.u32 %s163, 1
        %s4994 = scalar_lea.sflag [#allocation4], %s4993
        %s4995 = sand.u32 %s163, 1
        %s4996 = smul.addr %s4995, 256
        %s4997 = scalar_lea.vmem [#allocation8], %s4996
        // Predicated region
        $region57: #{tpu_custom_call.1} parent=43 // pred_check
          %p4998 = pneg %p173
        $region58: #{tpu_custom_call.1} parent=43 // pred_check_branch
          %5000 = sbr.rel (%p4998) target = $region60
        $region59: #{tpu_custom_call.1} parent=43 // pred_region
          %s5002 = ssub.s32 4096, 4096
          %5003 = vsyncadd %s4994, %s5002
          %s5004 = smul.addr %s24, 32
          %s5005 = smul.addr %s5004, 128
          %s5006 = scalar_lea.hbm %s6, %s5005
          %s5007 = sshll.u32 %s4997, 4
          %s5008 = int_to_ptr.vmem [resolvable:$true] %s5007
          %5013 = dma.vmem_to_hbm [thread:$0]  %s5008, 4096, %s5006, %s4994, 128, 128, 8
        $region60: #{tpu_custom_call.1} parent=43 // pred_fallthru
          _
      $region44: #{tpu_custom_call.1} parent=5 // pred_fallthru
        _
      %p5014 = scmp.le.s32.totalorder 2, %s19
      // Predicated region
      $region61: #{tpu_custom_call.1} parent=5 // pred_check
        %p5015 = pneg %p5014
      $region62: #{tpu_custom_call.1} parent=5 // pred_check_branch
        %5017 = sbr.rel (%p5015) target = $region64
      $region63: #{tpu_custom_call.1} parent=5 // pred_region
        %s5018 = ssub.s32 %s19, 2
        // Predicated region
        $region65: #{tpu_custom_call.1} parent=63 // pred_check
          %p5019 = pneg %p179
        $region66: #{tpu_custom_call.1} parent=63 // pred_check_branch
          %5021 = sbr.rel (%p5019) target = $region68
        $region67: #{tpu_custom_call.1} parent=63 // pred_region
          %s5022 = sand.u32 %s164, 1
          %s5023 = scalar_lea.sflag [#allocation4], %s5022
          %s5024 = sand.u32 %s164, 1
          %s5025 = smul.addr %s5024, 256
          %s5026 = scalar_lea.vmem [#allocation8], %s5025
          %5027 = dma.done %s5023, 4096
        $region68: #{tpu_custom_call.1} parent=63 // pred_fallthru
          _
      $region64: #{tpu_custom_call.1} parent=5 // pred_fallthru
        _
    $region6: #{tpu_custom_call.1} parent=1 // loop_footer
      %s23 = sadd.s32 1, %s19
    $region7: #{tpu_custom_call.1} parent=1 // loop_footer_branch
      %18 = sbr.rel target = $region3
    $region8: #{tpu_custom_call.1} parent=1 // loop_exit
      _
    %5028 = vsyncpa [#allocation3], 1
    %s5029 = scalar_lea.sflag [#allocation3], 1
    %5030 = vsyncpa %s5029, 1
    %5031 = vsyncpa [#allocation6], 1
    %5032 = vsyncpa [#allocation4], 1
    %s5033 = scalar_lea.sflag [#allocation4], 1
    %5034 = vsyncpa %s5033, 1

</llo_original>
